<compile_context>
chip_gen: v7x
topology: tpu7x:2x2x1
jax: 0.10.0
libtpu: 0.0.40
codegen_flags: <defaults>
</compile_context>

<pallas_src>
import functools

import jax
import jax.numpy as jnp
import numpy as np
from jax import lax
from jax.experimental import pallas as pl
from jax.experimental.pallas import tpu as pltpu


def _pick_tile_h(H, W):
    """Largest divisor of H giving ~<=1024 flattened rows per tile and >=2 row tiles."""
    target = max(1, 1024 // max(W, 1))
    if H >= 2:
        target = min(target, H // 2)     # at least 2 H-tiles -> pipelining / megacore work
    target = max(target, 1)
    th = 1
    for cand in range(1, H + 1):
        if H % cand == 0 and cand <= target:
            th = cand
    return th


def _deconv_kernel(xa_ref, xb_ref, w_ref, o_ref, stats_ref, *, tile_h, width):
    """Transposed conv for one (batch, row-tile) block + fused BN partial reduction.

    xa_ref:    (1, TH, W+1, Cin)   rows [t*TH, t*TH+TH) of the zero-padded input
    xb_ref:    (1, 1,  W+1, Cin)   halo row t*TH + TH
    w_ref:     (4, Cin, 4*Cout)    per-view weights, output phases packed on the lane axis
    o_ref:     (1, TH, W, 4*Cout)  phase-packed output (lane-dense store)
    stats_ref: (1, 2, 4*Cout)      per-batch [sum, sum_sq], accumulated across row tiles
    """
    t = pl.program_id(1)
    cin = xa_ref.shape[-1]
    rows = tile_h * width

    def aligned_view(dw):            # x[p, q+dw] for the rows of this tile
        return xa_ref[0, :, dw:dw + width, :].reshape(rows, cin)

    def shifted_view(dw):            # x[p+1, q+dw] (uses the halo row for the last row)
        bot = xb_ref[0, :, dw:dw + width, :]
        if tile_h > 1:
            top = xa_ref[0, 1:, dw:dw + width, :]
            v = jnp.concatenate([top, bot], axis=0)
        else:
            v = bot
        return v.reshape(rows, cin)

    def mm(v, idx):
        return jnp.dot(
            v, w_ref[idx],
            preferred_element_type=jnp.float32,
            precision=lax.Precision.HIGHEST,
        )

    # 4 matmuls grouped by shifted view (was 9 tiny per-tap matmuls); each produces the
    # full lane-dense (rows, 4*Cout) phase-packed slab and they accumulate.
    y = (mm(aligned_view(0), 0) + mm(aligned_view(1), 1)
         + mm(shifted_view(0), 2) + mm(shifted_view(1), 3))          # (rows, 4*Cout)

    o_ref[0] = y.reshape(tile_h, width, y.shape[-1])

    # Fused one-pass BatchNorm reduction (sum and sum-of-squares per packed channel),
    # accumulated across the row-tile ("arbitrary") grid axis.
    @pl.when(t == 0)
    def _():
        stats_ref[...] = jnp.zeros_like(stats_ref)

    stats_ref[0, 0:1, :] += jnp.sum(y, axis=0, keepdims=True)
    stats_ref[0, 1:2, :] += jnp.sum(y * y, axis=0, keepdims=True)


def _bn_apply_kernel(y_ref, scale_ref, shift_ref, o_ref):
    """Tiled normalize (precomputed scale/shift) + ReLU."""
    o_ref[...] = jnp.maximum(y_ref[...] * scale_ref[...] + shift_ref[...], 0.0)


def upsampler_block(x_nchw, w_pt, bias, gamma, beta, eps=1e-3):
    """Forward pass of UpsamplerBlock. x_nchw: (N, Cin, H, W) -> (N, Cout, 2H, 2W)."""
    N, Cin, H, W = x_nchw.shape
    Cout = w_pt.shape[1]
    TH = _pick_tile_h(H, W)
    n_t = H // TH
    C4 = 4 * Cout

    # NCHW -> NHWC (channel -> lane axis); zero-pad one row/col so the x[p+1]/x[q+1]
    # taps at the border read zeros. Single padded copy — no 4x shifted-view stack.
    x = jnp.transpose(x_nchw, (0, 2, 3, 1)).astype(jnp.float32)       # (N, H, W, Cin)
    xp = jnp.pad(x, ((0, 0), (0, 1), (0, 1), (0, 0)))                 # (N, H+1, W+1, Cin)

    # Per-view weights with the 4 output phases packed along the last (lane) axis.
    #   phase p = 2*(oh%2) + (ow%2); views: v0=x[p,q], v1=x[p,q+1], v2=x[p+1,q], v3=x[p+1,q+1]
    w = w_pt.astype(jnp.float32)                                      # (Cin, Cout, kh, kw)
    z = jnp.zeros((Cin, Cout), jnp.float32)
    tap = lambda kh, kw: w[:, :, kh, kw]
    w_views = jnp.stack([
        jnp.concatenate([tap(1, 1), tap(1, 2), tap(2, 1), tap(2, 2)], axis=1),  # v0
        jnp.concatenate([z,         tap(1, 0), z,         tap(2, 0)], axis=1),  # v1
        jnp.concatenate([z,         z,         tap(0, 1), tap(0, 2)], axis=1),  # v2
        jnp.concatenate([z,         z,         z,         tap(0, 0)], axis=1),  # v3
    ], axis=0)                                                        # (4, Cin, 4*Cout)

    # ConvTranspose2d bias intentionally dropped: training-mode BN subtracts the batch
    # mean, which cancels a per-channel bias exactly, so the forward output is unchanged.
    del bias

    vmem_limit = 32 * 1024 * 1024

    # ---- kernel 1: transposed conv + fused BN partial sums ----
    deconv = functools.partial(_deconv_kernel, tile_h=TH, width=W)
    phases, stats = pl.pallas_call(
        deconv,
        out_shape=(
            jax.ShapeDtypeStruct((N, H, W, C4), jnp.float32),
            jax.ShapeDtypeStruct((N, 2, C4), jnp.float32),
        ),
        grid_spec=pltpu.PrefetchScalarGridSpec(
            num_scalar_prefetch=0,
            grid=(N, n_t),
            in_specs=[
                pl.BlockSpec((1, TH, W + 1, Cin), lambda n, t: (n, t, 0, 0)),
                pl.BlockSpec((1, 1, W + 1, Cin), lambda n, t: (n, (t + 1) * TH, 0, 0)),
                pl.BlockSpec((4, Cin, C4), lambda n, t: (0, 0, 0)),
            ],
            out_specs=(
                pl.BlockSpec((1, TH, W, C4), lambda n, t: (n, t, 0, 0)),
                pl.BlockSpec((1, 2, C4), lambda n, t: (n, 0, 0)),   # accumulator over t
            ),
        ),
        compiler_params=pltpu.CompilerParams(
            dimension_semantics=("parallel", "arbitrary"),
            vmem_limit_bytes=vmem_limit,
        ),
    )(xp, xp, w_views)

    # ---- tiny host-of-kernel glue: finish the BN stats fold (N, phases -> channel) ----
    count = jnp.float32(N * 4 * H * W)                                # = N * 2H * 2W
    sum_c = stats[:, 0, :].sum(axis=0).reshape(4, Cout).sum(axis=0)
    ssq_c = stats[:, 1, :].sum(axis=0).reshape(4, Cout).sum(axis=0)
    mean = sum_c / count
    var = ssq_c / count - mean * mean                                 # biased batch variance
    scale = gamma.astype(jnp.float32) * lax.rsqrt(var + eps)
    shift = beta.astype(jnp.float32) - mean * scale
    scale_p = jnp.tile(scale, 4).reshape(1, 1, 1, C4)
    shift_p = jnp.tile(shift, 4).reshape(1, 1, 1, C4)

    # ---- kernel 2: tiled BN apply + ReLU on the phase-packed tensor ----
    out_p = pl.pallas_call(
        _bn_apply_kernel,
        out_shape=jax.ShapeDtypeStruct((N, H, W, C4), jnp.float32),
        grid_spec=pltpu.PrefetchScalarGridSpec(
            num_scalar_prefetch=0,
            grid=(N, n_t),
            in_specs=[
                pl.BlockSpec((1, TH, W, C4), lambda n, t: (n, t, 0, 0)),
                pl.BlockSpec((1, 1, 1, C4), lambda n, t: (0, 0, 0, 0)),
                pl.BlockSpec((1, 1, 1, C4), lambda n, t: (0, 0, 0, 0)),
            ],
            out_specs=pl.BlockSpec((1, TH, W, C4), lambda n, t: (n, t, 0, 0)),
        ),
        compiler_params=pltpu.CompilerParams(
            dimension_semantics=("parallel", "parallel"),
            vmem_limit_bytes=vmem_limit,
        ),
    )(phases, scale_p, shift_p)

    # Un-pack the 2x2 phases directly inside the final NHWC->NCHW transpose
    # (no separate interleave round trip through HBM).
    out = out_p.reshape(N, H, W, 2, 2, Cout).transpose(0, 5, 1, 3, 2, 4)
    return out.reshape(N, Cout, 2 * H, 2 * W)
    # TODO(synk): running_mean/running_var momentum updates (stateful nn.BatchNorm2d
    # buffers) are not modeled; they do not affect the returned forward output.


def reference(x_nchw, w_pt, bias, gamma, beta, eps=1e-3):
    """Pure-JAX/XLA reference for ConvTranspose2d + training-mode BN + ReLU (NCHW)."""
    w_conv = jnp.flip(w_pt, axis=(2, 3)).transpose(1, 0, 2, 3)  # (Cout, Cin, 3, 3)
    y = lax.conv_general_dilated(
        x_nchw,
        w_conv,
        window_strides=(1, 1),
        padding=((1, 2), (1, 2)),
        lhs_dilation=(2, 2),
        dimension_numbers=("NCHW", "OIHW", "NCHW"),
        precision=lax.Precision.HIGHEST,
    )
    y = y + bias[None, :, None, None]
    mean = jnp.mean(y, axis=(0, 2, 3), keepdims=True)
    var = jnp.mean(jnp.square(y - mean), axis=(0, 2, 3), keepdims=True)
    yn = (y - mean) * lax.rsqrt(var + eps)
    yn = yn * gamma[None, :, None, None] + beta[None, :, None, None]
    return jnp.maximum(yn, 0.0)


if __name__ == "__main__":
    key = jax.random.PRNGKey(0)
    k1, k2, k3, k4, k5 = jax.random.split(key, 5)

    N, Cin, H, W, Cout = 2, 4, 16, 16, 8

    x = jax.random.normal(k1, (N, Cin, H, W), jnp.float32)
    # Deterministic synthetic parameters (shapes per nn.ConvTranspose2d / nn.BatchNorm2d).
    w_pt = 0.1 * jax.random.normal(k2, (Cin, Cout, 3, 3), jnp.float32)   # (in, out, kh, kw)
    bias = 0.1 * jax.random.normal(k3, (Cout,), jnp.float32)
    gamma = 1.0 + 0.1 * jax.random.normal(k4, (Cout,), jnp.float32)
    beta = 0.1 * jax.random.normal(k5, (Cout,), jnp.float32)

    out = upsampler_block(x, w_pt, bias, gamma, beta)
    out = jax.block_until_ready(out)

    ref = reference(x, w_pt, bias, gamma, beta)
    np.testing.assert_allclose(np.asarray(out), np.asarray(ref), rtol=1e-4, atol=1e-4)

    print("KERNEL_OK")
</pallas_src>

<mosaic_0001>
module attributes {stable_mosaic.version = 11 : i64} {
  func.func @_deconv_kernel(%arg0: i32, %arg1: i32, %arg2: memref<1x8x17x4xf32, #tpu.memory_space<vmem>>, %arg3: memref<1x1x17x4xf32, #tpu.memory_space<vmem>>, %arg4: memref<4x4x32xf32, #tpu.memory_space<vmem>>, %arg5: memref<1x8x16x32xf32, #tpu.memory_space<vmem>>, %arg6: memref<1x2x32xf32, #tpu.memory_space<vmem>>) attributes {dimension_semantics = [#tpu.dimension_semantics<parallel>, #tpu.dimension_semantics<arbitrary>], iteration_bounds = array<i64: 2, 2>, scalar_prefetch = 0 : i64, scratch_operands = 0 : i64, tpu.core_type = #tpu.core_type<tc>, window_params = [{transform_indices = @transform_0, window_bounds = array<i64: 1, 8, 17, 4>}, {transform_indices = @transform_1, window_bounds = array<i64: 1, 1, 17, 4>}, {pipeline_mode = #tpu.pipeline_mode<synchronous>, transform_indices = @transform_2, window_bounds = array<i64: 4, 4, 32>}, {transform_indices = @transform_3, window_bounds = array<i64: 1, 8, 16, 32>}, {transform_indices = @transform_4, window_bounds = array<i64: 1, 2, 32>}]} {
    %c0 = arith.constant 0 : index
    %c0_0 = arith.constant 0 : index
    %c0_1 = arith.constant 0 : index
    %c0_2 = arith.constant 0 : index
    %0 = vector.load %arg2[%c0, %c0_0, %c0_1, %c0_2] : memref<1x8x17x4xf32, #tpu.memory_space<vmem>>, vector<1x8x16x4xf32>
    %1 = vector.shape_cast %0 : vector<1x8x16x4xf32> to vector<8x16x4xf32>
    %2 = vector.shape_cast %1 : vector<8x16x4xf32> to vector<128x4xf32>
    %c0_3 = arith.constant 0 : index
    %c0_4 = arith.constant 0 : index
    %c0_5 = arith.constant 0 : index
    %3 = vector.load %arg4[%c0_3, %c0_4, %c0_5] : memref<4x4x32xf32, #tpu.memory_space<vmem>>, vector<1x4x32xf32>
    %4 = vector.shape_cast %3 : vector<1x4x32xf32> to vector<4x32xf32>
    %cst = arith.constant dense<0.000000e+00> : vector<128x32xf32>
    %5 = tpu.matmul %2, %4, %cst {dimension_numbers = #tpu.dot_dimension_numbers<[1], [0], [0], [1], [0, 0, 1, 1], [], []>, precision = #tpu.contract_precision<fp32>} : vector<128x4xf32>, vector<4x32xf32>, vector<128x32xf32> -> vector<128x32xf32>
    %c0_6 = arith.constant 0 : index
    %c0_7 = arith.constant 0 : index
    %c1 = arith.constant 1 : index
    %c0_8 = arith.constant 0 : index
    %6 = vector.load %arg2[%c0_6, %c0_7, %c1, %c0_8] : memref<1x8x17x4xf32, #tpu.memory_space<vmem>>, vector<1x8x16x4xf32>
    %7 = vector.shape_cast %6 : vector<1x8x16x4xf32> to vector<8x16x4xf32>
    %8 = vector.shape_cast %7 : vector<8x16x4xf32> to vector<128x4xf32>
    %c1_9 = arith.constant 1 : index
    %c0_10 = arith.constant 0 : index
    %c0_11 = arith.constant 0 : index
    %9 = vector.load %arg4[%c1_9, %c0_10, %c0_11] : memref<4x4x32xf32, #tpu.memory_space<vmem>>, vector<1x4x32xf32>
    %10 = vector.shape_cast %9 : vector<1x4x32xf32> to vector<4x32xf32>
    %cst_12 = arith.constant dense<0.000000e+00> : vector<128x32xf32>
    %11 = tpu.matmul %8, %10, %cst_12 {dimension_numbers = #tpu.dot_dimension_numbers<[1], [0], [0], [1], [0, 0, 1, 1], [], []>, precision = #tpu.contract_precision<fp32>} : vector<128x4xf32>, vector<4x32xf32>, vector<128x32xf32> -> vector<128x32xf32>
    %12 = arith.addf %5, %11 : vector<128x32xf32>
    %c0_13 = arith.constant 0 : index
    %c0_14 = arith.constant 0 : index
    %c0_15 = arith.constant 0 : index
    %c0_16 = arith.constant 0 : index
    %13 = vector.load %arg3[%c0_13, %c0_14, %c0_15, %c0_16] : memref<1x1x17x4xf32, #tpu.memory_space<vmem>>, vector<1x1x16x4xf32>
    %14 = vector.shape_cast %13 : vector<1x1x16x4xf32> to vector<1x16x4xf32>
    %c0_17 = arith.constant 0 : index
    %c1_18 = arith.constant 1 : index
    %c0_19 = arith.constant 0 : index
    %c0_20 = arith.constant 0 : index
    %15 = vector.load %arg2[%c0_17, %c1_18, %c0_19, %c0_20] : memref<1x8x17x4xf32, #tpu.memory_space<vmem>>, vector<1x7x16x4xf32>
    %16 = vector.shape_cast %15 : vector<1x7x16x4xf32> to vector<7x16x4xf32>
    %17 = tpu.concatenate %16, %14 in 0 : vector<7x16x4xf32>, vector<1x16x4xf32> -> vector<8x16x4xf32>
    %18 = vector.shape_cast %17 : vector<8x16x4xf32> to vector<128x4xf32>
    %c2 = arith.constant 2 : index
    %c0_21 = arith.constant 0 : index
    %c0_22 = arith.constant 0 : index
    %19 = vector.load %arg4[%c2, %c0_21, %c0_22] : memref<4x4x32xf32, #tpu.memory_space<vmem>>, vector<1x4x32xf32>
    %20 = vector.shape_cast %19 : vector<1x4x32xf32> to vector<4x32xf32>
    %cst_23 = arith.constant dense<0.000000e+00> : vector<128x32xf32>
    %21 = tpu.matmul %18, %20, %cst_23 {dimension_numbers = #tpu.dot_dimension_numbers<[1], [0], [0], [1], [0, 0, 1, 1], [], []>, precision = #tpu.contract_precision<fp32>} : vector<128x4xf32>, vector<4x32xf32>, vector<128x32xf32> -> vector<128x32xf32>
    %22 = arith.addf %12, %21 : vector<128x32xf32>
    %c0_24 = arith.constant 0 : index
    %c0_25 = arith.constant 0 : index
    %c1_26 = arith.constant 1 : index
    %c0_27 = arith.constant 0 : index
    %23 = vector.load %arg3[%c0_24, %c0_25, %c1_26, %c0_27] : memref<1x1x17x4xf32, #tpu.memory_space<vmem>>, vector<1x1x16x4xf32>
    %24 = vector.shape_cast %23 : vector<1x1x16x4xf32> to vector<1x16x4xf32>
    %c0_28 = arith.constant 0 : index
    %c1_29 = arith.constant 1 : index
    %c1_30 = arith.constant 1 : index
    %c0_31 = arith.constant 0 : index
    %25 = vector.load %arg2[%c0_28, %c1_29, %c1_30, %c0_31] : memref<1x8x17x4xf32, #tpu.memory_space<vmem>>, vector<1x7x16x4xf32>
    %26 = vector.shape_cast %25 : vector<1x7x16x4xf32> to vector<7x16x4xf32>
    %27 = tpu.concatenate %26, %24 in 0 : vector<7x16x4xf32>, vector<1x16x4xf32> -> vector<8x16x4xf32>
    %28 = vector.shape_cast %27 : vector<8x16x4xf32> to vector<128x4xf32>
    %c3 = arith.constant 3 : index
    %c0_32 = arith.constant 0 : index
    %c0_33 = arith.constant 0 : index
    %29 = vector.load %arg4[%c3, %c0_32, %c0_33] : memref<4x4x32xf32, #tpu.memory_space<vmem>>, vector<1x4x32xf32>
    %30 = vector.shape_cast %29 : vector<1x4x32xf32> to vector<4x32xf32>
    %cst_34 = arith.constant dense<0.000000e+00> : vector<128x32xf32>
    %31 = tpu.matmul %28, %30, %cst_34 {dimension_numbers = #tpu.dot_dimension_numbers<[1], [0], [0], [1], [0, 0, 1, 1], [], []>, precision = #tpu.contract_precision<fp32>} : vector<128x4xf32>, vector<4x32xf32>, vector<128x32xf32> -> vector<128x32xf32>
    %32 = arith.addf %22, %31 : vector<128x32xf32>
    %33 = vector.shape_cast %32 : vector<128x32xf32> to vector<8x16x32xf32>
    %c0_35 = arith.constant 0 : index
    %c0_36 = arith.constant 0 : index
    %c0_37 = arith.constant 0 : index
    %c0_38 = arith.constant 0 : index
    %34 = vector.load %arg5[%c0_35, %c0_36, %c0_37, %c0_38] : memref<1x8x16x32xf32, #tpu.memory_space<vmem>>, vector<1x8x16x32xf32>
    %35 = vector.shape_cast %34 : vector<1x8x16x32xf32> to vector<8x16x32xf32>
    %36 = vector.shape_cast %33 : vector<8x16x32xf32> to vector<1x8x16x32xf32>
    tpu.vector_store %arg5[%c0_35, %c0_36, %c0_37, %c0_38], %36 {strides = array<i32>} : memref<1x8x16x32xf32, #tpu.memory_space<vmem>>, vector<1x8x16x32xf32>,
    %c0_i32 = arith.constant 0 : i32
    %37 = arith.cmpi eq, %arg1, %c0_i32 : i32
    %38 = arith.extui %37 : i1 to i32
    %c0_i32_39 = arith.constant 0 : i32
    %39 = arith.cmpi ne, %38, %c0_i32_39 : i32
    scf.if %39 {
      %cst_54 = arith.constant 0.000000e+00 : f32
      %57 = vector.broadcast %cst_54 : f32 to vector<1x2x32xf32>
      %c0_55 = arith.constant 0 : index
      %c0_56 = arith.constant 0 : index
      %c0_57 = arith.constant 0 : index
      %58 = vector.load %arg6[%c0_55, %c0_56, %c0_57] : memref<1x2x32xf32, #tpu.memory_space<vmem>>, vector<1x2x32xf32>
      tpu.vector_store %arg6[%c0_55, %c0_56, %c0_57], %57 {strides = array<i32>} : memref<1x2x32xf32, #tpu.memory_space<vmem>>, vector<1x2x32xf32>,
    } else {
    }
    %c0_40 = arith.constant 0 : index
    %c0_41 = arith.constant 0 : index
    %c0_42 = arith.constant 0 : index
    %40 = vector.load %arg6[%c0_40, %c0_41, %c0_42] : memref<1x2x32xf32, #tpu.memory_space<vmem>>, vector<1x1x32xf32>
    %41 = vector.shape_cast %40 : vector<1x1x32xf32> to vector<1x32xf32>
    %cst_43 = arith.constant dense<0.000000e+00> : vector<32xf32>
    %42 = vector.multi_reduction <add>, %32, %cst_43 [0] : vector<128x32xf32> to vector<32xf32>
    %43 = vector.shape_cast %42 : vector<32xf32> to vector<1x32xf32>
    %44 = arith.addf %41, %43 : vector<1x32xf32>
    %c0_44 = arith.constant 0 : index
    %c0_45 = arith.constant 0 : index
    %c0_46 = arith.constant 0 : index
    %45 = vector.load %arg6[%c0_44, %c0_45, %c0_46] : memref<1x2x32xf32, #tpu.memory_space<vmem>>, vector<1x1x32xf32>
    %46 = vector.shape_cast %45 : vector<1x1x32xf32> to vector<1x32xf32>
    %47 = vector.shape_cast %44 : vector<1x32xf32> to vector<1x1x32xf32>
    tpu.vector_store %arg6[%c0_44, %c0_45, %c0_46], %47 {strides = array<i32>} : memref<1x2x32xf32, #tpu.memory_space<vmem>>, vector<1x1x32xf32>,
    %c0_47 = arith.constant 0 : index
    %c1_48 = arith.constant 1 : index
    %c0_49 = arith.constant 0 : index
    %48 = vector.load %arg6[%c0_47, %c1_48, %c0_49] : memref<1x2x32xf32, #tpu.memory_space<vmem>>, vector<1x1x32xf32>
    %49 = vector.shape_cast %48 : vector<1x1x32xf32> to vector<1x32xf32>
    %50 = arith.mulf %32, %32 : vector<128x32xf32>
    %cst_50 = arith.constant dense<0.000000e+00> : vector<32xf32>
    %51 = vector.multi_reduction <add>, %50, %cst_50 [0] : vector<128x32xf32> to vector<32xf32>
    %52 = vector.shape_cast %51 : vector<32xf32> to vector<1x32xf32>
    %53 = arith.addf %49, %52 : vector<1x32xf32>
    %c0_51 = arith.constant 0 : index
    %c1_52 = arith.constant 1 : index
    %c0_53 = arith.constant 0 : index
    %54 = vector.load %arg6[%c0_51, %c1_52, %c0_53] : memref<1x2x32xf32, #tpu.memory_space<vmem>>, vector<1x1x32xf32>
    %55 = vector.shape_cast %54 : vector<1x1x32xf32> to vector<1x32xf32>
    %56 = vector.shape_cast %53 : vector<1x32xf32> to vector<1x1x32xf32>
    tpu.vector_store %arg6[%c0_51, %c1_52, %c0_53], %56 {strides = array<i32>} : memref<1x2x32xf32, #tpu.memory_space<vmem>>, vector<1x1x32xf32>,
    return
  }
  func.func @transform_0(%arg0: i32, %arg1: i32) -> (i32, i32, i32, i32) {
    %c0_i32 = arith.constant 0 : i32
    %c0_i32_0 = arith.constant 0 : i32
    %c0_i32_1 = arith.constant 0 : i32
    return %arg0, %arg1, %c0_i32, %c0_i32_0 : i32, i32, i32, i32
  }
  func.func @transform_1(%arg0: i32, %arg1: i32) -> (i32, i32, i32, i32) {
    %c1_i32 = arith.constant 1 : i32
    %0 = arith.addi %arg1, %c1_i32 : i32
    %c8_i32 = arith.constant 8 : i32
    %1 = arith.muli %0, %c8_i32 : i32
    %c0_i32 = arith.constant 0 : i32
    %c0_i32_0 = arith.constant 0 : i32
    %c0_i32_1 = arith.constant 0 : i32
    return %arg0, %1, %c0_i32, %c0_i32_0 : i32, i32, i32, i32
  }
  func.func @transform_2(%arg0: i32, %arg1: i32) -> (i32, i32, i32) {
    %c0_i32 = arith.constant 0 : i32
    %c0_i32_0 = arith.constant 0 : i32
    %c0_i32_1 = arith.constant 0 : i32
    %c0_i32_2 = arith.constant 0 : i32
    return %c0_i32, %c0_i32_0, %c0_i32_1 : i32, i32, i32
  }
  func.func @transform_3(%arg0: i32, %arg1: i32) -> (i32, i32, i32, i32) {
    %c0_i32 = arith.constant 0 : i32
    %c0_i32_0 = arith.constant 0 : i32
    %c0_i32_1 = arith.constant 0 : i32
    return %arg0, %arg1, %c0_i32, %c0_i32_0 : i32, i32, i32, i32
  }
  func.func @transform_4(%arg0: i32, %arg1: i32) -> (i32, i32, i32) {
    %c0_i32 = arith.constant 0 : i32
    %c0_i32_0 = arith.constant 0 : i32
    %c0_i32_1 = arith.constant 0 : i32
    return %arg0, %c0_i32, %c0_i32_0 : i32, i32, i32
  }
}

</mosaic_0001>

<llo_original>
// kernel: tpu_custom_call.1
$region0: #{tpu_custom_call.1}
  #allocation0 [shape = 'u32[]', space=smem, size = 0x4, offset = 0x4, fixed_abs, tag = 'smem constant byte address 0x4 - core index']
  #allocation1 [shape = 'u32[144,128]{1,0:T(1,128)}', space=vmem, size = 0x12000, scoped, tag = 'internal scratch']
  %s0 = inlined_call_operand.vmem [shape: f32[2,17,17,4], index: 0, kind: input, shape index: {}]
  %s1 = inlined_call_operand.vmem [shape: f32[2,17,17,4], index: 1, kind: input, shape index: {}]
  %s2 = inlined_call_operand.vmem [shape: f32[4,4,32], index: 2, kind: input, shape index: {}]
  %s3 = inlined_call_operand.hbm [shape: f32[2,16,16,32], index: 3, kind: output, shape index: {0}]
  %s4 = inlined_call_operand.hbm [shape: f32[2,2,32], index: 4, kind: output, shape index: {1}]
  %5 = xla_tuple %s3, %s4
  %s6 = sld [smem:[#allocation0]]
  $region57: #{tpu_custom_call.1} parent=0
    _
  %s8 = ssub.s32 1, %s6
  %s9 = scalar_select 0, %s8, %s6
  $region1: #{tpu_custom_call.1} parent=0
    #allocation2 [shape = 'u8[131072]{0}', space=vmem, size = 0x20000, scoped, tag = 'output window, operand 0']
    #allocation3 [shape = 's32[2]{0}', space=sflag, size = 0x8, scoped, tag = 'scoped memory for tpu_custom_call.1']
    #allocation4 [shape = 'u8[2048]{0}', space=vmem, size = 0x800, scoped, tag = 'output window, operand 1']
    #allocation5 [shape = 's32[2]{0}', space=sflag, size = 0x8, scoped, tag = 'scoped memory for tpu_custom_call.1']
    %10 = vsyncpa [#allocation3], 0
    %s11 = scalar_lea.sflag [#allocation3], 1
    %12 = vsyncpa %s11, 0
    %13 = vsyncpa [#allocation5], 0
    %s14 = scalar_lea.sflag [#allocation5], 1
    %15 = vsyncpa %s14, 0
    loop: start=0, step=1, limit=6
    $region2: #{tpu_custom_call.1} parent=1 // loop_pre_header
      _
    $region3: #{tpu_custom_call.1} parent=1 // loop_header
      %s17 = sphi 0, %s21
      %p18 = scmp.ge.s32.totalorder %s17, 6
      %s24 = sphi 0, %s36
      %s25 = sphi 0, %s32
      %s26 = sphi 0, %s24
      %s27 = sphi 0, %s25
      %s28 = sphi 0, %s26
      %s29 = sphi 0, %s27
      %s41 = sphi 0, %s43
      %s44 = sphi 0, %s41
      %s45 = sphi 0, %s44
      %s61 = sphi 0, %s45
      %s73 = sphi 0, %s75
      %s76 = sphi 0, %s73
      %s77 = sphi 0, %s76
      %s93 = sphi 0, %s77
      %s97 = sphi 0, %s97
      %s99 = sphi 0, %s97
      %s100 = sphi 0, %s99
      %s114 = sphi 0, %s100
      %s122 = sphi 0, %s124
      %s125 = sphi 0, %s122
      %s126 = sphi 0, %s125
      %s142 = sphi 0, %s126
      %s148 = sphi 0, %s150
      %s151 = sphi 0, %s148
      %s152 = sphi 0, %s151
      %s168 = sphi 0, %s152
    $region4: #{tpu_custom_call.1} parent=1 // loop_header_branch
      %20 = sbr.rel (%p18) target = $region8
    $region5: #{tpu_custom_call.1} parent=1 // loop_body
      %s22 = ssub.s32 %s17, 1
      %s23 = ssub.s32 %s17, 2
      %s30 = sadd.s32 1, %s25
      %p31 = scmp.ge.s32.totalorder %s30, 2
      %s32 = scalar_select %p31, 0, %s30
      %s33 = sadd.s32 1, %s24
      %s34 = scalar_select %p31, %s33, %s24
      %p35 = scmp.ge.s32.totalorder %s34, 2
      %s36 = scalar_select %p35, 0, %s34
      %s37 = ssub.s32 %s24, %s36
      %s38 = ssub.s32 %s25, %s32
      %s39 = sor.u32 %s37, %s38
      %p40 = scmp.eq.s32.totalorder %s39, 0
      %s42 = sadd.s32 %s41, 1
      %s43 = scalar_select %p40, %s41, %s42
      %p46 = pneg %p40
      %p47 = scmp.eq.s32.totalorder %s17, 3
      %p48 = por %p46, %p47
      %p49 = scmp.ne.s32.totalorder %s41, %s44
      %p50 = scmp.eq.s32.totalorder %s17, 0
      %p51 = por %p49, %p50
      %p52 = scmp.ne.s32.totalorder %s41, %s44
      %p53 = scmp.eq.s32.totalorder %s22, 3
      %p54 = por %p52, %p53
      %p55 = scmp.ne.s32.totalorder %s44, %s45
      %p56 = scmp.eq.s32.totalorder %s22, 0
      %p57 = por %p55, %p56
      %p58 = scmp.ne.s32.totalorder %s44, %s45
      %p59 = scmp.eq.s32.totalorder %s23, 3
      %p60 = por %p58, %p59
      %p62 = scmp.ne.s32.totalorder %s45, %s61
      %p63 = scmp.eq.s32.totalorder %s23, 0
      %p64 = por %p62, %p63
      %s65 = sadd.s32 %s25, 1
      %s66 = smul.u32 %s65, 8
      %s67 = sadd.s32 %s32, 1
      %s68 = smul.u32 %s67, 8
      %s69 = ssub.s32 %s24, %s36
      %s70 = ssub.s32 %s66, %s68
      %s71 = sor.u32 %s69, %s70
      %p72 = scmp.eq.s32.totalorder %s71, 0
      %s74 = sadd.s32 %s73, 1
      %s75 = scalar_select %p72, %s73, %s74
      %p78 = pneg %p72
      %p79 = scmp.eq.s32.totalorder %s17, 3
      %p80 = por %p78, %p79
      %p81 = scmp.ne.s32.totalorder %s73, %s76
      %p82 = scmp.eq.s32.totalorder %s17, 0
      %p83 = por %p81, %p82
      %p84 = scmp.ne.s32.totalorder %s73, %s76
      %p85 = scmp.eq.s32.totalorder %s22, 3
      %p86 = por %p84, %p85
      %p87 = scmp.ne.s32.totalorder %s76, %s77
      %p88 = scmp.eq.s32.totalorder %s22, 0
      %p89 = por %p87, %p88
      %p90 = scmp.ne.s32.totalorder %s76, %s77
      %p91 = scmp.eq.s32.totalorder %s23, 3
      %p92 = por %p90, %p91
      %p94 = scmp.ne.s32.totalorder %s77, %s93
      %p95 = scmp.eq.s32.totalorder %s23, 0
      %p96 = por %p94, %p95
      %s98 = sadd.s32 %s97, 1
      %p101 = scmp.eq.s32.totalorder %s17, 3
      %p102 = scmp.ne.s32.totalorder %s97, %s99
      %p103 = scmp.eq.s32.totalorder %s17, 0
      %p104 = por %p102, %p103
      %p105 = scmp.ne.s32.totalorder %s97, %s99
      %p106 = scmp.eq.s32.totalorder %s22, 3
      %p107 = por %p105, %p106
      %p108 = scmp.ne.s32.totalorder %s99, %s100
      %p109 = scmp.eq.s32.totalorder %s22, 0
      %p110 = por %p108, %p109
      %p111 = scmp.ne.s32.totalorder %s99, %s100
      %p112 = scmp.eq.s32.totalorder %s23, 3
      %p113 = por %p111, %p112
      %p115 = scmp.ne.s32.totalorder %s100, %s114
      %p116 = scmp.eq.s32.totalorder %s23, 0
      %p117 = por %p115, %p116
      %s118 = ssub.s32 %s24, %s36
      %s119 = ssub.s32 %s25, %s32
      %s120 = sor.u32 %s118, %s119
      %p121 = scmp.eq.s32.totalorder %s120, 0
      %s123 = sadd.s32 %s122, 1
      %s124 = scalar_select %p121, %s122, %s123
      %p127 = pneg %p121
      %p128 = scmp.eq.s32.totalorder %s17, 3
      %p129 = por %p127, %p128
      %p130 = scmp.ne.s32.totalorder %s122, %s125
      %p131 = scmp.eq.s32.totalorder %s17, 0
      %p132 = por %p130, %p131
      %p133 = scmp.ne.s32.totalorder %s122, %s125
      %p134 = scmp.eq.s32.totalorder %s22, 3
      %p135 = por %p133, %p134
      %p136 = scmp.ne.s32.totalorder %s125, %s126
      %p137 = scmp.eq.s32.totalorder %s22, 0
      %p138 = por %p136, %p137
      %p139 = scmp.ne.s32.totalorder %s125, %s126
      %p140 = scmp.eq.s32.totalorder %s23, 3
      %p141 = por %p139, %p140
      %p143 = scmp.ne.s32.totalorder %s126, %s142
      %p144 = scmp.eq.s32.totalorder %s23, 0
      %p145 = por %p143, %p144
      %s146 = ssub.s32 %s24, %s36
      %p147 = scmp.eq.s32.totalorder %s146, 0
      %s149 = sadd.s32 %s148, 1
      %s150 = scalar_select %p147, %s148, %s149
      %p153 = pneg %p147
      %p154 = scmp.eq.s32.totalorder %s17, 3
      %p155 = por %p153, %p154
      %p156 = scmp.ne.s32.totalorder %s148, %s151
      %p157 = scmp.eq.s32.totalorder %s17, 0
      %p158 = por %p156, %p157
      %p159 = scmp.ne.s32.totalorder %s148, %s151
      %p160 = scmp.eq.s32.totalorder %s22, 3
      %p161 = por %p159, %p160
      %p162 = scmp.ne.s32.totalorder %s151, %s152
      %p163 = scmp.eq.s32.totalorder %s22, 0
      %p164 = por %p162, %p163
      %p165 = scmp.ne.s32.totalorder %s151, %s152
      %p166 = scmp.eq.s32.totalorder %s23, 3
      %p167 = por %p165, %p166
      %p169 = scmp.ne.s32.totalorder %s152, %s168
      %p170 = scmp.eq.s32.totalorder %s23, 0
      %p171 = por %p169, %p170
      %p172 = scmp.le.s32.totalorder 1, %s17
      %p173 = scmp.lt.s32.totalorder %s17, 5
      %p174 = pnand %p172, %p173
      %p175 = pneg %p174
      // Predicated region
      $region9: #{tpu_custom_call.1} parent=5 // pred_check
        _
      $region10: #{tpu_custom_call.1} parent=5 // pred_check_branch
        %177 = sbr.rel (%p174) target = $region12
      $region11: #{tpu_custom_call.1} parent=5 // pred_region
        %s178 = ssub.s32 %s17, 1
        // Predicated region
        $region13: #{tpu_custom_call.1} parent=11 // pred_check
          %p179 = pneg %p110
        $region14: #{tpu_custom_call.1} parent=11 // pred_check_branch
          %181 = sbr.rel (%p179) target = $region16
        $region15: #{tpu_custom_call.1} parent=11 // pred_region
          _
        $region16: #{tpu_custom_call.1} parent=11 // pred_fallthru
          _
      $region12: #{tpu_custom_call.1} parent=5 // pred_fallthru
        _
      %p182 = scmp.lt.s32.totalorder %s17, 4
      // Predicated region
      $region17: #{tpu_custom_call.1} parent=5 // pred_check
        %p183 = pneg %p182
      $region18: #{tpu_custom_call.1} parent=5 // pred_check_branch
        %185 = sbr.rel (%p183) target = $region20
      $region19: #{tpu_custom_call.1} parent=5 // pred_region
        // Predicated region
        $region21: #{tpu_custom_call.1} parent=19 // pred_check
          %p186 = pneg %p51
        $region22: #{tpu_custom_call.1} parent=19 // pred_check_branch
          %188 = sbr.rel (%p186) target = $region24
        $region23: #{tpu_custom_call.1} parent=19 // pred_region
          %s189 = smul.u32 8, %s25
          %s190 = ssub.s32 17, %s189
          %p191 = scmp.lt.s32.totalorder %s190, 8
          %s192 = scalar_select %p191, %s190, 8
          %s193 = smul.u32 128, %s192
          %s194 = smul.u32 %s193, 3
          %p195 = scmp.lt.s32.totalorder %s24, 1
          %s196 = scalar_select %p195, %s24, 1
          %p197 = scmp.lt.s32.totalorder %s189, 16
          %s198 = scalar_select %p197, %s189, 16
          %s199 = smul.addr %s198, 3
          %s200 = smul.addr %s196, 51
          %s201 = sadd.s32 %s199, %s200
          %s202 = smul.addr %s201, 8
          %s203 = scalar_lea.vmem %s0, %s202
          %s204 = smul.u32 8, %s25
          %s205 = ssub.s32 17, %s204
          %p206 = scmp.lt.s32.totalorder %s205, 8
          %s207 = scalar_select %p206, %s205, 8
          %s208 = smul.u32 128, %s207
          %s209 = smul.u32 %s208, 3
        $region24: #{tpu_custom_call.1} parent=19 // pred_fallthru
          _
        // Predicated region
        $region25: #{tpu_custom_call.1} parent=19 // pred_check
          %p210 = pneg %p83
        $region26: #{tpu_custom_call.1} parent=19 // pred_check_branch
          %212 = sbr.rel (%p210) target = $region28
        $region27: #{tpu_custom_call.1} parent=19 // pred_region
          %s213 = sadd.s32 %s25, 1
          %s214 = smul.u32 %s213, 8
          %p215 = scmp.lt.s32.totalorder %s24, 1
          %s216 = scalar_select %p215, %s24, 1
          %p217 = scmp.lt.s32.totalorder %s214, 16
          %s218 = scalar_select %p217, %s214, 16
          %s219 = smul.addr %s218, 3
          %s220 = smul.addr %s216, 51
          %s221 = sadd.s32 %s219, %s220
          %s222 = smul.addr %s221, 8
          %s223 = scalar_lea.vmem %s1, %s222
          %s224 = sadd.s32 %s25, 1
          %s225 = smul.u32 %s224, 8
        $region28: #{tpu_custom_call.1} parent=19 // pred_fallthru
          _
      $region20: #{tpu_custom_call.1} parent=5 // pred_fallthru
        _
      %p226 = scmp.le.s32.totalorder 1, %s17
      %p227 = scmp.lt.s32.totalorder %s17, 5
      %p228 = pnand %p226, %p227
      %p229 = pneg %p228
      // Predicated region
      $region29: #{tpu_custom_call.1} parent=5 // pred_check
        _
      $region30: #{tpu_custom_call.1} parent=5 // pred_check_branch
        %231 = sbr.rel (%p228) target = $region32
      $region31: #{tpu_custom_call.1} parent=5 // pred_region
        %s232 = ssub.s32 %s17, 1
        %s233 = smul.u32 8, %s27
        %s234 = ssub.s32 17, %s233
        %p235 = scmp.lt.s32.totalorder %s234, 8
        %s236 = scalar_select %p235, %s234, 8
        %s237 = smul.u32 128, %s236
        %s238 = smul.u32 %s237, 3
        %p239 = scmp.lt.s32.totalorder %s26, 1
        %s240 = scalar_select %p239, %s26, 1
        %p241 = scmp.lt.s32.totalorder %s233, 16
        %s242 = scalar_select %p241, %s233, 16
        %s243 = smul.addr %s242, 3
        %s244 = smul.addr %s240, 51
        %s245 = sadd.s32 %s243, %s244
        %s246 = smul.addr %s245, 8
        %s247 = scalar_lea.vmem %s0, %s246
        %p248 = pneg %p57
        %p249 = pneg %p54
        %s250 = sadd.s32 %s27, 1
        %s251 = smul.u32 %s250, 8
        %p252 = scmp.lt.s32.totalorder %s26, 1
        %s253 = scalar_select %p252, %s26, 1
        %p254 = scmp.lt.s32.totalorder %s251, 16
        %s255 = scalar_select %p254, %s251, 16
        %s256 = smul.addr %s255, 3
        %s257 = smul.addr %s253, 51
        %s258 = sadd.s32 %s256, %s257
        %s259 = smul.addr %s258, 8
        %s260 = scalar_lea.vmem %s1, %s259
        %p261 = pneg %p89
        %p262 = pneg %p86
        %p263 = pneg %p110
        %p264 = pneg %p107
        %p265 = pneg %p138
        %p266 = pneg %p135
        %s267 = sand.u32 %s125, 1
        %s268 = scalar_lea.sflag [#allocation3], %s267
        %s269 = sand.u32 %s125, 1
        %s270 = smul.addr %s269, 128
        %s271 = scalar_lea.vmem [#allocation2], %s270
        %p272 = pneg %p164
        %p273 = pneg %p161
        %s274 = sand.u32 %s151, 1
        %s275 = scalar_lea.sflag [#allocation5], %s274
        %s276 = sand.u32 %s151, 1
        %s277 = smul.addr %s276, 2
        %s278 = scalar_lea.vmem [#allocation4], %s277
        %s279 = smul.u32 8, %s27
        %s280 = ssub.s32 17, %s279
        %p281 = scmp.lt.s32.totalorder %s280, 8
        %s282 = scalar_select %p281, %s280, 8
        %s283 = smul.u32 128, %s282
        %s284 = smul.u32 %s283, 3
        %p285 = scmp.lt.s32.totalorder %s26, 1
        %s286 = scalar_select %p285, %s26, 1
        %p287 = scmp.lt.s32.totalorder %s279, 16
        %s288 = scalar_select %p287, %s279, 16
        %s289 = smul.addr %s288, 3
        %s290 = smul.addr %s286, 51
        %s291 = sadd.s32 %s289, %s290
        %s292 = smul.addr %s291, 8
        %s293 = scalar_lea.vmem %s0, %s292
        %s294 = smul.u32 8, %s27
        %s295 = ssub.s32 17, %s294
        %p296 = scmp.lt.s32.totalorder %s295, 8
        %s297 = scalar_select %p296, %s295, 8
        %s298 = smul.u32 128, %s297
        %s299 = smul.u32 %s298, 3
        %s300 = sadd.s32 %s27, 1
        %s301 = smul.u32 %s300, 8
        %p302 = scmp.lt.s32.totalorder %s26, 1
        %s303 = scalar_select %p302, %s26, 1
        %p304 = scmp.lt.s32.totalorder %s301, 16
        %s305 = scalar_select %p304, %s301, 16
        %s306 = smul.addr %s305, 3
        %s307 = smul.addr %s303, 51
        %s308 = sadd.s32 %s306, %s307
        %s309 = smul.addr %s308, 8
        %s310 = scalar_lea.vmem %s1, %s309
        %s311 = sadd.s32 %s27, 1
        %s312 = smul.u32 %s311, 8
        %s313 = smul.u32 8, %s27
        %v314 = vld [vmem:[%s293] sm:$0xff]
        %v315 = vld [vmem:[%s293 + $0x8] sm:$0xff]
        %v316 = vld [vmem:[%s293 + $0x18] sm:$0xff]
        %v317 = vld [vmem:[%s293 + $0x20] sm:$0xff]
        %v318 = vld [vmem:[%s293 + $0x30] sm:$0xff]
        %v319 = vld [vmem:[%s293 + $0x38] sm:$0xff]
        %v320 = vld [vmem:[%s293 + $0x48] sm:$0xff]
        %v321 = vld [vmem:[%s293 + $0x50] sm:$0xff]
        %v322 = vld [vmem:[%s293 + $0x60] sm:$0xff]
        %v323 = vld [vmem:[%s293 + $0x68] sm:$0xff]
        %v324 = vld [vmem:[%s293 + $0x78] sm:$0xff]
        %v325 = vld [vmem:[%s293 + $0x80] sm:$0xff]
        %v326 = vld [vmem:[%s293 + $0x90] sm:$0xff]
        %v327 = vld [vmem:[%s293 + $0x98] sm:$0xff]
        %v328 = vld [vmem:[%s293 + $0xa8] sm:$0xff]
        %v329 = vld [vmem:[%s293 + $0xb0] sm:$0xff]
        %v330 = vld [vmem:[%s2] sm:$0xf]
        %v331 = vld [vmem:[%s293 + $0x1] sm:$0xff]
        %v332 = vld [vmem:[%s293 + $0x9] sm:$0xff]
        %v333 = vld [vmem:[%s293 + $0x19] sm:$0xff]
        %v334 = vld [vmem:[%s293 + $0x21] sm:$0xff]
        %v335 = vld [vmem:[%s293 + $0x31] sm:$0xff]
        %v336 = vld [vmem:[%s293 + $0x39] sm:$0xff]
        %v337 = vld [vmem:[%s293 + $0x49] sm:$0xff]
        %v338 = vld [vmem:[%s293 + $0x51] sm:$0xff]
        %v339 = vld [vmem:[%s293 + $0x61] sm:$0xff]
        %v340 = vld [vmem:[%s293 + $0x69] sm:$0xff]
        %v341 = vld [vmem:[%s293 + $0x79] sm:$0xff]
        %v342 = vld [vmem:[%s293 + $0x81] sm:$0xff]
        %v343 = vld [vmem:[%s293 + $0x91] sm:$0xff]
        %v344 = vld [vmem:[%s293 + $0x99] sm:$0xff]
        %v345 = vld [vmem:[%s293 + $0xa9] sm:$0xff]
        %v346 = vld [vmem:[%s293 + $0xb1] sm:$0xff]
        %s347 = scalar_lea.vmem %s2, 4
        %v348 = vld [vmem:[%s347] sm:$0xf]
        %vm349 = vcmask 31744
        %v351 = vsel %vm349, %v331, 0
        %v354 = vsel %vm349, %v332, 0
        %v357 = vsel %vm349, %v333, 0
        %v360 = vsel %vm349, %v334, 0
        %v363 = vsel %vm349, %v335, 0
        %v366 = vsel %vm349, %v336, 0
        %v369 = vsel %vm349, %v337, 0
        %v372 = vsel %vm349, %v338, 0
        %v375 = vsel %vm349, %v339, 0
        %v378 = vsel %vm349, %v340, 0
        %v381 = vsel %vm349, %v341, 0
        %v384 = vsel %vm349, %v342, 0
        %v387 = vsel %vm349, %v343, 0
        %v390 = vsel %vm349, %v344, 0
        %v393 = vsel %vm349, %v345, 0
        %v396 = vsel %vm349, %v346, 0
        %vm398 = vcmask 1043456
        %v400 = vsel %vm398, %v348, 0
        %402 = vmatprep.subr.mxu0 0.0
        %v403 = vand.u32 %v400, 4294901760
        %404 = vmatpush1.msra.mxu0 %v403
        %405 = vmatprep.subr.mxu0 0.0
        %406 = vmatpush1.msra.mxu0 0.0
        %407 = vmatprep.subr.mxu0 0.0
        %408 = vmatpush1.msra.mxu0 0.0
        %409 = vmatprep.subr.mxu0 0.0
        %410 = vmatpush1.msra.mxu0 0.0
        %411 = vmatprep.subr.mxu0 0.0
        %412 = vmatpush1.msra.mxu0 0.0
        %413 = vmatprep.subr.mxu0 0.0
        %414 = vmatpush1.msra.mxu0 0.0
        %415 = vmatprep.subr.mxu0 0.0
        %416 = vmatpush1.msra.mxu0 0.0
        %417 = vmatprep.subr.mxu0 0.0
        %418 = vmatpush1.msra.mxu0 0.0
        %419 = vmatprep.subr.mxu0 0.0
        %420 = vmatpush1.msra.mxu0 0.0
        %421 = vmatprep.subr.mxu0 0.0
        %422 = vmatpush1.msra.mxu0 0.0
        %423 = vmatprep.subr.mxu0 0.0
        %424 = vmatpush1.msra.mxu0 0.0
        %425 = vmatprep.subr.mxu0 0.0
        %426 = vmatpush1.msra.mxu0 0.0
        %427 = vmatprep.subr.mxu0 0.0
        %428 = vmatpush1.msra.mxu0 0.0
        %429 = vmatprep.subr.mxu0 0.0
        %430 = vmatpush1.msra.mxu0 0.0
        %431 = vmatprep.subr.mxu0 0.0
        %432 = vmatpush1.msra.mxu0 0.0
        %433 = vmatprep.subr.mxu0 0.0
        %434 = vmatpush1.msra.mxu0 0.0
        %435 = vmatprep.subr.mxu0 0.0
        %436 = vmatpush1.msra.mxu0 0.0
        %437 = vmatprep.subr.mxu0 0.0
        %438 = vmatpush1.msra.mxu0 0.0
        %439 = vmatprep.subr.mxu0 0.0
        %440 = vmatpush1.msra.mxu0 0.0
        %441 = vmatprep.subr.mxu0 0.0
        %442 = vmatpush1.msra.mxu0 0.0
        %443 = vmatprep.subr.mxu0 0.0
        %444 = vmatpush1.msra.mxu0 0.0
        %445 = vmatprep.subr.mxu0 0.0
        %446 = vmatpush1.msra.mxu0 0.0
        %447 = vmatprep.subr.mxu0 0.0
        %448 = vmatpush1.msra.mxu0 0.0
        %449 = vmatprep.subr.mxu0 0.0
        %450 = vmatpush1.msra.mxu0 0.0
        %451 = vmatprep.subr.mxu0 0.0
        %452 = vmatpush1.msra.mxu0 0.0
        %453 = vmatprep.subr.mxu0 0.0
        %454 = vmatpush1.msra.mxu0 0.0
        %455 = vmatprep.subr.mxu0 0.0
        %456 = vmatpush1.msra.mxu0 0.0
        %457 = vmatprep.subr.mxu0 0.0
        %458 = vmatpush1.msra.mxu0 0.0
        %459 = vmatprep.subr.mxu0 0.0
        %460 = vmatpush1.msra.mxu0 0.0
        %461 = vmatprep.subr.mxu0 0.0
        %462 = vmatpush1.msra.mxu0 0.0
        %463 = vmatprep.subr.mxu0 0.0
        %464 = vmatpush1.msra.mxu0 0.0
        %465 = vmatprep.subr.mxu0 0.0
        %466 = vmatpush1.msra.mxu0 0.0
        %467 = vmatprep.mubr.f32.mxu0 0.0
        %v468 = vand.u32 %v351, 4294901760
        %v469 = vsub.f32 %v351, %v468
        %v470 = vand.u32 %v469, 4294901760
        %v471 = vsub.f32 %v469, %v470
        %v472 = vand.u32 %v471, 4294901760
        %473 = vmatmul.mubr.f32.gmra.mrb[0].mxu0 %v472
        %v474 = vpop.f32.mrb[0].mxu0
        %v475 = vadd.f32 0.0, %v474
        %v476 = vpop.f32.mrb[0].mxu0
        %477 = vmatprep.mubr.f32.mxu0 0.0
        %v478 = vand.u32 %v354, 4294901760
        %v479 = vsub.f32 %v354, %v478
        %v480 = vand.u32 %v479, 4294901760
        %v481 = vsub.f32 %v479, %v480
        %v482 = vand.u32 %v481, 4294901760
        %483 = vmatmul.mubr.f32.gmra.mrb[0].mxu0 %v482
        %v484 = vpop.f32.mrb[0].mxu0
        %v485 = vadd.f32 0.0, %v484
        %v486 = vpop.f32.mrb[0].mxu0
        %487 = vmatprep.mubr.f32.mxu0 0.0
        %v488 = vand.u32 %v357, 4294901760
        %v489 = vsub.f32 %v357, %v488
        %v490 = vand.u32 %v489, 4294901760
        %v491 = vsub.f32 %v489, %v490
        %v492 = vand.u32 %v491, 4294901760
        %493 = vmatmul.mubr.f32.gmra.mrb[0].mxu0 %v492
        %v494 = vpop.f32.mrb[0].mxu0
        %v495 = vadd.f32 0.0, %v494
        %v496 = vpop.f32.mrb[0].mxu0
        %497 = vmatprep.mubr.f32.mxu0 0.0
        %v498 = vand.u32 %v360, 4294901760
        %v499 = vsub.f32 %v360, %v498
        %v500 = vand.u32 %v499, 4294901760
        %v501 = vsub.f32 %v499, %v500
        %v502 = vand.u32 %v501, 4294901760
        %503 = vmatmul.mubr.f32.gmra.mrb[0].mxu0 %v502
        %v504 = vpop.f32.mrb[0].mxu0
        %v505 = vadd.f32 0.0, %v504
        %v506 = vpop.f32.mrb[0].mxu0
        %507 = vmatprep.mubr.f32.mxu0 0.0
        %v508 = vand.u32 %v363, 4294901760
        %v509 = vsub.f32 %v363, %v508
        %v510 = vand.u32 %v509, 4294901760
        %v511 = vsub.f32 %v509, %v510
        %v512 = vand.u32 %v511, 4294901760
        %513 = vmatmul.mubr.f32.gmra.mrb[0].mxu0 %v512
        %v514 = vpop.f32.mrb[0].mxu0
        %v515 = vadd.f32 0.0, %v514
        %v516 = vpop.f32.mrb[0].mxu0
        %517 = vmatprep.mubr.f32.mxu0 0.0
        %v518 = vand.u32 %v366, 4294901760
        %v519 = vsub.f32 %v366, %v518
        %v520 = vand.u32 %v519, 4294901760
        %v521 = vsub.f32 %v519, %v520
        %v522 = vand.u32 %v521, 4294901760
        %523 = vmatmul.mubr.f32.gmra.mrb[0].mxu0 %v522
        %v524 = vpop.f32.mrb[0].mxu0
        %v525 = vadd.f32 0.0, %v524
        %v526 = vpop.f32.mrb[0].mxu0
        %527 = vmatprep.mubr.f32.mxu0 0.0
        %v528 = vand.u32 %v369, 4294901760
        %v529 = vsub.f32 %v369, %v528
        %v530 = vand.u32 %v529, 4294901760
        %v531 = vsub.f32 %v529, %v530
        %v532 = vand.u32 %v531, 4294901760
        %533 = vmatmul.mubr.f32.gmra.mrb[0].mxu0 %v532
        %v534 = vpop.f32.mrb[0].mxu0
        %v535 = vadd.f32 0.0, %v534
        %v536 = vpop.f32.mrb[0].mxu0
        %537 = vmatprep.mubr.f32.mxu0 0.0
        %v538 = vand.u32 %v372, 4294901760
        %v539 = vsub.f32 %v372, %v538
        %v540 = vand.u32 %v539, 4294901760
        %v541 = vsub.f32 %v539, %v540
        %v542 = vand.u32 %v541, 4294901760
        %543 = vmatmul.mubr.f32.gmra.mrb[0].mxu0 %v542
        %v544 = vpop.f32.mrb[0].mxu0
        %v545 = vadd.f32 0.0, %v544
        %v546 = vpop.f32.mrb[0].mxu0
        %547 = vmatprep.mubr.f32.mxu0 0.0
        %v548 = vand.u32 %v375, 4294901760
        %v549 = vsub.f32 %v375, %v548
        %v550 = vand.u32 %v549, 4294901760
        %v551 = vsub.f32 %v549, %v550
        %v552 = vand.u32 %v551, 4294901760
        %553 = vmatmul.mubr.f32.gmra.mrb[0].mxu0 %v552
        %v554 = vpop.f32.mrb[0].mxu0
        %v555 = vadd.f32 0.0, %v554
        %v556 = vpop.f32.mrb[0].mxu0
        %557 = vmatprep.mubr.f32.mxu0 0.0
        %v558 = vand.u32 %v378, 4294901760
        %v559 = vsub.f32 %v378, %v558
        %v560 = vand.u32 %v559, 4294901760
        %v561 = vsub.f32 %v559, %v560
        %v562 = vand.u32 %v561, 4294901760
        %563 = vmatmul.mubr.f32.gmra.mrb[0].mxu0 %v562
        %v564 = vpop.f32.mrb[0].mxu0
        %v565 = vadd.f32 0.0, %v564
        %v566 = vpop.f32.mrb[0].mxu0
        %567 = vmatprep.mubr.f32.mxu0 0.0
        %v568 = vand.u32 %v381, 4294901760
        %v569 = vsub.f32 %v381, %v568
        %v570 = vand.u32 %v569, 4294901760
        %v571 = vsub.f32 %v569, %v570
        %v572 = vand.u32 %v571, 4294901760
        %573 = vmatmul.mubr.f32.gmra.mrb[0].mxu0 %v572
        %v574 = vpop.f32.mrb[0].mxu0
        %v575 = vadd.f32 0.0, %v574
        %v576 = vpop.f32.mrb[0].mxu0
        %577 = vmatprep.mubr.f32.mxu0 0.0
        %v578 = vand.u32 %v384, 4294901760
        %v579 = vsub.f32 %v384, %v578
        %v580 = vand.u32 %v579, 4294901760
        %v581 = vsub.f32 %v579, %v580
        %v582 = vand.u32 %v581, 4294901760
        %583 = vmatmul.mubr.f32.gmra.mrb[0].mxu0 %v582
        %v584 = vpop.f32.mrb[0].mxu0
        %v585 = vadd.f32 0.0, %v584
        %v586 = vpop.f32.mrb[0].mxu0
        %587 = vmatprep.mubr.f32.mxu0 0.0
        %v588 = vand.u32 %v387, 4294901760
        %v589 = vsub.f32 %v387, %v588
        %v590 = vand.u32 %v589, 4294901760
        %v591 = vsub.f32 %v589, %v590
        %v592 = vand.u32 %v591, 4294901760
        %593 = vmatmul.mubr.f32.gmra.mrb[0].mxu0 %v592
        %v594 = vpop.f32.mrb[0].mxu0
        %v595 = vadd.f32 0.0, %v594
        %v596 = vpop.f32.mrb[0].mxu0
        %597 = vmatprep.mubr.f32.mxu0 0.0
        %v598 = vand.u32 %v390, 4294901760
        %v599 = vsub.f32 %v390, %v598
        %v600 = vand.u32 %v599, 4294901760
        %v601 = vsub.f32 %v599, %v600
        %v602 = vand.u32 %v601, 4294901760
        %603 = vmatmul.mubr.f32.gmra.mrb[0].mxu0 %v602
        %v604 = vpop.f32.mrb[0].mxu0
        %v605 = vadd.f32 0.0, %v604
        %v606 = vpop.f32.mrb[0].mxu0
        %607 = vmatprep.mubr.f32.mxu0 0.0
        %v608 = vand.u32 %v393, 4294901760
        %v609 = vsub.f32 %v393, %v608
        %v610 = vand.u32 %v609, 4294901760
        %v611 = vsub.f32 %v609, %v610
        %v612 = vand.u32 %v611, 4294901760
        %613 = vmatmul.mubr.f32.gmra.mrb[0].mxu0 %v612
        %v614 = vpop.f32.mrb[0].mxu0
        %v615 = vadd.f32 0.0, %v614
        %v616 = vpop.f32.mrb[0].mxu0
        %617 = vmatprep.mubr.f32.mxu0 0.0
        %v618 = vand.u32 %v396, 4294901760
        %v619 = vsub.f32 %v396, %v618
        %v620 = vand.u32 %v619, 4294901760
        %v621 = vsub.f32 %v619, %v620
        %v622 = vand.u32 %v621, 4294901760
        %623 = vmatmul.mubr.f32.gmra.mrb[0].mxu0 %v622
        %v624 = vpop.f32.mrb[0].mxu0
        %v625 = vadd.f32 0.0, %v624
        %v626 = vpop.f32.mrb[0].mxu0
        %627 = vdwg.mxu0
        %628 = vmatprep.subr.mxu0 0.0
        %v629 = vand.u32 %v400, 4294901760
        %v630 = vsub.f32 %v400, %v629
        %v631 = vand.u32 %v630, 4294901760
        %v632 = vsub.f32 %v630, %v631
        %v633 = vand.u32 %v632, 4294901760
        %634 = vmatpush1.msra.mxu0 %v633
        %635 = vmatprep.subr.mxu0 0.0
        %636 = vmatpush1.msra.mxu0 0.0
        %637 = vmatprep.subr.mxu0 0.0
        %638 = vmatpush1.msra.mxu0 0.0
        %639 = vmatprep.subr.mxu0 0.0
        %640 = vmatpush1.msra.mxu0 0.0
        %641 = vmatprep.subr.mxu0 0.0
        %642 = vmatpush1.msra.mxu0 0.0
        %643 = vmatprep.subr.mxu0 0.0
        %644 = vmatpush1.msra.mxu0 0.0
        %645 = vmatprep.subr.mxu0 0.0
        %646 = vmatpush1.msra.mxu0 0.0
        %647 = vmatprep.subr.mxu0 0.0
        %648 = vmatpush1.msra.mxu0 0.0
        %649 = vmatprep.subr.mxu0 0.0
        %650 = vmatpush1.msra.mxu0 0.0
        %651 = vmatprep.subr.mxu0 0.0
        %652 = vmatpush1.msra.mxu0 0.0
        %653 = vmatprep.subr.mxu0 0.0
        %654 = vmatpush1.msra.mxu0 0.0
        %655 = vmatprep.subr.mxu0 0.0
        %656 = vmatpush1.msra.mxu0 0.0
        %657 = vmatprep.subr.mxu0 0.0
        %658 = vmatpush1.msra.mxu0 0.0
        %659 = vmatprep.subr.mxu0 0.0
        %660 = vmatpush1.msra.mxu0 0.0
        %661 = vmatprep.subr.mxu0 0.0
        %662 = vmatpush1.msra.mxu0 0.0
        %663 = vmatprep.subr.mxu0 0.0
        %664 = vmatpush1.msra.mxu0 0.0
        %665 = vmatprep.subr.mxu0 0.0
        %666 = vmatpush1.msra.mxu0 0.0
        %667 = vmatprep.subr.mxu0 0.0
        %668 = vmatpush1.msra.mxu0 0.0
        %669 = vmatprep.subr.mxu0 0.0
        %670 = vmatpush1.msra.mxu0 0.0
        %671 = vmatprep.subr.mxu0 0.0
        %672 = vmatpush1.msra.mxu0 0.0
        %673 = vmatprep.subr.mxu0 0.0
        %674 = vmatpush1.msra.mxu0 0.0
        %675 = vmatprep.subr.mxu0 0.0
        %676 = vmatpush1.msra.mxu0 0.0
        %677 = vmatprep.subr.mxu0 0.0
        %678 = vmatpush1.msra.mxu0 0.0
        %679 = vmatprep.subr.mxu0 0.0
        %680 = vmatpush1.msra.mxu0 0.0
        %681 = vmatprep.subr.mxu0 0.0
        %682 = vmatpush1.msra.mxu0 0.0
        %683 = vmatprep.subr.mxu0 0.0
        %684 = vmatpush1.msra.mxu0 0.0
        %685 = vmatprep.subr.mxu0 0.0
        %686 = vmatpush1.msra.mxu0 0.0
        %687 = vmatprep.subr.mxu0 0.0
        %688 = vmatpush1.msra.mxu0 0.0
        %689 = vmatprep.subr.mxu0 0.0
        %690 = vmatpush1.msra.mxu0 0.0
        %691 = vmatprep.subr.mxu0 0.0
        %692 = vmatpush1.msra.mxu0 0.0
        %693 = vmatprep.subr.mxu0 0.0
        %694 = vmatpush1.msra.mxu0 0.0
        %695 = vmatprep.subr.mxu0 0.0
        %696 = vmatpush1.msra.mxu0 0.0
        %697 = vmatprep.mubr.f32.mxu0 0.0
        %v698 = vand.u32 %v351, 4294901760
        %699 = vmatmul.mubr.f32.gmra.mrb[0].mxu0 %v698
        %v700 = vpop.f32.mrb[0].mxu0
        %v701 = vadd.f32 %v475, %v700
        %v702 = vpop.f32.mrb[0].mxu0
        %703 = vmatprep.mubr.f32.mxu0 0.0
        %v704 = vand.u32 %v354, 4294901760
        %705 = vmatmul.mubr.f32.gmra.mrb[0].mxu0 %v704
        %v706 = vpop.f32.mrb[0].mxu0
        %v707 = vadd.f32 %v485, %v706
        %v708 = vpop.f32.mrb[0].mxu0
        %709 = vmatprep.mubr.f32.mxu0 0.0
        %v710 = vand.u32 %v357, 4294901760
        %711 = vmatmul.mubr.f32.gmra.mrb[0].mxu0 %v710
        %v712 = vpop.f32.mrb[0].mxu0
        %v713 = vadd.f32 %v495, %v712
        %v714 = vpop.f32.mrb[0].mxu0
        %715 = vmatprep.mubr.f32.mxu0 0.0
        %v716 = vand.u32 %v360, 4294901760
        %717 = vmatmul.mubr.f32.gmra.mrb[0].mxu0 %v716
        %v718 = vpop.f32.mrb[0].mxu0
        %v719 = vadd.f32 %v505, %v718
        %v720 = vpop.f32.mrb[0].mxu0
        %721 = vmatprep.mubr.f32.mxu0 0.0
        %v722 = vand.u32 %v363, 4294901760
        %723 = vmatmul.mubr.f32.gmra.mrb[0].mxu0 %v722
        %v724 = vpop.f32.mrb[0].mxu0
        %v725 = vadd.f32 %v515, %v724
        %v726 = vpop.f32.mrb[0].mxu0
        %727 = vmatprep.mubr.f32.mxu0 0.0
        %v728 = vand.u32 %v366, 4294901760
        %729 = vmatmul.mubr.f32.gmra.mrb[0].mxu0 %v728
        %v730 = vpop.f32.mrb[0].mxu0
        %v731 = vadd.f32 %v525, %v730
        %v732 = vpop.f32.mrb[0].mxu0
        %733 = vmatprep.mubr.f32.mxu0 0.0
        %v734 = vand.u32 %v369, 4294901760
        %735 = vmatmul.mubr.f32.gmra.mrb[0].mxu0 %v734
        %v736 = vpop.f32.mrb[0].mxu0
        %v737 = vadd.f32 %v535, %v736
        %v738 = vpop.f32.mrb[0].mxu0
        %739 = vmatprep.mubr.f32.mxu0 0.0
        %v740 = vand.u32 %v372, 4294901760
        %741 = vmatmul.mubr.f32.gmra.mrb[0].mxu0 %v740
        %v742 = vpop.f32.mrb[0].mxu0
        %v743 = vadd.f32 %v545, %v742
        %v744 = vpop.f32.mrb[0].mxu0
        %745 = vmatprep.mubr.f32.mxu0 0.0
        %v746 = vand.u32 %v375, 4294901760
        %747 = vmatmul.mubr.f32.gmra.mrb[0].mxu0 %v746
        %v748 = vpop.f32.mrb[0].mxu0
        %v749 = vadd.f32 %v555, %v748
        %v750 = vpop.f32.mrb[0].mxu0
        %751 = vmatprep.mubr.f32.mxu0 0.0
        %v752 = vand.u32 %v378, 4294901760
        %753 = vmatmul.mubr.f32.gmra.mrb[0].mxu0 %v752
        %v754 = vpop.f32.mrb[0].mxu0
        %v755 = vadd.f32 %v565, %v754
        %v756 = vpop.f32.mrb[0].mxu0
        %757 = vmatprep.mubr.f32.mxu0 0.0
        %v758 = vand.u32 %v381, 4294901760
        %759 = vmatmul.mubr.f32.gmra.mrb[0].mxu0 %v758
        %v760 = vpop.f32.mrb[0].mxu0
        %v761 = vadd.f32 %v575, %v760
        %v762 = vpop.f32.mrb[0].mxu0
        %763 = vmatprep.mubr.f32.mxu0 0.0
        %v764 = vand.u32 %v384, 4294901760
        %765 = vmatmul.mubr.f32.gmra.mrb[0].mxu0 %v764
        %v766 = vpop.f32.mrb[0].mxu0
        %v767 = vadd.f32 %v585, %v766
        %v768 = vpop.f32.mrb[0].mxu0
        %769 = vmatprep.mubr.f32.mxu0 0.0
        %v770 = vand.u32 %v387, 4294901760
        %771 = vmatmul.mubr.f32.gmra.mrb[0].mxu0 %v770
        %v772 = vpop.f32.mrb[0].mxu0
        %v773 = vadd.f32 %v595, %v772
        %v774 = vpop.f32.mrb[0].mxu0
        %775 = vmatprep.mubr.f32.mxu0 0.0
        %v776 = vand.u32 %v390, 4294901760
        %777 = vmatmul.mubr.f32.gmra.mrb[0].mxu0 %v776
        %v778 = vpop.f32.mrb[0].mxu0
        %v779 = vadd.f32 %v605, %v778
        %v780 = vpop.f32.mrb[0].mxu0
        %781 = vmatprep.mubr.f32.mxu0 0.0
        %v782 = vand.u32 %v393, 4294901760
        %783 = vmatmul.mubr.f32.gmra.mrb[0].mxu0 %v782
        %v784 = vpop.f32.mrb[0].mxu0
        %v785 = vadd.f32 %v615, %v784
        %v786 = vpop.f32.mrb[0].mxu0
        %787 = vmatprep.mubr.f32.mxu0 0.0
        %v788 = vand.u32 %v396, 4294901760
        %789 = vmatmul.mubr.f32.gmra.mrb[0].mxu0 %v788
        %v790 = vpop.f32.mrb[0].mxu0
        %v791 = vadd.f32 %v625, %v790
        %v792 = vpop.f32.mrb[0].mxu0
        %793 = vdwg.mxu0
        %794 = vmatprep.subr.mxu0 0.0
        %v795 = vand.u32 %v400, 4294901760
        %v796 = vsub.f32 %v400, %v795
        %797 = vmatpush1.msra.mxu0 %v796
        %798 = vmatprep.subr.mxu0 0.0
        %799 = vmatpush1.msra.mxu0 0.0
        %800 = vmatprep.subr.mxu0 0.0
        %801 = vmatpush1.msra.mxu0 0.0
        %802 = vmatprep.subr.mxu0 0.0
        %803 = vmatpush1.msra.mxu0 0.0
        %804 = vmatprep.subr.mxu0 0.0
        %805 = vmatpush1.msra.mxu0 0.0
        %806 = vmatprep.subr.mxu0 0.0
        %807 = vmatpush1.msra.mxu0 0.0
        %808 = vmatprep.subr.mxu0 0.0
        %809 = vmatpush1.msra.mxu0 0.0
        %810 = vmatprep.subr.mxu0 0.0
        %811 = vmatpush1.msra.mxu0 0.0
        %812 = vmatprep.subr.mxu0 0.0
        %813 = vmatpush1.msra.mxu0 0.0
        %814 = vmatprep.subr.mxu0 0.0
        %815 = vmatpush1.msra.mxu0 0.0
        %816 = vmatprep.subr.mxu0 0.0
        %817 = vmatpush1.msra.mxu0 0.0
        %818 = vmatprep.subr.mxu0 0.0
        %819 = vmatpush1.msra.mxu0 0.0
        %820 = vmatprep.subr.mxu0 0.0
        %821 = vmatpush1.msra.mxu0 0.0
        %822 = vmatprep.subr.mxu0 0.0
        %823 = vmatpush1.msra.mxu0 0.0
        %824 = vmatprep.subr.mxu0 0.0
        %825 = vmatpush1.msra.mxu0 0.0
        %826 = vmatprep.subr.mxu0 0.0
        %827 = vmatpush1.msra.mxu0 0.0
        %828 = vmatprep.subr.mxu0 0.0
        %829 = vmatpush1.msra.mxu0 0.0
        %830 = vmatprep.subr.mxu0 0.0
        %831 = vmatpush1.msra.mxu0 0.0
        %832 = vmatprep.subr.mxu0 0.0
        %833 = vmatpush1.msra.mxu0 0.0
        %834 = vmatprep.subr.mxu0 0.0
        %835 = vmatpush1.msra.mxu0 0.0
        %836 = vmatprep.subr.mxu0 0.0
        %837 = vmatpush1.msra.mxu0 0.0
        %838 = vmatprep.subr.mxu0 0.0
        %839 = vmatpush1.msra.mxu0 0.0
        %840 = vmatprep.subr.mxu0 0.0
        %841 = vmatpush1.msra.mxu0 0.0
        %842 = vmatprep.subr.mxu0 0.0
        %843 = vmatpush1.msra.mxu0 0.0
        %844 = vmatprep.subr.mxu0 0.0
        %845 = vmatpush1.msra.mxu0 0.0
        %846 = vmatprep.subr.mxu0 0.0
        %847 = vmatpush1.msra.mxu0 0.0
        %848 = vmatprep.subr.mxu0 0.0
        %849 = vmatpush1.msra.mxu0 0.0
        %850 = vmatprep.subr.mxu0 0.0
        %851 = vmatpush1.msra.mxu0 0.0
        %852 = vmatprep.subr.mxu0 0.0
        %853 = vmatpush1.msra.mxu0 0.0
        %854 = vmatprep.subr.mxu0 0.0
        %855 = vmatpush1.msra.mxu0 0.0
        %856 = vmatprep.subr.mxu0 0.0
        %857 = vmatpush1.msra.mxu0 0.0
        %858 = vmatprep.subr.mxu0 0.0
        %859 = vmatpush1.msra.mxu0 0.0
        %860 = vmatprep.mubr.f32.mxu0 0.0
        %v861 = vand.u32 %v351, 4294901760
        %v862 = vsub.f32 %v351, %v861
        %863 = vmatmul.mubr.f32.gmra.mrb[0].mxu0 %v862
        %v864 = vpop.f32.mrb[0].mxu0
        %v865 = vadd.f32 %v701, %v864
        %v866 = vpop.f32.mrb[0].mxu0
        %867 = vmatprep.mubr.f32.mxu0 0.0
        %v868 = vand.u32 %v354, 4294901760
        %v869 = vsub.f32 %v354, %v868
        %870 = vmatmul.mubr.f32.gmra.mrb[0].mxu0 %v869
        %v871 = vpop.f32.mrb[0].mxu0
        %v872 = vadd.f32 %v707, %v871
        %v873 = vpop.f32.mrb[0].mxu0
        %874 = vmatprep.mubr.f32.mxu0 0.0
        %v875 = vand.u32 %v357, 4294901760
        %v876 = vsub.f32 %v357, %v875
        %877 = vmatmul.mubr.f32.gmra.mrb[0].mxu0 %v876
        %v878 = vpop.f32.mrb[0].mxu0
        %v879 = vadd.f32 %v713, %v878
        %v880 = vpop.f32.mrb[0].mxu0
        %881 = vmatprep.mubr.f32.mxu0 0.0
        %v882 = vand.u32 %v360, 4294901760
        %v883 = vsub.f32 %v360, %v882
        %884 = vmatmul.mubr.f32.gmra.mrb[0].mxu0 %v883
        %v885 = vpop.f32.mrb[0].mxu0
        %v886 = vadd.f32 %v719, %v885
        %v887 = vpop.f32.mrb[0].mxu0
        %888 = vmatprep.mubr.f32.mxu0 0.0
        %v889 = vand.u32 %v363, 4294901760
        %v890 = vsub.f32 %v363, %v889
        %891 = vmatmul.mubr.f32.gmra.mrb[0].mxu0 %v890
        %v892 = vpop.f32.mrb[0].mxu0
        %v893 = vadd.f32 %v725, %v892
        %v894 = vpop.f32.mrb[0].mxu0
        %895 = vmatprep.mubr.f32.mxu0 0.0
        %v896 = vand.u32 %v366, 4294901760
        %v897 = vsub.f32 %v366, %v896
        %898 = vmatmul.mubr.f32.gmra.mrb[0].mxu0 %v897
        %v899 = vpop.f32.mrb[0].mxu0
        %v900 = vadd.f32 %v731, %v899
        %v901 = vpop.f32.mrb[0].mxu0
        %902 = vmatprep.mubr.f32.mxu0 0.0
        %v903 = vand.u32 %v369, 4294901760
        %v904 = vsub.f32 %v369, %v903
        %905 = vmatmul.mubr.f32.gmra.mrb[0].mxu0 %v904
        %v906 = vpop.f32.mrb[0].mxu0
        %v907 = vadd.f32 %v737, %v906
        %v908 = vpop.f32.mrb[0].mxu0
        %909 = vmatprep.mubr.f32.mxu0 0.0
        %v910 = vand.u32 %v372, 4294901760
        %v911 = vsub.f32 %v372, %v910
        %912 = vmatmul.mubr.f32.gmra.mrb[0].mxu0 %v911
        %v913 = vpop.f32.mrb[0].mxu0
        %v914 = vadd.f32 %v743, %v913
        %v915 = vpop.f32.mrb[0].mxu0
        %916 = vmatprep.mubr.f32.mxu0 0.0
        %v917 = vand.u32 %v375, 4294901760
        %v918 = vsub.f32 %v375, %v917
        %919 = vmatmul.mubr.f32.gmra.mrb[0].mxu0 %v918
        %v920 = vpop.f32.mrb[0].mxu0
        %v921 = vadd.f32 %v749, %v920
        %v922 = vpop.f32.mrb[0].mxu0
        %923 = vmatprep.mubr.f32.mxu0 0.0
        %v924 = vand.u32 %v378, 4294901760
        %v925 = vsub.f32 %v378, %v924
        %926 = vmatmul.mubr.f32.gmra.mrb[0].mxu0 %v925
        %v927 = vpop.f32.mrb[0].mxu0
        %v928 = vadd.f32 %v755, %v927
        %v929 = vpop.f32.mrb[0].mxu0
        %930 = vmatprep.mubr.f32.mxu0 0.0
        %v931 = vand.u32 %v381, 4294901760
        %v932 = vsub.f32 %v381, %v931
        %933 = vmatmul.mubr.f32.gmra.mrb[0].mxu0 %v932
        %v934 = vpop.f32.mrb[0].mxu0
        %v935 = vadd.f32 %v761, %v934
        %v936 = vpop.f32.mrb[0].mxu0
        %937 = vmatprep.mubr.f32.mxu0 0.0
        %v938 = vand.u32 %v384, 4294901760
        %v939 = vsub.f32 %v384, %v938
        %940 = vmatmul.mubr.f32.gmra.mrb[0].mxu0 %v939
        %v941 = vpop.f32.mrb[0].mxu0
        %v942 = vadd.f32 %v767, %v941
        %v943 = vpop.f32.mrb[0].mxu0
        %944 = vmatprep.mubr.f32.mxu0 0.0
        %v945 = vand.u32 %v387, 4294901760
        %v946 = vsub.f32 %v387, %v945
        %947 = vmatmul.mubr.f32.gmra.mrb[0].mxu0 %v946
        %v948 = vpop.f32.mrb[0].mxu0
        %v949 = vadd.f32 %v773, %v948
        %v950 = vpop.f32.mrb[0].mxu0
        %951 = vmatprep.mubr.f32.mxu0 0.0
        %v952 = vand.u32 %v390, 4294901760
        %v953 = vsub.f32 %v390, %v952
        %954 = vmatmul.mubr.f32.gmra.mrb[0].mxu0 %v953
        %v955 = vpop.f32.mrb[0].mxu0
        %v956 = vadd.f32 %v779, %v955
        %v957 = vpop.f32.mrb[0].mxu0
        %958 = vmatprep.mubr.f32.mxu0 0.0
        %v959 = vand.u32 %v393, 4294901760
        %v960 = vsub.f32 %v393, %v959
        %961 = vmatmul.mubr.f32.gmra.mrb[0].mxu0 %v960
        %v962 = vpop.f32.mrb[0].mxu0
        %v963 = vadd.f32 %v785, %v962
        %v964 = vpop.f32.mrb[0].mxu0
        %965 = vmatprep.mubr.f32.mxu0 0.0
        %v966 = vand.u32 %v396, 4294901760
        %v967 = vsub.f32 %v396, %v966
        %968 = vmatmul.mubr.f32.gmra.mrb[0].mxu0 %v967
        %v969 = vpop.f32.mrb[0].mxu0
        %v970 = vadd.f32 %v791, %v969
        %v971 = vpop.f32.mrb[0].mxu0
        %972 = vdwg.mxu0
        %973 = vmatprep.subr.mxu0 0.0
        %v974 = vand.u32 %v400, 4294901760
        %975 = vmatpush1.msra.mxu0 %v974
        %976 = vmatprep.subr.mxu0 0.0
        %977 = vmatpush1.msra.mxu0 0.0
        %978 = vmatprep.subr.mxu0 0.0
        %979 = vmatpush1.msra.mxu0 0.0
        %980 = vmatprep.subr.mxu0 0.0
        %981 = vmatpush1.msra.mxu0 0.0
        %982 = vmatprep.subr.mxu0 0.0
        %983 = vmatpush1.msra.mxu0 0.0
        %984 = vmatprep.subr.mxu0 0.0
        %985 = vmatpush1.msra.mxu0 0.0
        %986 = vmatprep.subr.mxu0 0.0
        %987 = vmatpush1.msra.mxu0 0.0
        %988 = vmatprep.subr.mxu0 0.0
        %989 = vmatpush1.msra.mxu0 0.0
        %990 = vmatprep.subr.mxu0 0.0
        %991 = vmatpush1.msra.mxu0 0.0
        %992 = vmatprep.subr.mxu0 0.0
        %993 = vmatpush1.msra.mxu0 0.0
        %994 = vmatprep.subr.mxu0 0.0
        %995 = vmatpush1.msra.mxu0 0.0
        %996 = vmatprep.subr.mxu0 0.0
        %997 = vmatpush1.msra.mxu0 0.0
        %998 = vmatprep.subr.mxu0 0.0
        %999 = vmatpush1.msra.mxu0 0.0
        %1000 = vmatprep.subr.mxu0 0.0
        %1001 = vmatpush1.msra.mxu0 0.0
        %1002 = vmatprep.subr.mxu0 0.0
        %1003 = vmatpush1.msra.mxu0 0.0
        %1004 = vmatprep.subr.mxu0 0.0
        %1005 = vmatpush1.msra.mxu0 0.0
        %1006 = vmatprep.subr.mxu0 0.0
        %1007 = vmatpush1.msra.mxu0 0.0
        %1008 = vmatprep.subr.mxu0 0.0
        %1009 = vmatpush1.msra.mxu0 0.0
        %1010 = vmatprep.subr.mxu0 0.0
        %1011 = vmatpush1.msra.mxu0 0.0
        %1012 = vmatprep.subr.mxu0 0.0
        %1013 = vmatpush1.msra.mxu0 0.0
        %1014 = vmatprep.subr.mxu0 0.0
        %1015 = vmatpush1.msra.mxu0 0.0
        %1016 = vmatprep.subr.mxu0 0.0
        %1017 = vmatpush1.msra.mxu0 0.0
        %1018 = vmatprep.subr.mxu0 0.0
        %1019 = vmatpush1.msra.mxu0 0.0
        %1020 = vmatprep.subr.mxu0 0.0
        %1021 = vmatpush1.msra.mxu0 0.0
        %1022 = vmatprep.subr.mxu0 0.0
        %1023 = vmatpush1.msra.mxu0 0.0
        %1024 = vmatprep.subr.mxu0 0.0
        %1025 = vmatpush1.msra.mxu0 0.0
        %1026 = vmatprep.subr.mxu0 0.0
        %1027 = vmatpush1.msra.mxu0 0.0
        %1028 = vmatprep.subr.mxu0 0.0
        %1029 = vmatpush1.msra.mxu0 0.0
        %1030 = vmatprep.subr.mxu0 0.0
        %1031 = vmatpush1.msra.mxu0 0.0
        %1032 = vmatprep.subr.mxu0 0.0
        %1033 = vmatpush1.msra.mxu0 0.0
        %1034 = vmatprep.subr.mxu0 0.0
        %1035 = vmatpush1.msra.mxu0 0.0
        %1036 = vmatprep.subr.mxu0 0.0
        %1037 = vmatpush1.msra.mxu0 0.0
        %1038 = vmatprep.mubr.f32.mxu0 0.0
        %v1039 = vand.u32 %v351, 4294901760
        %v1040 = vsub.f32 %v351, %v1039
        %v1041 = vand.u32 %v1040, 4294901760
        %1042 = vmatmul.mubr.f32.gmra.mrb[0].mxu0 %v1041
        %v1043 = vpop.f32.mrb[0].mxu0
        %v1044 = vadd.f32 %v865, %v1043
        %v1045 = vpop.f32.mrb[0].mxu0
        %1046 = vmatprep.mubr.f32.mxu0 0.0
        %v1047 = vand.u32 %v354, 4294901760
        %v1048 = vsub.f32 %v354, %v1047
        %v1049 = vand.u32 %v1048, 4294901760
        %1050 = vmatmul.mubr.f32.gmra.mrb[0].mxu0 %v1049
        %v1051 = vpop.f32.mrb[0].mxu0
        %v1052 = vadd.f32 %v872, %v1051
        %v1053 = vpop.f32.mrb[0].mxu0
        %1054 = vmatprep.mubr.f32.mxu0 0.0
        %v1055 = vand.u32 %v357, 4294901760
        %v1056 = vsub.f32 %v357, %v1055
        %v1057 = vand.u32 %v1056, 4294901760
        %1058 = vmatmul.mubr.f32.gmra.mrb[0].mxu0 %v1057
        %v1059 = vpop.f32.mrb[0].mxu0
        %v1060 = vadd.f32 %v879, %v1059
        %v1061 = vpop.f32.mrb[0].mxu0
        %1062 = vmatprep.mubr.f32.mxu0 0.0
        %v1063 = vand.u32 %v360, 4294901760
        %v1064 = vsub.f32 %v360, %v1063
        %v1065 = vand.u32 %v1064, 4294901760
        %1066 = vmatmul.mubr.f32.gmra.mrb[0].mxu0 %v1065
        %v1067 = vpop.f32.mrb[0].mxu0
        %v1068 = vadd.f32 %v886, %v1067
        %v1069 = vpop.f32.mrb[0].mxu0
        %1070 = vmatprep.mubr.f32.mxu0 0.0
        %v1071 = vand.u32 %v363, 4294901760
        %v1072 = vsub.f32 %v363, %v1071
        %v1073 = vand.u32 %v1072, 4294901760
        %1074 = vmatmul.mubr.f32.gmra.mrb[0].mxu0 %v1073
        %v1075 = vpop.f32.mrb[0].mxu0
        %v1076 = vadd.f32 %v893, %v1075
        %v1077 = vpop.f32.mrb[0].mxu0
        %1078 = vmatprep.mubr.f32.mxu0 0.0
        %v1079 = vand.u32 %v366, 4294901760
        %v1080 = vsub.f32 %v366, %v1079
        %v1081 = vand.u32 %v1080, 4294901760
        %1082 = vmatmul.mubr.f32.gmra.mrb[0].mxu0 %v1081
        %v1083 = vpop.f32.mrb[0].mxu0
        %v1084 = vadd.f32 %v900, %v1083
        %v1085 = vpop.f32.mrb[0].mxu0
        %1086 = vmatprep.mubr.f32.mxu0 0.0
        %v1087 = vand.u32 %v369, 4294901760
        %v1088 = vsub.f32 %v369, %v1087
        %v1089 = vand.u32 %v1088, 4294901760
        %1090 = vmatmul.mubr.f32.gmra.mrb[0].mxu0 %v1089
        %v1091 = vpop.f32.mrb[0].mxu0
        %v1092 = vadd.f32 %v907, %v1091
        %v1093 = vpop.f32.mrb[0].mxu0
        %1094 = vmatprep.mubr.f32.mxu0 0.0
        %v1095 = vand.u32 %v372, 4294901760
        %v1096 = vsub.f32 %v372, %v1095
        %v1097 = vand.u32 %v1096, 4294901760
        %1098 = vmatmul.mubr.f32.gmra.mrb[0].mxu0 %v1097
        %v1099 = vpop.f32.mrb[0].mxu0
        %v1100 = vadd.f32 %v914, %v1099
        %v1101 = vpop.f32.mrb[0].mxu0
        %1102 = vmatprep.mubr.f32.mxu0 0.0
        %v1103 = vand.u32 %v375, 4294901760
        %v1104 = vsub.f32 %v375, %v1103
        %v1105 = vand.u32 %v1104, 4294901760
        %1106 = vmatmul.mubr.f32.gmra.mrb[0].mxu0 %v1105
        %v1107 = vpop.f32.mrb[0].mxu0
        %v1108 = vadd.f32 %v921, %v1107
        %v1109 = vpop.f32.mrb[0].mxu0
        %1110 = vmatprep.mubr.f32.mxu0 0.0
        %v1111 = vand.u32 %v378, 4294901760
        %v1112 = vsub.f32 %v378, %v1111
        %v1113 = vand.u32 %v1112, 4294901760
        %1114 = vmatmul.mubr.f32.gmra.mrb[0].mxu0 %v1113
        %v1115 = vpop.f32.mrb[0].mxu0
        %v1116 = vadd.f32 %v928, %v1115
        %v1117 = vpop.f32.mrb[0].mxu0
        %1118 = vmatprep.mubr.f32.mxu0 0.0
        %v1119 = vand.u32 %v381, 4294901760
        %v1120 = vsub.f32 %v381, %v1119
        %v1121 = vand.u32 %v1120, 4294901760
        %1122 = vmatmul.mubr.f32.gmra.mrb[0].mxu0 %v1121
        %v1123 = vpop.f32.mrb[0].mxu0
        %v1124 = vadd.f32 %v935, %v1123
        %v1125 = vpop.f32.mrb[0].mxu0
        %1126 = vmatprep.mubr.f32.mxu0 0.0
        %v1127 = vand.u32 %v384, 4294901760
        %v1128 = vsub.f32 %v384, %v1127
        %v1129 = vand.u32 %v1128, 4294901760
        %1130 = vmatmul.mubr.f32.gmra.mrb[0].mxu0 %v1129
        %v1131 = vpop.f32.mrb[0].mxu0
        %v1132 = vadd.f32 %v942, %v1131
        %v1133 = vpop.f32.mrb[0].mxu0
        %1134 = vmatprep.mubr.f32.mxu0 0.0
        %v1135 = vand.u32 %v387, 4294901760
        %v1136 = vsub.f32 %v387, %v1135
        %v1137 = vand.u32 %v1136, 4294901760
        %1138 = vmatmul.mubr.f32.gmra.mrb[0].mxu0 %v1137
        %v1139 = vpop.f32.mrb[0].mxu0
        %v1140 = vadd.f32 %v949, %v1139
        %v1141 = vpop.f32.mrb[0].mxu0
        %1142 = vmatprep.mubr.f32.mxu0 0.0
        %v1143 = vand.u32 %v390, 4294901760
        %v1144 = vsub.f32 %v390, %v1143
        %v1145 = vand.u32 %v1144, 4294901760
        %1146 = vmatmul.mubr.f32.gmra.mrb[0].mxu0 %v1145
        %v1147 = vpop.f32.mrb[0].mxu0
        %v1148 = vadd.f32 %v956, %v1147
        %v1149 = vpop.f32.mrb[0].mxu0
        %1150 = vmatprep.mubr.f32.mxu0 0.0
        %v1151 = vand.u32 %v393, 4294901760
        %v1152 = vsub.f32 %v393, %v1151
        %v1153 = vand.u32 %v1152, 4294901760
        %1154 = vmatmul.mubr.f32.gmra.mrb[0].mxu0 %v1153
        %v1155 = vpop.f32.mrb[0].mxu0
        %v1156 = vadd.f32 %v963, %v1155
        %v1157 = vpop.f32.mrb[0].mxu0
        %1158 = vmatprep.mubr.f32.mxu0 0.0
        %v1159 = vand.u32 %v396, 4294901760
        %v1160 = vsub.f32 %v396, %v1159
        %v1161 = vand.u32 %v1160, 4294901760
        %1162 = vmatmul.mubr.f32.gmra.mrb[0].mxu0 %v1161
        %v1163 = vpop.f32.mrb[0].mxu0
        %v1164 = vadd.f32 %v970, %v1163
        %v1165 = vpop.f32.mrb[0].mxu0
        %1166 = vdwg.mxu0
        %1167 = vmatprep.subr.mxu0 0.0
        %v1168 = vand.u32 %v400, 4294901760
        %v1169 = vsub.f32 %v400, %v1168
        %v1170 = vand.u32 %v1169, 4294901760
        %1171 = vmatpush1.msra.mxu0 %v1170
        %1172 = vmatprep.subr.mxu0 0.0
        %1173 = vmatpush1.msra.mxu0 0.0
        %1174 = vmatprep.subr.mxu0 0.0
        %1175 = vmatpush1.msra.mxu0 0.0
        %1176 = vmatprep.subr.mxu0 0.0
        %1177 = vmatpush1.msra.mxu0 0.0
        %1178 = vmatprep.subr.mxu0 0.0
        %1179 = vmatpush1.msra.mxu0 0.0
        %1180 = vmatprep.subr.mxu0 0.0
        %1181 = vmatpush1.msra.mxu0 0.0
        %1182 = vmatprep.subr.mxu0 0.0
        %1183 = vmatpush1.msra.mxu0 0.0
        %1184 = vmatprep.subr.mxu0 0.0
        %1185 = vmatpush1.msra.mxu0 0.0
        %1186 = vmatprep.subr.mxu0 0.0
        %1187 = vmatpush1.msra.mxu0 0.0
        %1188 = vmatprep.subr.mxu0 0.0
        %1189 = vmatpush1.msra.mxu0 0.0
        %1190 = vmatprep.subr.mxu0 0.0
        %1191 = vmatpush1.msra.mxu0 0.0
        %1192 = vmatprep.subr.mxu0 0.0
        %1193 = vmatpush1.msra.mxu0 0.0
        %1194 = vmatprep.subr.mxu0 0.0
        %1195 = vmatpush1.msra.mxu0 0.0
        %1196 = vmatprep.subr.mxu0 0.0
        %1197 = vmatpush1.msra.mxu0 0.0
        %1198 = vmatprep.subr.mxu0 0.0
        %1199 = vmatpush1.msra.mxu0 0.0
        %1200 = vmatprep.subr.mxu0 0.0
        %1201 = vmatpush1.msra.mxu0 0.0
        %1202 = vmatprep.subr.mxu0 0.0
        %1203 = vmatpush1.msra.mxu0 0.0
        %1204 = vmatprep.subr.mxu0 0.0
        %1205 = vmatpush1.msra.mxu0 0.0
        %1206 = vmatprep.subr.mxu0 0.0
        %1207 = vmatpush1.msra.mxu0 0.0
        %1208 = vmatprep.subr.mxu0 0.0
        %1209 = vmatpush1.msra.mxu0 0.0
        %1210 = vmatprep.subr.mxu0 0.0
        %1211 = vmatpush1.msra.mxu0 0.0
        %1212 = vmatprep.subr.mxu0 0.0
        %1213 = vmatpush1.msra.mxu0 0.0
        %1214 = vmatprep.subr.mxu0 0.0
        %1215 = vmatpush1.msra.mxu0 0.0
        %1216 = vmatprep.subr.mxu0 0.0
        %1217 = vmatpush1.msra.mxu0 0.0
        %1218 = vmatprep.subr.mxu0 0.0
        %1219 = vmatpush1.msra.mxu0 0.0
        %1220 = vmatprep.subr.mxu0 0.0
        %1221 = vmatpush1.msra.mxu0 0.0
        %1222 = vmatprep.subr.mxu0 0.0
        %1223 = vmatpush1.msra.mxu0 0.0
        %1224 = vmatprep.subr.mxu0 0.0
        %1225 = vmatpush1.msra.mxu0 0.0
        %1226 = vmatprep.subr.mxu0 0.0
        %1227 = vmatpush1.msra.mxu0 0.0
        %1228 = vmatprep.subr.mxu0 0.0
        %1229 = vmatpush1.msra.mxu0 0.0
        %1230 = vmatprep.subr.mxu0 0.0
        %1231 = vmatpush1.msra.mxu0 0.0
        %1232 = vmatprep.subr.mxu0 0.0
        %1233 = vmatpush1.msra.mxu0 0.0
        %1234 = vmatprep.mubr.f32.mxu0 0.0
        %v1235 = vand.u32 %v351, 4294901760
        %1236 = vmatmul.mubr.f32.gmra.mrb[0].mxu0 %v1235
        %v1237 = vpop.f32.mrb[0].mxu0
        %v1238 = vadd.f32 %v1044, %v1237
        %v1239 = vpop.f32.mrb[0].mxu0
        %1240 = vmatprep.mubr.f32.mxu0 0.0
        %v1241 = vand.u32 %v354, 4294901760
        %1242 = vmatmul.mubr.f32.gmra.mrb[0].mxu0 %v1241
        %v1243 = vpop.f32.mrb[0].mxu0
        %v1244 = vadd.f32 %v1052, %v1243
        %v1245 = vpop.f32.mrb[0].mxu0
        %1246 = vmatprep.mubr.f32.mxu0 0.0
        %v1247 = vand.u32 %v357, 4294901760
        %1248 = vmatmul.mubr.f32.gmra.mrb[0].mxu0 %v1247
        %v1249 = vpop.f32.mrb[0].mxu0
        %v1250 = vadd.f32 %v1060, %v1249
        %v1251 = vpop.f32.mrb[0].mxu0
        %1252 = vmatprep.mubr.f32.mxu0 0.0
        %v1253 = vand.u32 %v360, 4294901760
        %1254 = vmatmul.mubr.f32.gmra.mrb[0].mxu0 %v1253
        %v1255 = vpop.f32.mrb[0].mxu0
        %v1256 = vadd.f32 %v1068, %v1255
        %v1257 = vpop.f32.mrb[0].mxu0
        %1258 = vmatprep.mubr.f32.mxu0 0.0
        %v1259 = vand.u32 %v363, 4294901760
        %1260 = vmatmul.mubr.f32.gmra.mrb[0].mxu0 %v1259
        %v1261 = vpop.f32.mrb[0].mxu0
        %v1262 = vadd.f32 %v1076, %v1261
        %v1263 = vpop.f32.mrb[0].mxu0
        %1264 = vmatprep.mubr.f32.mxu0 0.0
        %v1265 = vand.u32 %v366, 4294901760
        %1266 = vmatmul.mubr.f32.gmra.mrb[0].mxu0 %v1265
        %v1267 = vpop.f32.mrb[0].mxu0
        %v1268 = vadd.f32 %v1084, %v1267
        %v1269 = vpop.f32.mrb[0].mxu0
        %1270 = vmatprep.mubr.f32.mxu0 0.0
        %v1271 = vand.u32 %v369, 4294901760
        %1272 = vmatmul.mubr.f32.gmra.mrb[0].mxu0 %v1271
        %v1273 = vpop.f32.mrb[0].mxu0
        %v1274 = vadd.f32 %v1092, %v1273
        %v1275 = vpop.f32.mrb[0].mxu0
        %1276 = vmatprep.mubr.f32.mxu0 0.0
        %v1277 = vand.u32 %v372, 4294901760
        %1278 = vmatmul.mubr.f32.gmra.mrb[0].mxu0 %v1277
        %v1279 = vpop.f32.mrb[0].mxu0
        %v1280 = vadd.f32 %v1100, %v1279
        %v1281 = vpop.f32.mrb[0].mxu0
        %1282 = vmatprep.mubr.f32.mxu0 0.0
        %v1283 = vand.u32 %v375, 4294901760
        %1284 = vmatmul.mubr.f32.gmra.mrb[0].mxu0 %v1283
        %v1285 = vpop.f32.mrb[0].mxu0
        %v1286 = vadd.f32 %v1108, %v1285
        %v1287 = vpop.f32.mrb[0].mxu0
        %1288 = vmatprep.mubr.f32.mxu0 0.0
        %v1289 = vand.u32 %v378, 4294901760
        %1290 = vmatmul.mubr.f32.gmra.mrb[0].mxu0 %v1289
        %v1291 = vpop.f32.mrb[0].mxu0
        %v1292 = vadd.f32 %v1116, %v1291
        %v1293 = vpop.f32.mrb[0].mxu0
        %1294 = vmatprep.mubr.f32.mxu0 0.0
        %v1295 = vand.u32 %v381, 4294901760
        %1296 = vmatmul.mubr.f32.gmra.mrb[0].mxu0 %v1295
        %v1297 = vpop.f32.mrb[0].mxu0
        %v1298 = vadd.f32 %v1124, %v1297
        %v1299 = vpop.f32.mrb[0].mxu0
        %1300 = vmatprep.mubr.f32.mxu0 0.0
        %v1301 = vand.u32 %v384, 4294901760
        %1302 = vmatmul.mubr.f32.gmra.mrb[0].mxu0 %v1301
        %v1303 = vpop.f32.mrb[0].mxu0
        %v1304 = vadd.f32 %v1132, %v1303
        %v1305 = vpop.f32.mrb[0].mxu0
        %1306 = vmatprep.mubr.f32.mxu0 0.0
        %v1307 = vand.u32 %v387, 4294901760
        %1308 = vmatmul.mubr.f32.gmra.mrb[0].mxu0 %v1307
        %v1309 = vpop.f32.mrb[0].mxu0
        %v1310 = vadd.f32 %v1140, %v1309
        %v1311 = vpop.f32.mrb[0].mxu0
        %1312 = vmatprep.mubr.f32.mxu0 0.0
        %v1313 = vand.u32 %v390, 4294901760
        %1314 = vmatmul.mubr.f32.gmra.mrb[0].mxu0 %v1313
        %v1315 = vpop.f32.mrb[0].mxu0
        %v1316 = vadd.f32 %v1148, %v1315
        %v1317 = vpop.f32.mrb[0].mxu0
        %1318 = vmatprep.mubr.f32.mxu0 0.0
        %v1319 = vand.u32 %v393, 4294901760
        %1320 = vmatmul.mubr.f32.gmra.mrb[0].mxu0 %v1319
        %v1321 = vpop.f32.mrb[0].mxu0
        %v1322 = vadd.f32 %v1156, %v1321
        %v1323 = vpop.f32.mrb[0].mxu0
        %1324 = vmatprep.mubr.f32.mxu0 0.0
        %v1325 = vand.u32 %v396, 4294901760
        %1326 = vmatmul.mubr.f32.gmra.mrb[0].mxu0 %v1325
        %v1327 = vpop.f32.mrb[0].mxu0
        %v1328 = vadd.f32 %v1164, %v1327
        %v1329 = vpop.f32.mrb[0].mxu0
        %1330 = vdwg.mxu0
        %1331 = vmatprep.subr.mxu0 0.0
        %v1332 = vand.u32 %v400, 4294901760
        %1333 = vmatpush1.msra.mxu0 %v1332
        %1334 = vmatprep.subr.mxu0 0.0
        %1335 = vmatpush1.msra.mxu0 0.0
        %1336 = vmatprep.subr.mxu0 0.0
        %1337 = vmatpush1.msra.mxu0 0.0
        %1338 = vmatprep.subr.mxu0 0.0
        %1339 = vmatpush1.msra.mxu0 0.0
        %1340 = vmatprep.subr.mxu0 0.0
        %1341 = vmatpush1.msra.mxu0 0.0
        %1342 = vmatprep.subr.mxu0 0.0
        %1343 = vmatpush1.msra.mxu0 0.0
        %1344 = vmatprep.subr.mxu0 0.0
        %1345 = vmatpush1.msra.mxu0 0.0
        %1346 = vmatprep.subr.mxu0 0.0
        %1347 = vmatpush1.msra.mxu0 0.0
        %1348 = vmatprep.subr.mxu0 0.0
        %1349 = vmatpush1.msra.mxu0 0.0
        %1350 = vmatprep.subr.mxu0 0.0
        %1351 = vmatpush1.msra.mxu0 0.0
        %1352 = vmatprep.subr.mxu0 0.0
        %1353 = vmatpush1.msra.mxu0 0.0
        %1354 = vmatprep.subr.mxu0 0.0
        %1355 = vmatpush1.msra.mxu0 0.0
        %1356 = vmatprep.subr.mxu0 0.0
        %1357 = vmatpush1.msra.mxu0 0.0
        %1358 = vmatprep.subr.mxu0 0.0
        %1359 = vmatpush1.msra.mxu0 0.0
        %1360 = vmatprep.subr.mxu0 0.0
        %1361 = vmatpush1.msra.mxu0 0.0
        %1362 = vmatprep.subr.mxu0 0.0
        %1363 = vmatpush1.msra.mxu0 0.0
        %1364 = vmatprep.subr.mxu0 0.0
        %1365 = vmatpush1.msra.mxu0 0.0
        %1366 = vmatprep.subr.mxu0 0.0
        %1367 = vmatpush1.msra.mxu0 0.0
        %1368 = vmatprep.subr.mxu0 0.0
        %1369 = vmatpush1.msra.mxu0 0.0
        %1370 = vmatprep.subr.mxu0 0.0
        %1371 = vmatpush1.msra.mxu0 0.0
        %1372 = vmatprep.subr.mxu0 0.0
        %1373 = vmatpush1.msra.mxu0 0.0
        %1374 = vmatprep.subr.mxu0 0.0
        %1375 = vmatpush1.msra.mxu0 0.0
        %1376 = vmatprep.subr.mxu0 0.0
        %1377 = vmatpush1.msra.mxu0 0.0
        %1378 = vmatprep.subr.mxu0 0.0
        %1379 = vmatpush1.msra.mxu0 0.0
        %1380 = vmatprep.subr.mxu0 0.0
        %1381 = vmatpush1.msra.mxu0 0.0
        %1382 = vmatprep.subr.mxu0 0.0
        %1383 = vmatpush1.msra.mxu0 0.0
        %1384 = vmatprep.subr.mxu0 0.0
        %1385 = vmatpush1.msra.mxu0 0.0
        %1386 = vmatprep.subr.mxu0 0.0
        %1387 = vmatpush1.msra.mxu0 0.0
        %1388 = vmatprep.subr.mxu0 0.0
        %1389 = vmatpush1.msra.mxu0 0.0
        %1390 = vmatprep.subr.mxu0 0.0
        %1391 = vmatpush1.msra.mxu0 0.0
        %1392 = vmatprep.subr.mxu0 0.0
        %1393 = vmatpush1.msra.mxu0 0.0
        %1394 = vmatprep.subr.mxu0 0.0
        %1395 = vmatpush1.msra.mxu0 0.0
        %1396 = vmatprep.mubr.f32.mxu0 0.0
        %v1397 = vand.u32 %v351, 4294901760
        %1398 = vmatmul.mubr.f32.gmra.mrb[0].mxu0 %v1397
        %v1399 = vpop.f32.mrb[0].mxu0
        %v1400 = vadd.f32 %v1238, %v1399
        %v1401 = vpop.f32.mrb[0].mxu0
        %1402 = vmatprep.mubr.f32.mxu0 0.0
        %v1403 = vand.u32 %v354, 4294901760
        %1404 = vmatmul.mubr.f32.gmra.mrb[0].mxu0 %v1403
        %v1405 = vpop.f32.mrb[0].mxu0
        %v1406 = vadd.f32 %v1244, %v1405
        %v1407 = vpop.f32.mrb[0].mxu0
        %1408 = vmatprep.mubr.f32.mxu0 0.0
        %v1409 = vand.u32 %v357, 4294901760
        %1410 = vmatmul.mubr.f32.gmra.mrb[0].mxu0 %v1409
        %v1411 = vpop.f32.mrb[0].mxu0
        %v1412 = vadd.f32 %v1250, %v1411
        %v1413 = vpop.f32.mrb[0].mxu0
        %1414 = vmatprep.mubr.f32.mxu0 0.0
        %v1415 = vand.u32 %v360, 4294901760
        %1416 = vmatmul.mubr.f32.gmra.mrb[0].mxu0 %v1415
        %v1417 = vpop.f32.mrb[0].mxu0
        %v1418 = vadd.f32 %v1256, %v1417
        %v1419 = vpop.f32.mrb[0].mxu0
        %1420 = vmatprep.mubr.f32.mxu0 0.0
        %v1421 = vand.u32 %v363, 4294901760
        %1422 = vmatmul.mubr.f32.gmra.mrb[0].mxu0 %v1421
        %v1423 = vpop.f32.mrb[0].mxu0
        %v1424 = vadd.f32 %v1262, %v1423
        %v1425 = vpop.f32.mrb[0].mxu0
        %1426 = vmatprep.mubr.f32.mxu0 0.0
        %v1427 = vand.u32 %v366, 4294901760
        %1428 = vmatmul.mubr.f32.gmra.mrb[0].mxu0 %v1427
        %v1429 = vpop.f32.mrb[0].mxu0
        %v1430 = vadd.f32 %v1268, %v1429
        %v1431 = vpop.f32.mrb[0].mxu0
        %1432 = vmatprep.mubr.f32.mxu0 0.0
        %v1433 = vand.u32 %v369, 4294901760
        %1434 = vmatmul.mubr.f32.gmra.mrb[0].mxu0 %v1433
        %v1435 = vpop.f32.mrb[0].mxu0
        %v1436 = vadd.f32 %v1274, %v1435
        %v1437 = vpop.f32.mrb[0].mxu0
        %1438 = vmatprep.mubr.f32.mxu0 0.0
        %v1439 = vand.u32 %v372, 4294901760
        %1440 = vmatmul.mubr.f32.gmra.mrb[0].mxu0 %v1439
        %v1441 = vpop.f32.mrb[0].mxu0
        %v1442 = vadd.f32 %v1280, %v1441
        %v1443 = vpop.f32.mrb[0].mxu0
        %1444 = vmatprep.mubr.f32.mxu0 0.0
        %v1445 = vand.u32 %v375, 4294901760
        %1446 = vmatmul.mubr.f32.gmra.mrb[0].mxu0 %v1445
        %v1447 = vpop.f32.mrb[0].mxu0
        %v1448 = vadd.f32 %v1286, %v1447
        %v1449 = vpop.f32.mrb[0].mxu0
        %1450 = vmatprep.mubr.f32.mxu0 0.0
        %v1451 = vand.u32 %v378, 4294901760
        %1452 = vmatmul.mubr.f32.gmra.mrb[0].mxu0 %v1451
        %v1453 = vpop.f32.mrb[0].mxu0
        %v1454 = vadd.f32 %v1292, %v1453
        %v1455 = vpop.f32.mrb[0].mxu0
        %1456 = vmatprep.mubr.f32.mxu0 0.0
        %v1457 = vand.u32 %v381, 4294901760
        %1458 = vmatmul.mubr.f32.gmra.mrb[0].mxu0 %v1457
        %v1459 = vpop.f32.mrb[0].mxu0
        %v1460 = vadd.f32 %v1298, %v1459
        %v1461 = vpop.f32.mrb[0].mxu0
        %1462 = vmatprep.mubr.f32.mxu0 0.0
        %v1463 = vand.u32 %v384, 4294901760
        %1464 = vmatmul.mubr.f32.gmra.mrb[0].mxu0 %v1463
        %v1465 = vpop.f32.mrb[0].mxu0
        %v1466 = vadd.f32 %v1304, %v1465
        %v1467 = vpop.f32.mrb[0].mxu0
        %1468 = vmatprep.mubr.f32.mxu0 0.0
        %v1469 = vand.u32 %v387, 4294901760
        %1470 = vmatmul.mubr.f32.gmra.mrb[0].mxu0 %v1469
        %v1471 = vpop.f32.mrb[0].mxu0
        %v1472 = vadd.f32 %v1310, %v1471
        %v1473 = vpop.f32.mrb[0].mxu0
        %1474 = vmatprep.mubr.f32.mxu0 0.0
        %v1475 = vand.u32 %v390, 4294901760
        %1476 = vmatmul.mubr.f32.gmra.mrb[0].mxu0 %v1475
        %v1477 = vpop.f32.mrb[0].mxu0
        %v1478 = vadd.f32 %v1316, %v1477
        %v1479 = vpop.f32.mrb[0].mxu0
        %1480 = vmatprep.mubr.f32.mxu0 0.0
        %v1481 = vand.u32 %v393, 4294901760
        %1482 = vmatmul.mubr.f32.gmra.mrb[0].mxu0 %v1481
        %v1483 = vpop.f32.mrb[0].mxu0
        %v1484 = vadd.f32 %v1322, %v1483
        %v1485 = vpop.f32.mrb[0].mxu0
        %1486 = vmatprep.mubr.f32.mxu0 0.0
        %v1487 = vand.u32 %v396, 4294901760
        %1488 = vmatmul.mubr.f32.gmra.mrb[0].mxu0 %v1487
        %v1489 = vpop.f32.mrb[0].mxu0
        %v1490 = vadd.f32 %v1328, %v1489
        %v1491 = vpop.f32.mrb[0].mxu0
        %1492 = vdwg.mxu0
        %v1494 = vsel %vm349, %v314, 0
        %v1497 = vsel %vm349, %v315, 0
        %v1500 = vsel %vm349, %v316, 0
        %v1503 = vsel %vm349, %v317, 0
        %v1506 = vsel %vm349, %v318, 0
        %v1509 = vsel %vm349, %v319, 0
        %v1512 = vsel %vm349, %v320, 0
        %v1515 = vsel %vm349, %v321, 0
        %v1518 = vsel %vm349, %v322, 0
        %v1521 = vsel %vm349, %v323, 0
        %v1524 = vsel %vm349, %v324, 0
        %v1527 = vsel %vm349, %v325, 0
        %v1530 = vsel %vm349, %v326, 0
        %v1533 = vsel %vm349, %v327, 0
        %v1536 = vsel %vm349, %v328, 0
        %v1539 = vsel %vm349, %v329, 0
        %v1542 = vsel %vm398, %v330, 0
        %1544 = vmatprep.subr.mxu0 0.0
        %v1545 = vand.u32 %v1542, 4294901760
        %1546 = vmatpush1.msra.mxu0 %v1545
        %1547 = vmatprep.subr.mxu0 0.0
        %1548 = vmatpush1.msra.mxu0 0.0
        %1549 = vmatprep.subr.mxu0 0.0
        %1550 = vmatpush1.msra.mxu0 0.0
        %1551 = vmatprep.subr.mxu0 0.0
        %1552 = vmatpush1.msra.mxu0 0.0
        %1553 = vmatprep.subr.mxu0 0.0
        %1554 = vmatpush1.msra.mxu0 0.0
        %1555 = vmatprep.subr.mxu0 0.0
        %1556 = vmatpush1.msra.mxu0 0.0
        %1557 = vmatprep.subr.mxu0 0.0
        %1558 = vmatpush1.msra.mxu0 0.0
        %1559 = vmatprep.subr.mxu0 0.0
        %1560 = vmatpush1.msra.mxu0 0.0
        %1561 = vmatprep.subr.mxu0 0.0
        %1562 = vmatpush1.msra.mxu0 0.0
        %1563 = vmatprep.subr.mxu0 0.0
        %1564 = vmatpush1.msra.mxu0 0.0
        %1565 = vmatprep.subr.mxu0 0.0
        %1566 = vmatpush1.msra.mxu0 0.0
        %1567 = vmatprep.subr.mxu0 0.0
        %1568 = vmatpush1.msra.mxu0 0.0
        %1569 = vmatprep.subr.mxu0 0.0
        %1570 = vmatpush1.msra.mxu0 0.0
        %1571 = vmatprep.subr.mxu0 0.0
        %1572 = vmatpush1.msra.mxu0 0.0
        %1573 = vmatprep.subr.mxu0 0.0
        %1574 = vmatpush1.msra.mxu0 0.0
        %1575 = vmatprep.subr.mxu0 0.0
        %1576 = vmatpush1.msra.mxu0 0.0
        %1577 = vmatprep.subr.mxu0 0.0
        %1578 = vmatpush1.msra.mxu0 0.0
        %1579 = vmatprep.subr.mxu0 0.0
        %1580 = vmatpush1.msra.mxu0 0.0
        %1581 = vmatprep.subr.mxu0 0.0
        %1582 = vmatpush1.msra.mxu0 0.0
        %1583 = vmatprep.subr.mxu0 0.0
        %1584 = vmatpush1.msra.mxu0 0.0
        %1585 = vmatprep.subr.mxu0 0.0
        %1586 = vmatpush1.msra.mxu0 0.0
        %1587 = vmatprep.subr.mxu0 0.0
        %1588 = vmatpush1.msra.mxu0 0.0
        %1589 = vmatprep.subr.mxu0 0.0
        %1590 = vmatpush1.msra.mxu0 0.0
        %1591 = vmatprep.subr.mxu0 0.0
        %1592 = vmatpush1.msra.mxu0 0.0
        %1593 = vmatprep.subr.mxu0 0.0
        %1594 = vmatpush1.msra.mxu0 0.0
        %1595 = vmatprep.subr.mxu0 0.0
        %1596 = vmatpush1.msra.mxu0 0.0
        %1597 = vmatprep.subr.mxu0 0.0
        %1598 = vmatpush1.msra.mxu0 0.0
        %1599 = vmatprep.subr.mxu0 0.0
        %1600 = vmatpush1.msra.mxu0 0.0
        %1601 = vmatprep.subr.mxu0 0.0
        %1602 = vmatpush1.msra.mxu0 0.0
        %1603 = vmatprep.subr.mxu0 0.0
        %1604 = vmatpush1.msra.mxu0 0.0
        %1605 = vmatprep.subr.mxu0 0.0
        %1606 = vmatpush1.msra.mxu0 0.0
        %1607 = vmatprep.subr.mxu0 0.0
        %1608 = vmatpush1.msra.mxu0 0.0
        %1609 = vmatprep.mubr.f32.mxu0 0.0
        %v1610 = vand.u32 %v1494, 4294901760
        %v1611 = vsub.f32 %v1494, %v1610
        %v1612 = vand.u32 %v1611, 4294901760
        %v1613 = vsub.f32 %v1611, %v1612
        %v1614 = vand.u32 %v1613, 4294901760
        %1615 = vmatmul.mubr.f32.gmra.mrb[0].mxu0 %v1614
        %v1616 = vpop.f32.mrb[0].mxu0
        %v1617 = vadd.f32 %v1400, %v1616
        %v1618 = vpop.f32.mrb[0].mxu0
        %1619 = vmatprep.mubr.f32.mxu0 0.0
        %v1620 = vand.u32 %v1497, 4294901760
        %v1621 = vsub.f32 %v1497, %v1620
        %v1622 = vand.u32 %v1621, 4294901760
        %v1623 = vsub.f32 %v1621, %v1622
        %v1624 = vand.u32 %v1623, 4294901760
        %1625 = vmatmul.mubr.f32.gmra.mrb[0].mxu0 %v1624
        %v1626 = vpop.f32.mrb[0].mxu0
        %v1627 = vadd.f32 %v1406, %v1626
        %v1628 = vpop.f32.mrb[0].mxu0
        %1629 = vmatprep.mubr.f32.mxu0 0.0
        %v1630 = vand.u32 %v1500, 4294901760
        %v1631 = vsub.f32 %v1500, %v1630
        %v1632 = vand.u32 %v1631, 4294901760
        %v1633 = vsub.f32 %v1631, %v1632
        %v1634 = vand.u32 %v1633, 4294901760
        %1635 = vmatmul.mubr.f32.gmra.mrb[0].mxu0 %v1634
        %v1636 = vpop.f32.mrb[0].mxu0
        %v1637 = vadd.f32 %v1412, %v1636
        %v1638 = vpop.f32.mrb[0].mxu0
        %1639 = vmatprep.mubr.f32.mxu0 0.0
        %v1640 = vand.u32 %v1503, 4294901760
        %v1641 = vsub.f32 %v1503, %v1640
        %v1642 = vand.u32 %v1641, 4294901760
        %v1643 = vsub.f32 %v1641, %v1642
        %v1644 = vand.u32 %v1643, 4294901760
        %1645 = vmatmul.mubr.f32.gmra.mrb[0].mxu0 %v1644
        %v1646 = vpop.f32.mrb[0].mxu0
        %v1647 = vadd.f32 %v1418, %v1646
        %v1648 = vpop.f32.mrb[0].mxu0
        %1649 = vmatprep.mubr.f32.mxu0 0.0
        %v1650 = vand.u32 %v1506, 4294901760
        %v1651 = vsub.f32 %v1506, %v1650
        %v1652 = vand.u32 %v1651, 4294901760
        %v1653 = vsub.f32 %v1651, %v1652
        %v1654 = vand.u32 %v1653, 4294901760
        %1655 = vmatmul.mubr.f32.gmra.mrb[0].mxu0 %v1654
        %v1656 = vpop.f32.mrb[0].mxu0
        %v1657 = vadd.f32 %v1424, %v1656
        %v1658 = vpop.f32.mrb[0].mxu0
        %1659 = vmatprep.mubr.f32.mxu0 0.0
        %v1660 = vand.u32 %v1509, 4294901760
        %v1661 = vsub.f32 %v1509, %v1660
        %v1662 = vand.u32 %v1661, 4294901760
        %v1663 = vsub.f32 %v1661, %v1662
        %v1664 = vand.u32 %v1663, 4294901760
        %1665 = vmatmul.mubr.f32.gmra.mrb[0].mxu0 %v1664
        %v1666 = vpop.f32.mrb[0].mxu0
        %v1667 = vadd.f32 %v1430, %v1666
        %v1668 = vpop.f32.mrb[0].mxu0
        %1669 = vmatprep.mubr.f32.mxu0 0.0
        %v1670 = vand.u32 %v1512, 4294901760
        %v1671 = vsub.f32 %v1512, %v1670
        %v1672 = vand.u32 %v1671, 4294901760
        %v1673 = vsub.f32 %v1671, %v1672
        %v1674 = vand.u32 %v1673, 4294901760
        %1675 = vmatmul.mubr.f32.gmra.mrb[0].mxu0 %v1674
        %v1676 = vpop.f32.mrb[0].mxu0
        %v1677 = vadd.f32 %v1436, %v1676
        %v1678 = vpop.f32.mrb[0].mxu0
        %1679 = vmatprep.mubr.f32.mxu0 0.0
        %v1680 = vand.u32 %v1515, 4294901760
        %v1681 = vsub.f32 %v1515, %v1680
        %v1682 = vand.u32 %v1681, 4294901760
        %v1683 = vsub.f32 %v1681, %v1682
        %v1684 = vand.u32 %v1683, 4294901760
        %1685 = vmatmul.mubr.f32.gmra.mrb[0].mxu0 %v1684
        %v1686 = vpop.f32.mrb[0].mxu0
        %v1687 = vadd.f32 %v1442, %v1686
        %v1688 = vpop.f32.mrb[0].mxu0
        %1689 = vmatprep.mubr.f32.mxu0 0.0
        %v1690 = vand.u32 %v1518, 4294901760
        %v1691 = vsub.f32 %v1518, %v1690
        %v1692 = vand.u32 %v1691, 4294901760
        %v1693 = vsub.f32 %v1691, %v1692
        %v1694 = vand.u32 %v1693, 4294901760
        %1695 = vmatmul.mubr.f32.gmra.mrb[0].mxu0 %v1694
        %v1696 = vpop.f32.mrb[0].mxu0
        %v1697 = vadd.f32 %v1448, %v1696
        %v1698 = vpop.f32.mrb[0].mxu0
        %1699 = vmatprep.mubr.f32.mxu0 0.0
        %v1700 = vand.u32 %v1521, 4294901760
        %v1701 = vsub.f32 %v1521, %v1700
        %v1702 = vand.u32 %v1701, 4294901760
        %v1703 = vsub.f32 %v1701, %v1702
        %v1704 = vand.u32 %v1703, 4294901760
        %1705 = vmatmul.mubr.f32.gmra.mrb[0].mxu0 %v1704
        %v1706 = vpop.f32.mrb[0].mxu0
        %v1707 = vadd.f32 %v1454, %v1706
        %v1708 = vpop.f32.mrb[0].mxu0
        %1709 = vmatprep.mubr.f32.mxu0 0.0
        %v1710 = vand.u32 %v1524, 4294901760
        %v1711 = vsub.f32 %v1524, %v1710
        %v1712 = vand.u32 %v1711, 4294901760
        %v1713 = vsub.f32 %v1711, %v1712
        %v1714 = vand.u32 %v1713, 4294901760
        %1715 = vmatmul.mubr.f32.gmra.mrb[0].mxu0 %v1714
        %v1716 = vpop.f32.mrb[0].mxu0
        %v1717 = vadd.f32 %v1460, %v1716
        %v1718 = vpop.f32.mrb[0].mxu0
        %1719 = vmatprep.mubr.f32.mxu0 0.0
        %v1720 = vand.u32 %v1527, 4294901760
        %v1721 = vsub.f32 %v1527, %v1720
        %v1722 = vand.u32 %v1721, 4294901760
        %v1723 = vsub.f32 %v1721, %v1722
        %v1724 = vand.u32 %v1723, 4294901760
        %1725 = vmatmul.mubr.f32.gmra.mrb[0].mxu0 %v1724
        %v1726 = vpop.f32.mrb[0].mxu0
        %v1727 = vadd.f32 %v1466, %v1726
        %v1728 = vpop.f32.mrb[0].mxu0
        %1729 = vmatprep.mubr.f32.mxu0 0.0
        %v1730 = vand.u32 %v1530, 4294901760
        %v1731 = vsub.f32 %v1530, %v1730
        %v1732 = vand.u32 %v1731, 4294901760
        %v1733 = vsub.f32 %v1731, %v1732
        %v1734 = vand.u32 %v1733, 4294901760
        %1735 = vmatmul.mubr.f32.gmra.mrb[0].mxu0 %v1734
        %v1736 = vpop.f32.mrb[0].mxu0
        %v1737 = vadd.f32 %v1472, %v1736
        %v1738 = vpop.f32.mrb[0].mxu0
        %1739 = vmatprep.mubr.f32.mxu0 0.0
        %v1740 = vand.u32 %v1533, 4294901760
        %v1741 = vsub.f32 %v1533, %v1740
        %v1742 = vand.u32 %v1741, 4294901760
        %v1743 = vsub.f32 %v1741, %v1742
        %v1744 = vand.u32 %v1743, 4294901760
        %1745 = vmatmul.mubr.f32.gmra.mrb[0].mxu0 %v1744
        %v1746 = vpop.f32.mrb[0].mxu0
        %v1747 = vadd.f32 %v1478, %v1746
        %v1748 = vpop.f32.mrb[0].mxu0
        %1749 = vmatprep.mubr.f32.mxu0 0.0
        %v1750 = vand.u32 %v1536, 4294901760
        %v1751 = vsub.f32 %v1536, %v1750
        %v1752 = vand.u32 %v1751, 4294901760
        %v1753 = vsub.f32 %v1751, %v1752
        %v1754 = vand.u32 %v1753, 4294901760
        %1755 = vmatmul.mubr.f32.gmra.mrb[0].mxu0 %v1754
        %v1756 = vpop.f32.mrb[0].mxu0
        %v1757 = vadd.f32 %v1484, %v1756
        %v1758 = vpop.f32.mrb[0].mxu0
        %1759 = vmatprep.mubr.f32.mxu0 0.0
        %v1760 = vand.u32 %v1539, 4294901760
        %v1761 = vsub.f32 %v1539, %v1760
        %v1762 = vand.u32 %v1761, 4294901760
        %v1763 = vsub.f32 %v1761, %v1762
        %v1764 = vand.u32 %v1763, 4294901760
        %1765 = vmatmul.mubr.f32.gmra.mrb[0].mxu0 %v1764
        %v1766 = vpop.f32.mrb[0].mxu0
        %v1767 = vadd.f32 %v1490, %v1766
        %v1768 = vpop.f32.mrb[0].mxu0
        %1769 = vdwg.mxu0
        %1770 = vmatprep.subr.mxu0 0.0
        %v1771 = vand.u32 %v1542, 4294901760
        %v1772 = vsub.f32 %v1542, %v1771
        %v1773 = vand.u32 %v1772, 4294901760
        %v1774 = vsub.f32 %v1772, %v1773
        %v1775 = vand.u32 %v1774, 4294901760
        %1776 = vmatpush1.msra.mxu0 %v1775
        %1777 = vmatprep.subr.mxu0 0.0
        %1778 = vmatpush1.msra.mxu0 0.0
        %1779 = vmatprep.subr.mxu0 0.0
        %1780 = vmatpush1.msra.mxu0 0.0
        %1781 = vmatprep.subr.mxu0 0.0
        %1782 = vmatpush1.msra.mxu0 0.0
        %1783 = vmatprep.subr.mxu0 0.0
        %1784 = vmatpush1.msra.mxu0 0.0
        %1785 = vmatprep.subr.mxu0 0.0
        %1786 = vmatpush1.msra.mxu0 0.0
        %1787 = vmatprep.subr.mxu0 0.0
        %1788 = vmatpush1.msra.mxu0 0.0
        %1789 = vmatprep.subr.mxu0 0.0
        %1790 = vmatpush1.msra.mxu0 0.0
        %1791 = vmatprep.subr.mxu0 0.0
        %1792 = vmatpush1.msra.mxu0 0.0
        %1793 = vmatprep.subr.mxu0 0.0
        %1794 = vmatpush1.msra.mxu0 0.0
        %1795 = vmatprep.subr.mxu0 0.0
        %1796 = vmatpush1.msra.mxu0 0.0
        %1797 = vmatprep.subr.mxu0 0.0
        %1798 = vmatpush1.msra.mxu0 0.0
        %1799 = vmatprep.subr.mxu0 0.0
        %1800 = vmatpush1.msra.mxu0 0.0
        %1801 = vmatprep.subr.mxu0 0.0
        %1802 = vmatpush1.msra.mxu0 0.0
        %1803 = vmatprep.subr.mxu0 0.0
        %1804 = vmatpush1.msra.mxu0 0.0
        %1805 = vmatprep.subr.mxu0 0.0
        %1806 = vmatpush1.msra.mxu0 0.0
        %1807 = vmatprep.subr.mxu0 0.0
        %1808 = vmatpush1.msra.mxu0 0.0
        %1809 = vmatprep.subr.mxu0 0.0
        %1810 = vmatpush1.msra.mxu0 0.0
        %1811 = vmatprep.subr.mxu0 0.0
        %1812 = vmatpush1.msra.mxu0 0.0
        %1813 = vmatprep.subr.mxu0 0.0
        %1814 = vmatpush1.msra.mxu0 0.0
        %1815 = vmatprep.subr.mxu0 0.0
        %1816 = vmatpush1.msra.mxu0 0.0
        %1817 = vmatprep.subr.mxu0 0.0
        %1818 = vmatpush1.msra.mxu0 0.0
        %1819 = vmatprep.subr.mxu0 0.0
        %1820 = vmatpush1.msra.mxu0 0.0
        %1821 = vmatprep.subr.mxu0 0.0
        %1822 = vmatpush1.msra.mxu0 0.0
        %1823 = vmatprep.subr.mxu0 0.0
        %1824 = vmatpush1.msra.mxu0 0.0
        %1825 = vmatprep.subr.mxu0 0.0
        %1826 = vmatpush1.msra.mxu0 0.0
        %1827 = vmatprep.subr.mxu0 0.0
        %1828 = vmatpush1.msra.mxu0 0.0
        %1829 = vmatprep.subr.mxu0 0.0
        %1830 = vmatpush1.msra.mxu0 0.0
        %1831 = vmatprep.subr.mxu0 0.0
        %1832 = vmatpush1.msra.mxu0 0.0
        %1833 = vmatprep.subr.mxu0 0.0
        %1834 = vmatpush1.msra.mxu0 0.0
        %1835 = vmatprep.subr.mxu0 0.0
        %1836 = vmatpush1.msra.mxu0 0.0
        %1837 = vmatprep.subr.mxu0 0.0
        %1838 = vmatpush1.msra.mxu0 0.0
        %1839 = vmatprep.mubr.f32.mxu0 0.0
        %v1840 = vand.u32 %v1494, 4294901760
        %1841 = vmatmul.mubr.f32.gmra.mrb[0].mxu0 %v1840
        %v1842 = vpop.f32.mrb[0].mxu0
        %v1843 = vadd.f32 %v1617, %v1842
        %v1844 = vpop.f32.mrb[0].mxu0
        %1845 = vmatprep.mubr.f32.mxu0 0.0
        %v1846 = vand.u32 %v1497, 4294901760
        %1847 = vmatmul.mubr.f32.gmra.mrb[0].mxu0 %v1846
        %v1848 = vpop.f32.mrb[0].mxu0
        %v1849 = vadd.f32 %v1627, %v1848
        %v1850 = vpop.f32.mrb[0].mxu0
        %1851 = vmatprep.mubr.f32.mxu0 0.0
        %v1852 = vand.u32 %v1500, 4294901760
        %1853 = vmatmul.mubr.f32.gmra.mrb[0].mxu0 %v1852
        %v1854 = vpop.f32.mrb[0].mxu0
        %v1855 = vadd.f32 %v1637, %v1854
        %v1856 = vpop.f32.mrb[0].mxu0
        %1857 = vmatprep.mubr.f32.mxu0 0.0
        %v1858 = vand.u32 %v1503, 4294901760
        %1859 = vmatmul.mubr.f32.gmra.mrb[0].mxu0 %v1858
        %v1860 = vpop.f32.mrb[0].mxu0
        %v1861 = vadd.f32 %v1647, %v1860
        %v1862 = vpop.f32.mrb[0].mxu0
        %1863 = vmatprep.mubr.f32.mxu0 0.0
        %v1864 = vand.u32 %v1506, 4294901760
        %1865 = vmatmul.mubr.f32.gmra.mrb[0].mxu0 %v1864
        %v1866 = vpop.f32.mrb[0].mxu0
        %v1867 = vadd.f32 %v1657, %v1866
        %v1868 = vpop.f32.mrb[0].mxu0
        %1869 = vmatprep.mubr.f32.mxu0 0.0
        %v1870 = vand.u32 %v1509, 4294901760
        %1871 = vmatmul.mubr.f32.gmra.mrb[0].mxu0 %v1870
        %v1872 = vpop.f32.mrb[0].mxu0
        %v1873 = vadd.f32 %v1667, %v1872
        %v1874 = vpop.f32.mrb[0].mxu0
        %1875 = vmatprep.mubr.f32.mxu0 0.0
        %v1876 = vand.u32 %v1512, 4294901760
        %1877 = vmatmul.mubr.f32.gmra.mrb[0].mxu0 %v1876
        %v1878 = vpop.f32.mrb[0].mxu0
        %v1879 = vadd.f32 %v1677, %v1878
        %v1880 = vpop.f32.mrb[0].mxu0
        %1881 = vmatprep.mubr.f32.mxu0 0.0
        %v1882 = vand.u32 %v1515, 4294901760
        %1883 = vmatmul.mubr.f32.gmra.mrb[0].mxu0 %v1882
        %v1884 = vpop.f32.mrb[0].mxu0
        %v1885 = vadd.f32 %v1687, %v1884
        %v1886 = vpop.f32.mrb[0].mxu0
        %1887 = vmatprep.mubr.f32.mxu0 0.0
        %v1888 = vand.u32 %v1518, 4294901760
        %1889 = vmatmul.mubr.f32.gmra.mrb[0].mxu0 %v1888
        %v1890 = vpop.f32.mrb[0].mxu0
        %v1891 = vadd.f32 %v1697, %v1890
        %v1892 = vpop.f32.mrb[0].mxu0
        %1893 = vmatprep.mubr.f32.mxu0 0.0
        %v1894 = vand.u32 %v1521, 4294901760
        %1895 = vmatmul.mubr.f32.gmra.mrb[0].mxu0 %v1894
        %v1896 = vpop.f32.mrb[0].mxu0
        %v1897 = vadd.f32 %v1707, %v1896
        %v1898 = vpop.f32.mrb[0].mxu0
        %1899 = vmatprep.mubr.f32.mxu0 0.0
        %v1900 = vand.u32 %v1524, 4294901760
        %1901 = vmatmul.mubr.f32.gmra.mrb[0].mxu0 %v1900
        %v1902 = vpop.f32.mrb[0].mxu0
        %v1903 = vadd.f32 %v1717, %v1902
        %v1904 = vpop.f32.mrb[0].mxu0
        %1905 = vmatprep.mubr.f32.mxu0 0.0
        %v1906 = vand.u32 %v1527, 4294901760
        %1907 = vmatmul.mubr.f32.gmra.mrb[0].mxu0 %v1906
        %v1908 = vpop.f32.mrb[0].mxu0
        %v1909 = vadd.f32 %v1727, %v1908
        %v1910 = vpop.f32.mrb[0].mxu0
        %1911 = vmatprep.mubr.f32.mxu0 0.0
        %v1912 = vand.u32 %v1530, 4294901760
        %1913 = vmatmul.mubr.f32.gmra.mrb[0].mxu0 %v1912
        %v1914 = vpop.f32.mrb[0].mxu0
        %v1915 = vadd.f32 %v1737, %v1914
        %v1916 = vpop.f32.mrb[0].mxu0
        %1917 = vmatprep.mubr.f32.mxu0 0.0
        %v1918 = vand.u32 %v1533, 4294901760
        %1919 = vmatmul.mubr.f32.gmra.mrb[0].mxu0 %v1918
        %v1920 = vpop.f32.mrb[0].mxu0
        %v1921 = vadd.f32 %v1747, %v1920
        %v1922 = vpop.f32.mrb[0].mxu0
        %1923 = vmatprep.mubr.f32.mxu0 0.0
        %v1924 = vand.u32 %v1536, 4294901760
        %1925 = vmatmul.mubr.f32.gmra.mrb[0].mxu0 %v1924
        %v1926 = vpop.f32.mrb[0].mxu0
        %v1927 = vadd.f32 %v1757, %v1926
        %v1928 = vpop.f32.mrb[0].mxu0
        %1929 = vmatprep.mubr.f32.mxu0 0.0
        %v1930 = vand.u32 %v1539, 4294901760
        %1931 = vmatmul.mubr.f32.gmra.mrb[0].mxu0 %v1930
        %v1932 = vpop.f32.mrb[0].mxu0
        %v1933 = vadd.f32 %v1767, %v1932
        %v1934 = vpop.f32.mrb[0].mxu0
        %1935 = vdwg.mxu0
        %1936 = vmatprep.subr.mxu0 0.0
        %v1937 = vand.u32 %v1542, 4294901760
        %v1938 = vsub.f32 %v1542, %v1937
        %1939 = vmatpush1.msra.mxu0 %v1938
        %1940 = vmatprep.subr.mxu0 0.0
        %1941 = vmatpush1.msra.mxu0 0.0
        %1942 = vmatprep.subr.mxu0 0.0
        %1943 = vmatpush1.msra.mxu0 0.0
        %1944 = vmatprep.subr.mxu0 0.0
        %1945 = vmatpush1.msra.mxu0 0.0
        %1946 = vmatprep.subr.mxu0 0.0
        %1947 = vmatpush1.msra.mxu0 0.0
        %1948 = vmatprep.subr.mxu0 0.0
        %1949 = vmatpush1.msra.mxu0 0.0
        %1950 = vmatprep.subr.mxu0 0.0
        %1951 = vmatpush1.msra.mxu0 0.0
        %1952 = vmatprep.subr.mxu0 0.0
        %1953 = vmatpush1.msra.mxu0 0.0
        %1954 = vmatprep.subr.mxu0 0.0
        %1955 = vmatpush1.msra.mxu0 0.0
        %1956 = vmatprep.subr.mxu0 0.0
        %1957 = vmatpush1.msra.mxu0 0.0
        %1958 = vmatprep.subr.mxu0 0.0
        %1959 = vmatpush1.msra.mxu0 0.0
        %1960 = vmatprep.subr.mxu0 0.0
        %1961 = vmatpush1.msra.mxu0 0.0
        %1962 = vmatprep.subr.mxu0 0.0
        %1963 = vmatpush1.msra.mxu0 0.0
        %1964 = vmatprep.subr.mxu0 0.0
        %1965 = vmatpush1.msra.mxu0 0.0
        %1966 = vmatprep.subr.mxu0 0.0
        %1967 = vmatpush1.msra.mxu0 0.0
        %1968 = vmatprep.subr.mxu0 0.0
        %1969 = vmatpush1.msra.mxu0 0.0
        %1970 = vmatprep.subr.mxu0 0.0
        %1971 = vmatpush1.msra.mxu0 0.0
        %1972 = vmatprep.subr.mxu0 0.0
        %1973 = vmatpush1.msra.mxu0 0.0
        %1974 = vmatprep.subr.mxu0 0.0
        %1975 = vmatpush1.msra.mxu0 0.0
        %1976 = vmatprep.subr.mxu0 0.0
        %1977 = vmatpush1.msra.mxu0 0.0
        %1978 = vmatprep.subr.mxu0 0.0
        %1979 = vmatpush1.msra.mxu0 0.0
        %1980 = vmatprep.subr.mxu0 0.0
        %1981 = vmatpush1.msra.mxu0 0.0
        %1982 = vmatprep.subr.mxu0 0.0
        %1983 = vmatpush1.msra.mxu0 0.0
        %1984 = vmatprep.subr.mxu0 0.0
        %1985 = vmatpush1.msra.mxu0 0.0
        %1986 = vmatprep.subr.mxu0 0.0
        %1987 = vmatpush1.msra.mxu0 0.0
        %1988 = vmatprep.subr.mxu0 0.0
        %1989 = vmatpush1.msra.mxu0 0.0
        %1990 = vmatprep.subr.mxu0 0.0
        %1991 = vmatpush1.msra.mxu0 0.0
        %1992 = vmatprep.subr.mxu0 0.0
        %1993 = vmatpush1.msra.mxu0 0.0
        %1994 = vmatprep.subr.mxu0 0.0
        %1995 = vmatpush1.msra.mxu0 0.0
        %1996 = vmatprep.subr.mxu0 0.0
        %1997 = vmatpush1.msra.mxu0 0.0
        %1998 = vmatprep.subr.mxu0 0.0
        %1999 = vmatpush1.msra.mxu0 0.0
        %2000 = vmatprep.subr.mxu0 0.0
        %2001 = vmatpush1.msra.mxu0 0.0
        %2002 = vmatprep.mubr.f32.mxu0 0.0
        %v2003 = vand.u32 %v1494, 4294901760
        %v2004 = vsub.f32 %v1494, %v2003
        %2005 = vmatmul.mubr.f32.gmra.mrb[0].mxu0 %v2004
        %v2006 = vpop.f32.mrb[0].mxu0
        %v2007 = vadd.f32 %v1843, %v2006
        %v2008 = vpop.f32.mrb[0].mxu0
        %2009 = vmatprep.mubr.f32.mxu0 0.0
        %v2010 = vand.u32 %v1497, 4294901760
        %v2011 = vsub.f32 %v1497, %v2010
        %2012 = vmatmul.mubr.f32.gmra.mrb[0].mxu0 %v2011
        %v2013 = vpop.f32.mrb[0].mxu0
        %v2014 = vadd.f32 %v1849, %v2013
        %v2015 = vpop.f32.mrb[0].mxu0
        %2016 = vmatprep.mubr.f32.mxu0 0.0
        %v2017 = vand.u32 %v1500, 4294901760
        %v2018 = vsub.f32 %v1500, %v2017
        %2019 = vmatmul.mubr.f32.gmra.mrb[0].mxu0 %v2018
        %v2020 = vpop.f32.mrb[0].mxu0
        %v2021 = vadd.f32 %v1855, %v2020
        %v2022 = vpop.f32.mrb[0].mxu0
        %2023 = vmatprep.mubr.f32.mxu0 0.0
        %v2024 = vand.u32 %v1503, 4294901760
        %v2025 = vsub.f32 %v1503, %v2024
        %2026 = vmatmul.mubr.f32.gmra.mrb[0].mxu0 %v2025
        %v2027 = vpop.f32.mrb[0].mxu0
        %v2028 = vadd.f32 %v1861, %v2027
        %v2029 = vpop.f32.mrb[0].mxu0
        %2030 = vmatprep.mubr.f32.mxu0 0.0
        %v2031 = vand.u32 %v1506, 4294901760
        %v2032 = vsub.f32 %v1506, %v2031
        %2033 = vmatmul.mubr.f32.gmra.mrb[0].mxu0 %v2032
        %v2034 = vpop.f32.mrb[0].mxu0
        %v2035 = vadd.f32 %v1867, %v2034
        %v2036 = vpop.f32.mrb[0].mxu0
        %2037 = vmatprep.mubr.f32.mxu0 0.0
        %v2038 = vand.u32 %v1509, 4294901760
        %v2039 = vsub.f32 %v1509, %v2038
        %2040 = vmatmul.mubr.f32.gmra.mrb[0].mxu0 %v2039
        %v2041 = vpop.f32.mrb[0].mxu0
        %v2042 = vadd.f32 %v1873, %v2041
        %v2043 = vpop.f32.mrb[0].mxu0
        %2044 = vmatprep.mubr.f32.mxu0 0.0
        %v2045 = vand.u32 %v1512, 4294901760
        %v2046 = vsub.f32 %v1512, %v2045
        %2047 = vmatmul.mubr.f32.gmra.mrb[0].mxu0 %v2046
        %v2048 = vpop.f32.mrb[0].mxu0
        %v2049 = vadd.f32 %v1879, %v2048
        %v2050 = vpop.f32.mrb[0].mxu0
        %2051 = vmatprep.mubr.f32.mxu0 0.0
        %v2052 = vand.u32 %v1515, 4294901760
        %v2053 = vsub.f32 %v1515, %v2052
        %2054 = vmatmul.mubr.f32.gmra.mrb[0].mxu0 %v2053
        %v2055 = vpop.f32.mrb[0].mxu0
        %v2056 = vadd.f32 %v1885, %v2055
        %v2057 = vpop.f32.mrb[0].mxu0
        %2058 = vmatprep.mubr.f32.mxu0 0.0
        %v2059 = vand.u32 %v1518, 4294901760
        %v2060 = vsub.f32 %v1518, %v2059
        %2061 = vmatmul.mubr.f32.gmra.mrb[0].mxu0 %v2060
        %v2062 = vpop.f32.mrb[0].mxu0
        %v2063 = vadd.f32 %v1891, %v2062
        %v2064 = vpop.f32.mrb[0].mxu0
        %2065 = vmatprep.mubr.f32.mxu0 0.0
        %v2066 = vand.u32 %v1521, 4294901760
        %v2067 = vsub.f32 %v1521, %v2066
        %2068 = vmatmul.mubr.f32.gmra.mrb[0].mxu0 %v2067
        %v2069 = vpop.f32.mrb[0].mxu0
        %v2070 = vadd.f32 %v1897, %v2069
        %v2071 = vpop.f32.mrb[0].mxu0
        %2072 = vmatprep.mubr.f32.mxu0 0.0
        %v2073 = vand.u32 %v1524, 4294901760
        %v2074 = vsub.f32 %v1524, %v2073
        %2075 = vmatmul.mubr.f32.gmra.mrb[0].mxu0 %v2074
        %v2076 = vpop.f32.mrb[0].mxu0
        %v2077 = vadd.f32 %v1903, %v2076
        %v2078 = vpop.f32.mrb[0].mxu0
        %2079 = vmatprep.mubr.f32.mxu0 0.0
        %v2080 = vand.u32 %v1527, 4294901760
        %v2081 = vsub.f32 %v1527, %v2080
        %2082 = vmatmul.mubr.f32.gmra.mrb[0].mxu0 %v2081
        %v2083 = vpop.f32.mrb[0].mxu0
        %v2084 = vadd.f32 %v1909, %v2083
        %v2085 = vpop.f32.mrb[0].mxu0
        %2086 = vmatprep.mubr.f32.mxu0 0.0
        %v2087 = vand.u32 %v1530, 4294901760
        %v2088 = vsub.f32 %v1530, %v2087
        %2089 = vmatmul.mubr.f32.gmra.mrb[0].mxu0 %v2088
        %v2090 = vpop.f32.mrb[0].mxu0
        %v2091 = vadd.f32 %v1915, %v2090
        %v2092 = vpop.f32.mrb[0].mxu0
        %2093 = vmatprep.mubr.f32.mxu0 0.0
        %v2094 = vand.u32 %v1533, 4294901760
        %v2095 = vsub.f32 %v1533, %v2094
        %2096 = vmatmul.mubr.f32.gmra.mrb[0].mxu0 %v2095
        %v2097 = vpop.f32.mrb[0].mxu0
        %v2098 = vadd.f32 %v1921, %v2097
        %v2099 = vpop.f32.mrb[0].mxu0
        %2100 = vmatprep.mubr.f32.mxu0 0.0
        %v2101 = vand.u32 %v1536, 4294901760
        %v2102 = vsub.f32 %v1536, %v2101
        %2103 = vmatmul.mubr.f32.gmra.mrb[0].mxu0 %v2102
        %v2104 = vpop.f32.mrb[0].mxu0
        %v2105 = vadd.f32 %v1927, %v2104
        %v2106 = vpop.f32.mrb[0].mxu0
        %2107 = vmatprep.mubr.f32.mxu0 0.0
        %v2108 = vand.u32 %v1539, 4294901760
        %v2109 = vsub.f32 %v1539, %v2108
        %2110 = vmatmul.mubr.f32.gmra.mrb[0].mxu0 %v2109
        %v2111 = vpop.f32.mrb[0].mxu0
        %v2112 = vadd.f32 %v1933, %v2111
        %v2113 = vpop.f32.mrb[0].mxu0
        %2114 = vdwg.mxu0
        %2115 = vmatprep.subr.mxu0 0.0
        %v2116 = vand.u32 %v1542, 4294901760
        %2117 = vmatpush1.msra.mxu0 %v2116
        %2118 = vmatprep.subr.mxu0 0.0
        %2119 = vmatpush1.msra.mxu0 0.0
        %2120 = vmatprep.subr.mxu0 0.0
        %2121 = vmatpush1.msra.mxu0 0.0
        %2122 = vmatprep.subr.mxu0 0.0
        %2123 = vmatpush1.msra.mxu0 0.0
        %2124 = vmatprep.subr.mxu0 0.0
        %2125 = vmatpush1.msra.mxu0 0.0
        %2126 = vmatprep.subr.mxu0 0.0
        %2127 = vmatpush1.msra.mxu0 0.0
        %2128 = vmatprep.subr.mxu0 0.0
        %2129 = vmatpush1.msra.mxu0 0.0
        %2130 = vmatprep.subr.mxu0 0.0
        %2131 = vmatpush1.msra.mxu0 0.0
        %2132 = vmatprep.subr.mxu0 0.0
        %2133 = vmatpush1.msra.mxu0 0.0
        %2134 = vmatprep.subr.mxu0 0.0
        %2135 = vmatpush1.msra.mxu0 0.0
        %2136 = vmatprep.subr.mxu0 0.0
        %2137 = vmatpush1.msra.mxu0 0.0
        %2138 = vmatprep.subr.mxu0 0.0
        %2139 = vmatpush1.msra.mxu0 0.0
        %2140 = vmatprep.subr.mxu0 0.0
        %2141 = vmatpush1.msra.mxu0 0.0
        %2142 = vmatprep.subr.mxu0 0.0
        %2143 = vmatpush1.msra.mxu0 0.0
        %2144 = vmatprep.subr.mxu0 0.0
        %2145 = vmatpush1.msra.mxu0 0.0
        %2146 = vmatprep.subr.mxu0 0.0
        %2147 = vmatpush1.msra.mxu0 0.0
        %2148 = vmatprep.subr.mxu0 0.0
        %2149 = vmatpush1.msra.mxu0 0.0
        %2150 = vmatprep.subr.mxu0 0.0
        %2151 = vmatpush1.msra.mxu0 0.0
        %2152 = vmatprep.subr.mxu0 0.0
        %2153 = vmatpush1.msra.mxu0 0.0
        %2154 = vmatprep.subr.mxu0 0.0
        %2155 = vmatpush1.msra.mxu0 0.0
        %2156 = vmatprep.subr.mxu0 0.0
        %2157 = vmatpush1.msra.mxu0 0.0
        %2158 = vmatprep.subr.mxu0 0.0
        %2159 = vmatpush1.msra.mxu0 0.0
        %2160 = vmatprep.subr.mxu0 0.0
        %2161 = vmatpush1.msra.mxu0 0.0
        %2162 = vmatprep.subr.mxu0 0.0
        %2163 = vmatpush1.msra.mxu0 0.0
        %2164 = vmatprep.subr.mxu0 0.0
        %2165 = vmatpush1.msra.mxu0 0.0
        %2166 = vmatprep.subr.mxu0 0.0
        %2167 = vmatpush1.msra.mxu0 0.0
        %2168 = vmatprep.subr.mxu0 0.0
        %2169 = vmatpush1.msra.mxu0 0.0
        %2170 = vmatprep.subr.mxu0 0.0
        %2171 = vmatpush1.msra.mxu0 0.0
        %2172 = vmatprep.subr.mxu0 0.0
        %2173 = vmatpush1.msra.mxu0 0.0
        %2174 = vmatprep.subr.mxu0 0.0
        %2175 = vmatpush1.msra.mxu0 0.0
        %2176 = vmatprep.subr.mxu0 0.0
        %2177 = vmatpush1.msra.mxu0 0.0
        %2178 = vmatprep.subr.mxu0 0.0
        %2179 = vmatpush1.msra.mxu0 0.0
        %2180 = vmatprep.mubr.f32.mxu0 0.0
        %v2181 = vand.u32 %v1494, 4294901760
        %v2182 = vsub.f32 %v1494, %v2181
        %v2183 = vand.u32 %v2182, 4294901760
        %2184 = vmatmul.mubr.f32.gmra.mrb[0].mxu0 %v2183
        %v2185 = vpop.f32.mrb[0].mxu0
        %v2186 = vadd.f32 %v2007, %v2185
        %v2187 = vpop.f32.mrb[0].mxu0
        %2188 = vmatprep.mubr.f32.mxu0 0.0
        %v2189 = vand.u32 %v1497, 4294901760
        %v2190 = vsub.f32 %v1497, %v2189
        %v2191 = vand.u32 %v2190, 4294901760
        %2192 = vmatmul.mubr.f32.gmra.mrb[0].mxu0 %v2191
        %v2193 = vpop.f32.mrb[0].mxu0
        %v2194 = vadd.f32 %v2014, %v2193
        %v2195 = vpop.f32.mrb[0].mxu0
        %2196 = vmatprep.mubr.f32.mxu0 0.0
        %v2197 = vand.u32 %v1500, 4294901760
        %v2198 = vsub.f32 %v1500, %v2197
        %v2199 = vand.u32 %v2198, 4294901760
        %2200 = vmatmul.mubr.f32.gmra.mrb[0].mxu0 %v2199
        %v2201 = vpop.f32.mrb[0].mxu0
        %v2202 = vadd.f32 %v2021, %v2201
        %v2203 = vpop.f32.mrb[0].mxu0
        %2204 = vmatprep.mubr.f32.mxu0 0.0
        %v2205 = vand.u32 %v1503, 4294901760
        %v2206 = vsub.f32 %v1503, %v2205
        %v2207 = vand.u32 %v2206, 4294901760
        %2208 = vmatmul.mubr.f32.gmra.mrb[0].mxu0 %v2207
        %v2209 = vpop.f32.mrb[0].mxu0
        %v2210 = vadd.f32 %v2028, %v2209
        %v2211 = vpop.f32.mrb[0].mxu0
        %2212 = vmatprep.mubr.f32.mxu0 0.0
        %v2213 = vand.u32 %v1506, 4294901760
        %v2214 = vsub.f32 %v1506, %v2213
        %v2215 = vand.u32 %v2214, 4294901760
        %2216 = vmatmul.mubr.f32.gmra.mrb[0].mxu0 %v2215
        %v2217 = vpop.f32.mrb[0].mxu0
        %v2218 = vadd.f32 %v2035, %v2217
        %v2219 = vpop.f32.mrb[0].mxu0
        %2220 = vmatprep.mubr.f32.mxu0 0.0
        %v2221 = vand.u32 %v1509, 4294901760
        %v2222 = vsub.f32 %v1509, %v2221
        %v2223 = vand.u32 %v2222, 4294901760
        %2224 = vmatmul.mubr.f32.gmra.mrb[0].mxu0 %v2223
        %v2225 = vpop.f32.mrb[0].mxu0
        %v2226 = vadd.f32 %v2042, %v2225
        %v2227 = vpop.f32.mrb[0].mxu0
        %2228 = vmatprep.mubr.f32.mxu0 0.0
        %v2229 = vand.u32 %v1512, 4294901760
        %v2230 = vsub.f32 %v1512, %v2229
        %v2231 = vand.u32 %v2230, 4294901760
        %2232 = vmatmul.mubr.f32.gmra.mrb[0].mxu0 %v2231
        %v2233 = vpop.f32.mrb[0].mxu0
        %v2234 = vadd.f32 %v2049, %v2233
        %v2235 = vpop.f32.mrb[0].mxu0
        %2236 = vmatprep.mubr.f32.mxu0 0.0
        %v2237 = vand.u32 %v1515, 4294901760
        %v2238 = vsub.f32 %v1515, %v2237
        %v2239 = vand.u32 %v2238, 4294901760
        %2240 = vmatmul.mubr.f32.gmra.mrb[0].mxu0 %v2239
        %v2241 = vpop.f32.mrb[0].mxu0
        %v2242 = vadd.f32 %v2056, %v2241
        %v2243 = vpop.f32.mrb[0].mxu0
        %2244 = vmatprep.mubr.f32.mxu0 0.0
        %v2245 = vand.u32 %v1518, 4294901760
        %v2246 = vsub.f32 %v1518, %v2245
        %v2247 = vand.u32 %v2246, 4294901760
        %2248 = vmatmul.mubr.f32.gmra.mrb[0].mxu0 %v2247
        %v2249 = vpop.f32.mrb[0].mxu0
        %v2250 = vadd.f32 %v2063, %v2249
        %v2251 = vpop.f32.mrb[0].mxu0
        %2252 = vmatprep.mubr.f32.mxu0 0.0
        %v2253 = vand.u32 %v1521, 4294901760
        %v2254 = vsub.f32 %v1521, %v2253
        %v2255 = vand.u32 %v2254, 4294901760
        %2256 = vmatmul.mubr.f32.gmra.mrb[0].mxu0 %v2255
        %v2257 = vpop.f32.mrb[0].mxu0
        %v2258 = vadd.f32 %v2070, %v2257
        %v2259 = vpop.f32.mrb[0].mxu0
        %2260 = vmatprep.mubr.f32.mxu0 0.0
        %v2261 = vand.u32 %v1524, 4294901760
        %v2262 = vsub.f32 %v1524, %v2261
        %v2263 = vand.u32 %v2262, 4294901760
        %2264 = vmatmul.mubr.f32.gmra.mrb[0].mxu0 %v2263
        %v2265 = vpop.f32.mrb[0].mxu0
        %v2266 = vadd.f32 %v2077, %v2265
        %v2267 = vpop.f32.mrb[0].mxu0
        %2268 = vmatprep.mubr.f32.mxu0 0.0
        %v2269 = vand.u32 %v1527, 4294901760
        %v2270 = vsub.f32 %v1527, %v2269
        %v2271 = vand.u32 %v2270, 4294901760
        %2272 = vmatmul.mubr.f32.gmra.mrb[0].mxu0 %v2271
        %v2273 = vpop.f32.mrb[0].mxu0
        %v2274 = vadd.f32 %v2084, %v2273
        %v2275 = vpop.f32.mrb[0].mxu0
        %2276 = vmatprep.mubr.f32.mxu0 0.0
        %v2277 = vand.u32 %v1530, 4294901760
        %v2278 = vsub.f32 %v1530, %v2277
        %v2279 = vand.u32 %v2278, 4294901760
        %2280 = vmatmul.mubr.f32.gmra.mrb[0].mxu0 %v2279
        %v2281 = vpop.f32.mrb[0].mxu0
        %v2282 = vadd.f32 %v2091, %v2281
        %v2283 = vpop.f32.mrb[0].mxu0
        %2284 = vmatprep.mubr.f32.mxu0 0.0
        %v2285 = vand.u32 %v1533, 4294901760
        %v2286 = vsub.f32 %v1533, %v2285
        %v2287 = vand.u32 %v2286, 4294901760
        %2288 = vmatmul.mubr.f32.gmra.mrb[0].mxu0 %v2287
        %v2289 = vpop.f32.mrb[0].mxu0
        %v2290 = vadd.f32 %v2098, %v2289
        %v2291 = vpop.f32.mrb[0].mxu0
        %2292 = vmatprep.mubr.f32.mxu0 0.0
        %v2293 = vand.u32 %v1536, 4294901760
        %v2294 = vsub.f32 %v1536, %v2293
        %v2295 = vand.u32 %v2294, 4294901760
        %2296 = vmatmul.mubr.f32.gmra.mrb[0].mxu0 %v2295
        %v2297 = vpop.f32.mrb[0].mxu0
        %v2298 = vadd.f32 %v2105, %v2297
        %v2299 = vpop.f32.mrb[0].mxu0
        %2300 = vmatprep.mubr.f32.mxu0 0.0
        %v2301 = vand.u32 %v1539, 4294901760
        %v2302 = vsub.f32 %v1539, %v2301
        %v2303 = vand.u32 %v2302, 4294901760
        %2304 = vmatmul.mubr.f32.gmra.mrb[0].mxu0 %v2303
        %v2305 = vpop.f32.mrb[0].mxu0
        %v2306 = vadd.f32 %v2112, %v2305
        %v2307 = vpop.f32.mrb[0].mxu0
        %2308 = vdwg.mxu0
        %2309 = vmatprep.subr.mxu0 0.0
        %v2310 = vand.u32 %v1542, 4294901760
        %v2311 = vsub.f32 %v1542, %v2310
        %v2312 = vand.u32 %v2311, 4294901760
        %2313 = vmatpush1.msra.mxu0 %v2312
        %2314 = vmatprep.subr.mxu0 0.0
        %2315 = vmatpush1.msra.mxu0 0.0
        %2316 = vmatprep.subr.mxu0 0.0
        %2317 = vmatpush1.msra.mxu0 0.0
        %2318 = vmatprep.subr.mxu0 0.0
        %2319 = vmatpush1.msra.mxu0 0.0
        %2320 = vmatprep.subr.mxu0 0.0
        %2321 = vmatpush1.msra.mxu0 0.0
        %2322 = vmatprep.subr.mxu0 0.0
        %2323 = vmatpush1.msra.mxu0 0.0
        %2324 = vmatprep.subr.mxu0 0.0
        %2325 = vmatpush1.msra.mxu0 0.0
        %2326 = vmatprep.subr.mxu0 0.0
        %2327 = vmatpush1.msra.mxu0 0.0
        %2328 = vmatprep.subr.mxu0 0.0
        %2329 = vmatpush1.msra.mxu0 0.0
        %2330 = vmatprep.subr.mxu0 0.0
        %2331 = vmatpush1.msra.mxu0 0.0
        %2332 = vmatprep.subr.mxu0 0.0
        %2333 = vmatpush1.msra.mxu0 0.0
        %2334 = vmatprep.subr.mxu0 0.0
        %2335 = vmatpush1.msra.mxu0 0.0
        %2336 = vmatprep.subr.mxu0 0.0
        %2337 = vmatpush1.msra.mxu0 0.0
        %2338 = vmatprep.subr.mxu0 0.0
        %2339 = vmatpush1.msra.mxu0 0.0
        %2340 = vmatprep.subr.mxu0 0.0
        %2341 = vmatpush1.msra.mxu0 0.0
        %2342 = vmatprep.subr.mxu0 0.0
        %2343 = vmatpush1.msra.mxu0 0.0
        %2344 = vmatprep.subr.mxu0 0.0
        %2345 = vmatpush1.msra.mxu0 0.0
        %2346 = vmatprep.subr.mxu0 0.0
        %2347 = vmatpush1.msra.mxu0 0.0
        %2348 = vmatprep.subr.mxu0 0.0
        %2349 = vmatpush1.msra.mxu0 0.0
        %2350 = vmatprep.subr.mxu0 0.0
        %2351 = vmatpush1.msra.mxu0 0.0
        %2352 = vmatprep.subr.mxu0 0.0
        %2353 = vmatpush1.msra.mxu0 0.0
        %2354 = vmatprep.subr.mxu0 0.0
        %2355 = vmatpush1.msra.mxu0 0.0
        %2356 = vmatprep.subr.mxu0 0.0
        %2357 = vmatpush1.msra.mxu0 0.0
        %2358 = vmatprep.subr.mxu0 0.0
        %2359 = vmatpush1.msra.mxu0 0.0
        %2360 = vmatprep.subr.mxu0 0.0
        %2361 = vmatpush1.msra.mxu0 0.0
        %2362 = vmatprep.subr.mxu0 0.0
        %2363 = vmatpush1.msra.mxu0 0.0
        %2364 = vmatprep.subr.mxu0 0.0
        %2365 = vmatpush1.msra.mxu0 0.0
        %2366 = vmatprep.subr.mxu0 0.0
        %2367 = vmatpush1.msra.mxu0 0.0
        %2368 = vmatprep.subr.mxu0 0.0
        %2369 = vmatpush1.msra.mxu0 0.0
        %2370 = vmatprep.subr.mxu0 0.0
        %2371 = vmatpush1.msra.mxu0 0.0
        %2372 = vmatprep.subr.mxu0 0.0
        %2373 = vmatpush1.msra.mxu0 0.0
        %2374 = vmatprep.subr.mxu0 0.0
        %2375 = vmatpush1.msra.mxu0 0.0
        %2376 = vmatprep.mubr.f32.mxu0 0.0
        %v2377 = vand.u32 %v1494, 4294901760
        %2378 = vmatmul.mubr.f32.gmra.mrb[0].mxu0 %v2377
        %v2379 = vpop.f32.mrb[0].mxu0
        %v2380 = vadd.f32 %v2186, %v2379
        %v2381 = vpop.f32.mrb[0].mxu0
        %2382 = vmatprep.mubr.f32.mxu0 0.0
        %v2383 = vand.u32 %v1497, 4294901760
        %2384 = vmatmul.mubr.f32.gmra.mrb[0].mxu0 %v2383
        %v2385 = vpop.f32.mrb[0].mxu0
        %v2386 = vadd.f32 %v2194, %v2385
        %v2387 = vpop.f32.mrb[0].mxu0
        %2388 = vmatprep.mubr.f32.mxu0 0.0
        %v2389 = vand.u32 %v1500, 4294901760
        %2390 = vmatmul.mubr.f32.gmra.mrb[0].mxu0 %v2389
        %v2391 = vpop.f32.mrb[0].mxu0
        %v2392 = vadd.f32 %v2202, %v2391
        %v2393 = vpop.f32.mrb[0].mxu0
        %2394 = vmatprep.mubr.f32.mxu0 0.0
        %v2395 = vand.u32 %v1503, 4294901760
        %2396 = vmatmul.mubr.f32.gmra.mrb[0].mxu0 %v2395
        %v2397 = vpop.f32.mrb[0].mxu0
        %v2398 = vadd.f32 %v2210, %v2397
        %v2399 = vpop.f32.mrb[0].mxu0
        %2400 = vmatprep.mubr.f32.mxu0 0.0
        %v2401 = vand.u32 %v1506, 4294901760
        %2402 = vmatmul.mubr.f32.gmra.mrb[0].mxu0 %v2401
        %v2403 = vpop.f32.mrb[0].mxu0
        %v2404 = vadd.f32 %v2218, %v2403
        %v2405 = vpop.f32.mrb[0].mxu0
        %2406 = vmatprep.mubr.f32.mxu0 0.0
        %v2407 = vand.u32 %v1509, 4294901760
        %2408 = vmatmul.mubr.f32.gmra.mrb[0].mxu0 %v2407
        %v2409 = vpop.f32.mrb[0].mxu0
        %v2410 = vadd.f32 %v2226, %v2409
        %v2411 = vpop.f32.mrb[0].mxu0
        %2412 = vmatprep.mubr.f32.mxu0 0.0
        %v2413 = vand.u32 %v1512, 4294901760
        %2414 = vmatmul.mubr.f32.gmra.mrb[0].mxu0 %v2413
        %v2415 = vpop.f32.mrb[0].mxu0
        %v2416 = vadd.f32 %v2234, %v2415
        %v2417 = vpop.f32.mrb[0].mxu0
        %2418 = vmatprep.mubr.f32.mxu0 0.0
        %v2419 = vand.u32 %v1515, 4294901760
        %2420 = vmatmul.mubr.f32.gmra.mrb[0].mxu0 %v2419
        %v2421 = vpop.f32.mrb[0].mxu0
        %v2422 = vadd.f32 %v2242, %v2421
        %v2423 = vpop.f32.mrb[0].mxu0
        %2424 = vmatprep.mubr.f32.mxu0 0.0
        %v2425 = vand.u32 %v1518, 4294901760
        %2426 = vmatmul.mubr.f32.gmra.mrb[0].mxu0 %v2425
        %v2427 = vpop.f32.mrb[0].mxu0
        %v2428 = vadd.f32 %v2250, %v2427
        %v2429 = vpop.f32.mrb[0].mxu0
        %2430 = vmatprep.mubr.f32.mxu0 0.0
        %v2431 = vand.u32 %v1521, 4294901760
        %2432 = vmatmul.mubr.f32.gmra.mrb[0].mxu0 %v2431
        %v2433 = vpop.f32.mrb[0].mxu0
        %v2434 = vadd.f32 %v2258, %v2433
        %v2435 = vpop.f32.mrb[0].mxu0
        %2436 = vmatprep.mubr.f32.mxu0 0.0
        %v2437 = vand.u32 %v1524, 4294901760
        %2438 = vmatmul.mubr.f32.gmra.mrb[0].mxu0 %v2437
        %v2439 = vpop.f32.mrb[0].mxu0
        %v2440 = vadd.f32 %v2266, %v2439
        %v2441 = vpop.f32.mrb[0].mxu0
        %2442 = vmatprep.mubr.f32.mxu0 0.0
        %v2443 = vand.u32 %v1527, 4294901760
        %2444 = vmatmul.mubr.f32.gmra.mrb[0].mxu0 %v2443
        %v2445 = vpop.f32.mrb[0].mxu0
        %v2446 = vadd.f32 %v2274, %v2445
        %v2447 = vpop.f32.mrb[0].mxu0
        %2448 = vmatprep.mubr.f32.mxu0 0.0
        %v2449 = vand.u32 %v1530, 4294901760
        %2450 = vmatmul.mubr.f32.gmra.mrb[0].mxu0 %v2449
        %v2451 = vpop.f32.mrb[0].mxu0
        %v2452 = vadd.f32 %v2282, %v2451
        %v2453 = vpop.f32.mrb[0].mxu0
        %2454 = vmatprep.mubr.f32.mxu0 0.0
        %v2455 = vand.u32 %v1533, 4294901760
        %2456 = vmatmul.mubr.f32.gmra.mrb[0].mxu0 %v2455
        %v2457 = vpop.f32.mrb[0].mxu0
        %v2458 = vadd.f32 %v2290, %v2457
        %v2459 = vpop.f32.mrb[0].mxu0
        %2460 = vmatprep.mubr.f32.mxu0 0.0
        %v2461 = vand.u32 %v1536, 4294901760
        %2462 = vmatmul.mubr.f32.gmra.mrb[0].mxu0 %v2461
        %v2463 = vpop.f32.mrb[0].mxu0
        %v2464 = vadd.f32 %v2298, %v2463
        %v2465 = vpop.f32.mrb[0].mxu0
        %2466 = vmatprep.mubr.f32.mxu0 0.0
        %v2467 = vand.u32 %v1539, 4294901760
        %2468 = vmatmul.mubr.f32.gmra.mrb[0].mxu0 %v2467
        %v2469 = vpop.f32.mrb[0].mxu0
        %v2470 = vadd.f32 %v2306, %v2469
        %v2471 = vpop.f32.mrb[0].mxu0
        %2472 = vdwg.mxu0
        %2473 = vmatprep.subr.mxu0 0.0
        %v2474 = vand.u32 %v1542, 4294901760
        %2475 = vmatpush1.msra.mxu0 %v2474
        %2476 = vmatprep.subr.mxu0 0.0
        %2477 = vmatpush1.msra.mxu0 0.0
        %2478 = vmatprep.subr.mxu0 0.0
        %2479 = vmatpush1.msra.mxu0 0.0
        %2480 = vmatprep.subr.mxu0 0.0
        %2481 = vmatpush1.msra.mxu0 0.0
        %2482 = vmatprep.subr.mxu0 0.0
        %2483 = vmatpush1.msra.mxu0 0.0
        %2484 = vmatprep.subr.mxu0 0.0
        %2485 = vmatpush1.msra.mxu0 0.0
        %2486 = vmatprep.subr.mxu0 0.0
        %2487 = vmatpush1.msra.mxu0 0.0
        %2488 = vmatprep.subr.mxu0 0.0
        %2489 = vmatpush1.msra.mxu0 0.0
        %2490 = vmatprep.subr.mxu0 0.0
        %2491 = vmatpush1.msra.mxu0 0.0
        %2492 = vmatprep.subr.mxu0 0.0
        %2493 = vmatpush1.msra.mxu0 0.0
        %2494 = vmatprep.subr.mxu0 0.0
        %2495 = vmatpush1.msra.mxu0 0.0
        %2496 = vmatprep.subr.mxu0 0.0
        %2497 = vmatpush1.msra.mxu0 0.0
        %2498 = vmatprep.subr.mxu0 0.0
        %2499 = vmatpush1.msra.mxu0 0.0
        %2500 = vmatprep.subr.mxu0 0.0
        %2501 = vmatpush1.msra.mxu0 0.0
        %2502 = vmatprep.subr.mxu0 0.0
        %2503 = vmatpush1.msra.mxu0 0.0
        %2504 = vmatprep.subr.mxu0 0.0
        %2505 = vmatpush1.msra.mxu0 0.0
        %2506 = vmatprep.subr.mxu0 0.0
        %2507 = vmatpush1.msra.mxu0 0.0
        %2508 = vmatprep.subr.mxu0 0.0
        %2509 = vmatpush1.msra.mxu0 0.0
        %2510 = vmatprep.subr.mxu0 0.0
        %2511 = vmatpush1.msra.mxu0 0.0
        %2512 = vmatprep.subr.mxu0 0.0
        %2513 = vmatpush1.msra.mxu0 0.0
        %2514 = vmatprep.subr.mxu0 0.0
        %2515 = vmatpush1.msra.mxu0 0.0
        %2516 = vmatprep.subr.mxu0 0.0
        %2517 = vmatpush1.msra.mxu0 0.0
        %2518 = vmatprep.subr.mxu0 0.0
        %2519 = vmatpush1.msra.mxu0 0.0
        %2520 = vmatprep.subr.mxu0 0.0
        %2521 = vmatpush1.msra.mxu0 0.0
        %2522 = vmatprep.subr.mxu0 0.0
        %2523 = vmatpush1.msra.mxu0 0.0
        %2524 = vmatprep.subr.mxu0 0.0
        %2525 = vmatpush1.msra.mxu0 0.0
        %2526 = vmatprep.subr.mxu0 0.0
        %2527 = vmatpush1.msra.mxu0 0.0
        %2528 = vmatprep.subr.mxu0 0.0
        %2529 = vmatpush1.msra.mxu0 0.0
        %2530 = vmatprep.subr.mxu0 0.0
        %2531 = vmatpush1.msra.mxu0 0.0
        %2532 = vmatprep.subr.mxu0 0.0
        %2533 = vmatpush1.msra.mxu0 0.0
        %2534 = vmatprep.subr.mxu0 0.0
        %2535 = vmatpush1.msra.mxu0 0.0
        %2536 = vmatprep.subr.mxu0 0.0
        %2537 = vmatpush1.msra.mxu0 0.0
        %2538 = vmatprep.mubr.f32.mxu0 0.0
        %v2539 = vand.u32 %v1494, 4294901760
        %2540 = vmatmul.mubr.f32.gmra.mrb[0].mxu0 %v2539
        %v2541 = vpop.f32.mrb[0].mxu0
        %v2542 = vadd.f32 %v2380, %v2541
        %v2543 = vpop.f32.mrb[0].mxu0
        %2544 = vmatprep.mubr.f32.mxu0 0.0
        %v2545 = vand.u32 %v1497, 4294901760
        %2546 = vmatmul.mubr.f32.gmra.mrb[0].mxu0 %v2545
        %v2547 = vpop.f32.mrb[0].mxu0
        %v2548 = vadd.f32 %v2386, %v2547
        %v2549 = vpop.f32.mrb[0].mxu0
        %2550 = vmatprep.mubr.f32.mxu0 0.0
        %v2551 = vand.u32 %v1500, 4294901760
        %2552 = vmatmul.mubr.f32.gmra.mrb[0].mxu0 %v2551
        %v2553 = vpop.f32.mrb[0].mxu0
        %v2554 = vadd.f32 %v2392, %v2553
        %v2555 = vpop.f32.mrb[0].mxu0
        %2556 = vmatprep.mubr.f32.mxu0 0.0
        %v2557 = vand.u32 %v1503, 4294901760
        %2558 = vmatmul.mubr.f32.gmra.mrb[0].mxu0 %v2557
        %v2559 = vpop.f32.mrb[0].mxu0
        %v2560 = vadd.f32 %v2398, %v2559
        %v2561 = vpop.f32.mrb[0].mxu0
        %2562 = vmatprep.mubr.f32.mxu0 0.0
        %v2563 = vand.u32 %v1506, 4294901760
        %2564 = vmatmul.mubr.f32.gmra.mrb[0].mxu0 %v2563
        %v2565 = vpop.f32.mrb[0].mxu0
        %v2566 = vadd.f32 %v2404, %v2565
        %v2567 = vpop.f32.mrb[0].mxu0
        %2568 = vmatprep.mubr.f32.mxu0 0.0
        %v2569 = vand.u32 %v1509, 4294901760
        %2570 = vmatmul.mubr.f32.gmra.mrb[0].mxu0 %v2569
        %v2571 = vpop.f32.mrb[0].mxu0
        %v2572 = vadd.f32 %v2410, %v2571
        %v2573 = vpop.f32.mrb[0].mxu0
        %2574 = vmatprep.mubr.f32.mxu0 0.0
        %v2575 = vand.u32 %v1512, 4294901760
        %2576 = vmatmul.mubr.f32.gmra.mrb[0].mxu0 %v2575
        %v2577 = vpop.f32.mrb[0].mxu0
        %v2578 = vadd.f32 %v2416, %v2577
        %v2579 = vpop.f32.mrb[0].mxu0
        %2580 = vmatprep.mubr.f32.mxu0 0.0
        %v2581 = vand.u32 %v1515, 4294901760
        %2582 = vmatmul.mubr.f32.gmra.mrb[0].mxu0 %v2581
        %v2583 = vpop.f32.mrb[0].mxu0
        %v2584 = vadd.f32 %v2422, %v2583
        %v2585 = vpop.f32.mrb[0].mxu0
        %2586 = vmatprep.mubr.f32.mxu0 0.0
        %v2587 = vand.u32 %v1518, 4294901760
        %2588 = vmatmul.mubr.f32.gmra.mrb[0].mxu0 %v2587
        %v2589 = vpop.f32.mrb[0].mxu0
        %v2590 = vadd.f32 %v2428, %v2589
        %v2591 = vpop.f32.mrb[0].mxu0
        %2592 = vmatprep.mubr.f32.mxu0 0.0
        %v2593 = vand.u32 %v1521, 4294901760
        %2594 = vmatmul.mubr.f32.gmra.mrb[0].mxu0 %v2593
        %v2595 = vpop.f32.mrb[0].mxu0
        %v2596 = vadd.f32 %v2434, %v2595
        %v2597 = vpop.f32.mrb[0].mxu0
        %2598 = vmatprep.mubr.f32.mxu0 0.0
        %v2599 = vand.u32 %v1524, 4294901760
        %2600 = vmatmul.mubr.f32.gmra.mrb[0].mxu0 %v2599
        %v2601 = vpop.f32.mrb[0].mxu0
        %v2602 = vadd.f32 %v2440, %v2601
        %v2603 = vpop.f32.mrb[0].mxu0
        %2604 = vmatprep.mubr.f32.mxu0 0.0
        %v2605 = vand.u32 %v1527, 4294901760
        %2606 = vmatmul.mubr.f32.gmra.mrb[0].mxu0 %v2605
        %v2607 = vpop.f32.mrb[0].mxu0
        %v2608 = vadd.f32 %v2446, %v2607
        %v2609 = vpop.f32.mrb[0].mxu0
        %2610 = vmatprep.mubr.f32.mxu0 0.0
        %v2611 = vand.u32 %v1530, 4294901760
        %2612 = vmatmul.mubr.f32.gmra.mrb[0].mxu0 %v2611
        %v2613 = vpop.f32.mrb[0].mxu0
        %v2614 = vadd.f32 %v2452, %v2613
        %v2615 = vpop.f32.mrb[0].mxu0
        %2616 = vmatprep.mubr.f32.mxu0 0.0
        %v2617 = vand.u32 %v1533, 4294901760
        %2618 = vmatmul.mubr.f32.gmra.mrb[0].mxu0 %v2617
        %v2619 = vpop.f32.mrb[0].mxu0
        %v2620 = vadd.f32 %v2458, %v2619
        %v2621 = vpop.f32.mrb[0].mxu0
        %2622 = vmatprep.mubr.f32.mxu0 0.0
        %v2623 = vand.u32 %v1536, 4294901760
        %2624 = vmatmul.mubr.f32.gmra.mrb[0].mxu0 %v2623
        %v2625 = vpop.f32.mrb[0].mxu0
        %v2626 = vadd.f32 %v2464, %v2625
        %v2627 = vpop.f32.mrb[0].mxu0
        %2628 = vmatprep.mubr.f32.mxu0 0.0
        %v2629 = vand.u32 %v1539, 4294901760
        %2630 = vmatmul.mubr.f32.gmra.mrb[0].mxu0 %v2629
        %v2631 = vpop.f32.mrb[0].mxu0
        %v2632 = vadd.f32 %v2470, %v2631
        %v2633 = vpop.f32.mrb[0].mxu0
        %2634 = vdwg.mxu0
        %v2635 = vld [vmem:[%s310] sm:$0xff]
        %v2636 = vld [vmem:[%s310 + $0x8] sm:$0xff]
        %s2637 = scalar_lea.vmem %s293, 24
        %v2638 = vld [vmem:[%s2637] sm:$0xff]
        %v2639 = vld [vmem:[%s2637 + $0x8] sm:$0xff]
        %v2640 = vld [vmem:[%s2637 + $0x18] sm:$0xff]
        %v2641 = vld [vmem:[%s2637 + $0x20] sm:$0xff]
        %v2642 = vld [vmem:[%s2637 + $0x30] sm:$0xff]
        %v2643 = vld [vmem:[%s2637 + $0x38] sm:$0xff]
        %v2644 = vld [vmem:[%s2637 + $0x48] sm:$0xff]
        %v2645 = vld [vmem:[%s2637 + $0x50] sm:$0xff]
        %v2646 = vld [vmem:[%s2637 + $0x60] sm:$0xff]
        %v2647 = vld [vmem:[%s2637 + $0x68] sm:$0xff]
        %v2648 = vld [vmem:[%s2637 + $0x78] sm:$0xff]
        %v2649 = vld [vmem:[%s2637 + $0x80] sm:$0xff]
        %v2650 = vld [vmem:[%s2637 + $0x90] sm:$0xff]
        %v2651 = vld [vmem:[%s2637 + $0x98] sm:$0xff]
        %s2652 = scalar_lea.vmem %s2, 8
        %v2653 = vld [vmem:[%s2652] sm:$0xf]
        %v2655 = vsel %vm349, %v2638, 0
        %v2658 = vsel %vm349, %v2639, 0
        %v2661 = vsel %vm349, %v2640, 0
        %v2664 = vsel %vm349, %v2641, 0
        %v2667 = vsel %vm349, %v2642, 0
        %v2670 = vsel %vm349, %v2643, 0
        %v2673 = vsel %vm349, %v2644, 0
        %v2676 = vsel %vm349, %v2645, 0
        %v2679 = vsel %vm349, %v2646, 0
        %v2682 = vsel %vm349, %v2647, 0
        %v2685 = vsel %vm349, %v2648, 0
        %v2688 = vsel %vm349, %v2649, 0
        %v2691 = vsel %vm349, %v2650, 0
        %v2694 = vsel %vm349, %v2651, 0
        %v2697 = vsel %vm349, %v2635, 0
        %v2700 = vsel %vm349, %v2636, 0
        %v2703 = vsel %vm398, %v2653, 0
        %2705 = vmatprep.subr.mxu0 0.0
        %v2706 = vand.u32 %v2703, 4294901760
        %2707 = vmatpush1.msra.mxu0 %v2706
        %2708 = vmatprep.subr.mxu0 0.0
        %2709 = vmatpush1.msra.mxu0 0.0
        %2710 = vmatprep.subr.mxu0 0.0
        %2711 = vmatpush1.msra.mxu0 0.0
        %2712 = vmatprep.subr.mxu0 0.0
        %2713 = vmatpush1.msra.mxu0 0.0
        %2714 = vmatprep.subr.mxu0 0.0
        %2715 = vmatpush1.msra.mxu0 0.0
        %2716 = vmatprep.subr.mxu0 0.0
        %2717 = vmatpush1.msra.mxu0 0.0
        %2718 = vmatprep.subr.mxu0 0.0
        %2719 = vmatpush1.msra.mxu0 0.0
        %2720 = vmatprep.subr.mxu0 0.0
        %2721 = vmatpush1.msra.mxu0 0.0
        %2722 = vmatprep.subr.mxu0 0.0
        %2723 = vmatpush1.msra.mxu0 0.0
        %2724 = vmatprep.subr.mxu0 0.0
        %2725 = vmatpush1.msra.mxu0 0.0
        %2726 = vmatprep.subr.mxu0 0.0
        %2727 = vmatpush1.msra.mxu0 0.0
        %2728 = vmatprep.subr.mxu0 0.0
        %2729 = vmatpush1.msra.mxu0 0.0
        %2730 = vmatprep.subr.mxu0 0.0
        %2731 = vmatpush1.msra.mxu0 0.0
        %2732 = vmatprep.subr.mxu0 0.0
        %2733 = vmatpush1.msra.mxu0 0.0
        %2734 = vmatprep.subr.mxu0 0.0
        %2735 = vmatpush1.msra.mxu0 0.0
        %2736 = vmatprep.subr.mxu0 0.0
        %2737 = vmatpush1.msra.mxu0 0.0
        %2738 = vmatprep.subr.mxu0 0.0
        %2739 = vmatpush1.msra.mxu0 0.0
        %2740 = vmatprep.subr.mxu0 0.0
        %2741 = vmatpush1.msra.mxu0 0.0
        %2742 = vmatprep.subr.mxu0 0.0
        %2743 = vmatpush1.msra.mxu0 0.0
        %2744 = vmatprep.subr.mxu0 0.0
        %2745 = vmatpush1.msra.mxu0 0.0
        %2746 = vmatprep.subr.mxu0 0.0
        %2747 = vmatpush1.msra.mxu0 0.0
        %2748 = vmatprep.subr.mxu0 0.0
        %2749 = vmatpush1.msra.mxu0 0.0
        %2750 = vmatprep.subr.mxu0 0.0
        %2751 = vmatpush1.msra.mxu0 0.0
        %2752 = vmatprep.subr.mxu0 0.0
        %2753 = vmatpush1.msra.mxu0 0.0
        %2754 = vmatprep.subr.mxu0 0.0
        %2755 = vmatpush1.msra.mxu0 0.0
        %2756 = vmatprep.subr.mxu0 0.0
        %2757 = vmatpush1.msra.mxu0 0.0
        %2758 = vmatprep.subr.mxu0 0.0
        %2759 = vmatpush1.msra.mxu0 0.0
        %2760 = vmatprep.subr.mxu0 0.0
        %2761 = vmatpush1.msra.mxu0 0.0
        %2762 = vmatprep.subr.mxu0 0.0
        %2763 = vmatpush1.msra.mxu0 0.0
        %2764 = vmatprep.subr.mxu0 0.0
        %2765 = vmatpush1.msra.mxu0 0.0
        %2766 = vmatprep.subr.mxu0 0.0
        %2767 = vmatpush1.msra.mxu0 0.0
        %2768 = vmatprep.subr.mxu0 0.0
        %2769 = vmatpush1.msra.mxu0 0.0
        %2770 = vmatprep.mubr.f32.mxu0 0.0
        %v2771 = vand.u32 %v2655, 4294901760
        %v2772 = vsub.f32 %v2655, %v2771
        %v2773 = vand.u32 %v2772, 4294901760
        %v2774 = vsub.f32 %v2772, %v2773
        %v2775 = vand.u32 %v2774, 4294901760
        %2776 = vmatmul.mubr.f32.gmra.mrb[0].mxu0 %v2775
        %v2777 = vpop.f32.mrb[0].mxu0
        %v2778 = vadd.f32 0.0, %v2777
        %v2779 = vpop.f32.mrb[0].mxu0
        %2780 = vmatprep.mubr.f32.mxu0 0.0
        %v2781 = vand.u32 %v2658, 4294901760
        %v2782 = vsub.f32 %v2658, %v2781
        %v2783 = vand.u32 %v2782, 4294901760
        %v2784 = vsub.f32 %v2782, %v2783
        %v2785 = vand.u32 %v2784, 4294901760
        %2786 = vmatmul.mubr.f32.gmra.mrb[0].mxu0 %v2785
        %v2787 = vpop.f32.mrb[0].mxu0
        %v2788 = vadd.f32 0.0, %v2787
        %v2789 = vpop.f32.mrb[0].mxu0
        %2790 = vmatprep.mubr.f32.mxu0 0.0
        %v2791 = vand.u32 %v2661, 4294901760
        %v2792 = vsub.f32 %v2661, %v2791
        %v2793 = vand.u32 %v2792, 4294901760
        %v2794 = vsub.f32 %v2792, %v2793
        %v2795 = vand.u32 %v2794, 4294901760
        %2796 = vmatmul.mubr.f32.gmra.mrb[0].mxu0 %v2795
        %v2797 = vpop.f32.mrb[0].mxu0
        %v2798 = vadd.f32 0.0, %v2797
        %v2799 = vpop.f32.mrb[0].mxu0
        %2800 = vmatprep.mubr.f32.mxu0 0.0
        %v2801 = vand.u32 %v2664, 4294901760
        %v2802 = vsub.f32 %v2664, %v2801
        %v2803 = vand.u32 %v2802, 4294901760
        %v2804 = vsub.f32 %v2802, %v2803
        %v2805 = vand.u32 %v2804, 4294901760
        %2806 = vmatmul.mubr.f32.gmra.mrb[0].mxu0 %v2805
        %v2807 = vpop.f32.mrb[0].mxu0
        %v2808 = vadd.f32 0.0, %v2807
        %v2809 = vpop.f32.mrb[0].mxu0
        %2810 = vmatprep.mubr.f32.mxu0 0.0
        %v2811 = vand.u32 %v2667, 4294901760
        %v2812 = vsub.f32 %v2667, %v2811
        %v2813 = vand.u32 %v2812, 4294901760
        %v2814 = vsub.f32 %v2812, %v2813
        %v2815 = vand.u32 %v2814, 4294901760
        %2816 = vmatmul.mubr.f32.gmra.mrb[0].mxu0 %v2815
        %v2817 = vpop.f32.mrb[0].mxu0
        %v2818 = vadd.f32 0.0, %v2817
        %v2819 = vpop.f32.mrb[0].mxu0
        %2820 = vmatprep.mubr.f32.mxu0 0.0
        %v2821 = vand.u32 %v2670, 4294901760
        %v2822 = vsub.f32 %v2670, %v2821
        %v2823 = vand.u32 %v2822, 4294901760
        %v2824 = vsub.f32 %v2822, %v2823
        %v2825 = vand.u32 %v2824, 4294901760
        %2826 = vmatmul.mubr.f32.gmra.mrb[0].mxu0 %v2825
        %v2827 = vpop.f32.mrb[0].mxu0
        %v2828 = vadd.f32 0.0, %v2827
        %v2829 = vpop.f32.mrb[0].mxu0
        %2830 = vmatprep.mubr.f32.mxu0 0.0
        %v2831 = vand.u32 %v2673, 4294901760
        %v2832 = vsub.f32 %v2673, %v2831
        %v2833 = vand.u32 %v2832, 4294901760
        %v2834 = vsub.f32 %v2832, %v2833
        %v2835 = vand.u32 %v2834, 4294901760
        %2836 = vmatmul.mubr.f32.gmra.mrb[0].mxu0 %v2835
        %v2837 = vpop.f32.mrb[0].mxu0
        %v2838 = vadd.f32 0.0, %v2837
        %v2839 = vpop.f32.mrb[0].mxu0
        %2840 = vmatprep.mubr.f32.mxu0 0.0
        %v2841 = vand.u32 %v2676, 4294901760
        %v2842 = vsub.f32 %v2676, %v2841
        %v2843 = vand.u32 %v2842, 4294901760
        %v2844 = vsub.f32 %v2842, %v2843
        %v2845 = vand.u32 %v2844, 4294901760
        %2846 = vmatmul.mubr.f32.gmra.mrb[0].mxu0 %v2845
        %v2847 = vpop.f32.mrb[0].mxu0
        %v2848 = vadd.f32 0.0, %v2847
        %v2849 = vpop.f32.mrb[0].mxu0
        %2850 = vmatprep.mubr.f32.mxu0 0.0
        %v2851 = vand.u32 %v2679, 4294901760
        %v2852 = vsub.f32 %v2679, %v2851
        %v2853 = vand.u32 %v2852, 4294901760
        %v2854 = vsub.f32 %v2852, %v2853
        %v2855 = vand.u32 %v2854, 4294901760
        %2856 = vmatmul.mubr.f32.gmra.mrb[0].mxu0 %v2855
        %v2857 = vpop.f32.mrb[0].mxu0
        %v2858 = vadd.f32 0.0, %v2857
        %v2859 = vpop.f32.mrb[0].mxu0
        %2860 = vmatprep.mubr.f32.mxu0 0.0
        %v2861 = vand.u32 %v2682, 4294901760
        %v2862 = vsub.f32 %v2682, %v2861
        %v2863 = vand.u32 %v2862, 4294901760
        %v2864 = vsub.f32 %v2862, %v2863
        %v2865 = vand.u32 %v2864, 4294901760
        %2866 = vmatmul.mubr.f32.gmra.mrb[0].mxu0 %v2865
        %v2867 = vpop.f32.mrb[0].mxu0
        %v2868 = vadd.f32 0.0, %v2867
        %v2869 = vpop.f32.mrb[0].mxu0
        %2870 = vmatprep.mubr.f32.mxu0 0.0
        %v2871 = vand.u32 %v2685, 4294901760
        %v2872 = vsub.f32 %v2685, %v2871
        %v2873 = vand.u32 %v2872, 4294901760
        %v2874 = vsub.f32 %v2872, %v2873
        %v2875 = vand.u32 %v2874, 4294901760
        %2876 = vmatmul.mubr.f32.gmra.mrb[0].mxu0 %v2875
        %v2877 = vpop.f32.mrb[0].mxu0
        %v2878 = vadd.f32 0.0, %v2877
        %v2879 = vpop.f32.mrb[0].mxu0
        %2880 = vmatprep.mubr.f32.mxu0 0.0
        %v2881 = vand.u32 %v2688, 4294901760
        %v2882 = vsub.f32 %v2688, %v2881
        %v2883 = vand.u32 %v2882, 4294901760
        %v2884 = vsub.f32 %v2882, %v2883
        %v2885 = vand.u32 %v2884, 4294901760
        %2886 = vmatmul.mubr.f32.gmra.mrb[0].mxu0 %v2885
        %v2887 = vpop.f32.mrb[0].mxu0
        %v2888 = vadd.f32 0.0, %v2887
        %v2889 = vpop.f32.mrb[0].mxu0
        %2890 = vmatprep.mubr.f32.mxu0 0.0
        %v2891 = vand.u32 %v2691, 4294901760
        %v2892 = vsub.f32 %v2691, %v2891
        %v2893 = vand.u32 %v2892, 4294901760
        %v2894 = vsub.f32 %v2892, %v2893
        %v2895 = vand.u32 %v2894, 4294901760
        %2896 = vmatmul.mubr.f32.gmra.mrb[0].mxu0 %v2895
        %v2897 = vpop.f32.mrb[0].mxu0
        %v2898 = vadd.f32 0.0, %v2897
        %v2899 = vpop.f32.mrb[0].mxu0
        %2900 = vmatprep.mubr.f32.mxu0 0.0
        %v2901 = vand.u32 %v2694, 4294901760
        %v2902 = vsub.f32 %v2694, %v2901
        %v2903 = vand.u32 %v2902, 4294901760
        %v2904 = vsub.f32 %v2902, %v2903
        %v2905 = vand.u32 %v2904, 4294901760
        %2906 = vmatmul.mubr.f32.gmra.mrb[0].mxu0 %v2905
        %v2907 = vpop.f32.mrb[0].mxu0
        %v2908 = vadd.f32 0.0, %v2907
        %v2909 = vpop.f32.mrb[0].mxu0
        %2910 = vmatprep.mubr.f32.mxu0 0.0
        %v2911 = vand.u32 %v2697, 4294901760
        %v2912 = vsub.f32 %v2697, %v2911
        %v2913 = vand.u32 %v2912, 4294901760
        %v2914 = vsub.f32 %v2912, %v2913
        %v2915 = vand.u32 %v2914, 4294901760
        %2916 = vmatmul.mubr.f32.gmra.mrb[0].mxu0 %v2915
        %v2917 = vpop.f32.mrb[0].mxu0
        %v2918 = vadd.f32 0.0, %v2917
        %v2919 = vpop.f32.mrb[0].mxu0
        %2920 = vmatprep.mubr.f32.mxu0 0.0
        %v2921 = vand.u32 %v2700, 4294901760
        %v2922 = vsub.f32 %v2700, %v2921
        %v2923 = vand.u32 %v2922, 4294901760
        %v2924 = vsub.f32 %v2922, %v2923
        %v2925 = vand.u32 %v2924, 4294901760
        %2926 = vmatmul.mubr.f32.gmra.mrb[0].mxu0 %v2925
        %v2927 = vpop.f32.mrb[0].mxu0
        %v2928 = vadd.f32 0.0, %v2927
        %v2929 = vpop.f32.mrb[0].mxu0
        %2930 = vdwg.mxu0
        %2931 = vmatprep.subr.mxu0 0.0
        %v2932 = vand.u32 %v2703, 4294901760
        %v2933 = vsub.f32 %v2703, %v2932
        %v2934 = vand.u32 %v2933, 4294901760
        %v2935 = vsub.f32 %v2933, %v2934
        %v2936 = vand.u32 %v2935, 4294901760
        %2937 = vmatpush1.msra.mxu0 %v2936
        %2938 = vmatprep.subr.mxu0 0.0
        %2939 = vmatpush1.msra.mxu0 0.0
        %2940 = vmatprep.subr.mxu0 0.0
        %2941 = vmatpush1.msra.mxu0 0.0
        %2942 = vmatprep.subr.mxu0 0.0
        %2943 = vmatpush1.msra.mxu0 0.0
        %2944 = vmatprep.subr.mxu0 0.0
        %2945 = vmatpush1.msra.mxu0 0.0
        %2946 = vmatprep.subr.mxu0 0.0
        %2947 = vmatpush1.msra.mxu0 0.0
        %2948 = vmatprep.subr.mxu0 0.0
        %2949 = vmatpush1.msra.mxu0 0.0
        %2950 = vmatprep.subr.mxu0 0.0
        %2951 = vmatpush1.msra.mxu0 0.0
        %2952 = vmatprep.subr.mxu0 0.0
        %2953 = vmatpush1.msra.mxu0 0.0
        %2954 = vmatprep.subr.mxu0 0.0
        %2955 = vmatpush1.msra.mxu0 0.0
        %2956 = vmatprep.subr.mxu0 0.0
        %2957 = vmatpush1.msra.mxu0 0.0
        %2958 = vmatprep.subr.mxu0 0.0
        %2959 = vmatpush1.msra.mxu0 0.0
        %2960 = vmatprep.subr.mxu0 0.0
        %2961 = vmatpush1.msra.mxu0 0.0
        %2962 = vmatprep.subr.mxu0 0.0
        %2963 = vmatpush1.msra.mxu0 0.0
        %2964 = vmatprep.subr.mxu0 0.0
        %2965 = vmatpush1.msra.mxu0 0.0
        %2966 = vmatprep.subr.mxu0 0.0
        %2967 = vmatpush1.msra.mxu0 0.0
        %2968 = vmatprep.subr.mxu0 0.0
        %2969 = vmatpush1.msra.mxu0 0.0
        %2970 = vmatprep.subr.mxu0 0.0
        %2971 = vmatpush1.msra.mxu0 0.0
        %2972 = vmatprep.subr.mxu0 0.0
        %2973 = vmatpush1.msra.mxu0 0.0
        %2974 = vmatprep.subr.mxu0 0.0
        %2975 = vmatpush1.msra.mxu0 0.0
        %2976 = vmatprep.subr.mxu0 0.0
        %2977 = vmatpush1.msra.mxu0 0.0
        %2978 = vmatprep.subr.mxu0 0.0
        %2979 = vmatpush1.msra.mxu0 0.0
        %2980 = vmatprep.subr.mxu0 0.0
        %2981 = vmatpush1.msra.mxu0 0.0
        %2982 = vmatprep.subr.mxu0 0.0
        %2983 = vmatpush1.msra.mxu0 0.0
        %2984 = vmatprep.subr.mxu0 0.0
        %2985 = vmatpush1.msra.mxu0 0.0
        %2986 = vmatprep.subr.mxu0 0.0
        %2987 = vmatpush1.msra.mxu0 0.0
        %2988 = vmatprep.subr.mxu0 0.0
        %2989 = vmatpush1.msra.mxu0 0.0
        %2990 = vmatprep.subr.mxu0 0.0
        %2991 = vmatpush1.msra.mxu0 0.0
        %2992 = vmatprep.subr.mxu0 0.0
        %2993 = vmatpush1.msra.mxu0 0.0
        %2994 = vmatprep.subr.mxu0 0.0
        %2995 = vmatpush1.msra.mxu0 0.0
        %2996 = vmatprep.subr.mxu0 0.0
        %2997 = vmatpush1.msra.mxu0 0.0
        %2998 = vmatprep.subr.mxu0 0.0
        %2999 = vmatpush1.msra.mxu0 0.0
        %3000 = vmatprep.mubr.f32.mxu0 0.0
        %v3001 = vand.u32 %v2655, 4294901760
        %3002 = vmatmul.mubr.f32.gmra.mrb[0].mxu0 %v3001
        %v3003 = vpop.f32.mrb[0].mxu0
        %v3004 = vadd.f32 %v2778, %v3003
        %v3005 = vpop.f32.mrb[0].mxu0
        %3006 = vmatprep.mubr.f32.mxu0 0.0
        %v3007 = vand.u32 %v2658, 4294901760
        %3008 = vmatmul.mubr.f32.gmra.mrb[0].mxu0 %v3007
        %v3009 = vpop.f32.mrb[0].mxu0
        %v3010 = vadd.f32 %v2788, %v3009
        %v3011 = vpop.f32.mrb[0].mxu0
        %3012 = vmatprep.mubr.f32.mxu0 0.0
        %v3013 = vand.u32 %v2661, 4294901760
        %3014 = vmatmul.mubr.f32.gmra.mrb[0].mxu0 %v3013
        %v3015 = vpop.f32.mrb[0].mxu0
        %v3016 = vadd.f32 %v2798, %v3015
        %v3017 = vpop.f32.mrb[0].mxu0
        %3018 = vmatprep.mubr.f32.mxu0 0.0
        %v3019 = vand.u32 %v2664, 4294901760
        %3020 = vmatmul.mubr.f32.gmra.mrb[0].mxu0 %v3019
        %v3021 = vpop.f32.mrb[0].mxu0
        %v3022 = vadd.f32 %v2808, %v3021
        %v3023 = vpop.f32.mrb[0].mxu0
        %3024 = vmatprep.mubr.f32.mxu0 0.0
        %v3025 = vand.u32 %v2667, 4294901760
        %3026 = vmatmul.mubr.f32.gmra.mrb[0].mxu0 %v3025
        %v3027 = vpop.f32.mrb[0].mxu0
        %v3028 = vadd.f32 %v2818, %v3027
        %v3029 = vpop.f32.mrb[0].mxu0
        %3030 = vmatprep.mubr.f32.mxu0 0.0
        %v3031 = vand.u32 %v2670, 4294901760
        %3032 = vmatmul.mubr.f32.gmra.mrb[0].mxu0 %v3031
        %v3033 = vpop.f32.mrb[0].mxu0
        %v3034 = vadd.f32 %v2828, %v3033
        %v3035 = vpop.f32.mrb[0].mxu0
        %3036 = vmatprep.mubr.f32.mxu0 0.0
        %v3037 = vand.u32 %v2673, 4294901760
        %3038 = vmatmul.mubr.f32.gmra.mrb[0].mxu0 %v3037
        %v3039 = vpop.f32.mrb[0].mxu0
        %v3040 = vadd.f32 %v2838, %v3039
        %v3041 = vpop.f32.mrb[0].mxu0
        %3042 = vmatprep.mubr.f32.mxu0 0.0
        %v3043 = vand.u32 %v2676, 4294901760
        %3044 = vmatmul.mubr.f32.gmra.mrb[0].mxu0 %v3043
        %v3045 = vpop.f32.mrb[0].mxu0
        %v3046 = vadd.f32 %v2848, %v3045
        %v3047 = vpop.f32.mrb[0].mxu0
        %3048 = vmatprep.mubr.f32.mxu0 0.0
        %v3049 = vand.u32 %v2679, 4294901760
        %3050 = vmatmul.mubr.f32.gmra.mrb[0].mxu0 %v3049
        %v3051 = vpop.f32.mrb[0].mxu0
        %v3052 = vadd.f32 %v2858, %v3051
        %v3053 = vpop.f32.mrb[0].mxu0
        %3054 = vmatprep.mubr.f32.mxu0 0.0
        %v3055 = vand.u32 %v2682, 4294901760
        %3056 = vmatmul.mubr.f32.gmra.mrb[0].mxu0 %v3055
        %v3057 = vpop.f32.mrb[0].mxu0
        %v3058 = vadd.f32 %v2868, %v3057
        %v3059 = vpop.f32.mrb[0].mxu0
        %3060 = vmatprep.mubr.f32.mxu0 0.0
        %v3061 = vand.u32 %v2685, 4294901760
        %3062 = vmatmul.mubr.f32.gmra.mrb[0].mxu0 %v3061
        %v3063 = vpop.f32.mrb[0].mxu0
        %v3064 = vadd.f32 %v2878, %v3063
        %v3065 = vpop.f32.mrb[0].mxu0
        %3066 = vmatprep.mubr.f32.mxu0 0.0
        %v3067 = vand.u32 %v2688, 4294901760
        %3068 = vmatmul.mubr.f32.gmra.mrb[0].mxu0 %v3067
        %v3069 = vpop.f32.mrb[0].mxu0
        %v3070 = vadd.f32 %v2888, %v3069
        %v3071 = vpop.f32.mrb[0].mxu0
        %3072 = vmatprep.mubr.f32.mxu0 0.0
        %v3073 = vand.u32 %v2691, 4294901760
        %3074 = vmatmul.mubr.f32.gmra.mrb[0].mxu0 %v3073
        %v3075 = vpop.f32.mrb[0].mxu0
        %v3076 = vadd.f32 %v2898, %v3075
        %v3077 = vpop.f32.mrb[0].mxu0
        %3078 = vmatprep.mubr.f32.mxu0 0.0
        %v3079 = vand.u32 %v2694, 4294901760
        %3080 = vmatmul.mubr.f32.gmra.mrb[0].mxu0 %v3079
        %v3081 = vpop.f32.mrb[0].mxu0
        %v3082 = vadd.f32 %v2908, %v3081
        %v3083 = vpop.f32.mrb[0].mxu0
        %3084 = vmatprep.mubr.f32.mxu0 0.0
        %v3085 = vand.u32 %v2697, 4294901760
        %3086 = vmatmul.mubr.f32.gmra.mrb[0].mxu0 %v3085
        %v3087 = vpop.f32.mrb[0].mxu0
        %v3088 = vadd.f32 %v2918, %v3087
        %v3089 = vpop.f32.mrb[0].mxu0
        %3090 = vmatprep.mubr.f32.mxu0 0.0
        %v3091 = vand.u32 %v2700, 4294901760
        %3092 = vmatmul.mubr.f32.gmra.mrb[0].mxu0 %v3091
        %v3093 = vpop.f32.mrb[0].mxu0
        %v3094 = vadd.f32 %v2928, %v3093
        %v3095 = vpop.f32.mrb[0].mxu0
        %3096 = vdwg.mxu0
        %3097 = vmatprep.subr.mxu0 0.0
        %v3098 = vand.u32 %v2703, 4294901760
        %v3099 = vsub.f32 %v2703, %v3098
        %3100 = vmatpush1.msra.mxu0 %v3099
        %3101 = vmatprep.subr.mxu0 0.0
        %3102 = vmatpush1.msra.mxu0 0.0
        %3103 = vmatprep.subr.mxu0 0.0
        %3104 = vmatpush1.msra.mxu0 0.0
        %3105 = vmatprep.subr.mxu0 0.0
        %3106 = vmatpush1.msra.mxu0 0.0
        %3107 = vmatprep.subr.mxu0 0.0
        %3108 = vmatpush1.msra.mxu0 0.0
        %3109 = vmatprep.subr.mxu0 0.0
        %3110 = vmatpush1.msra.mxu0 0.0
        %3111 = vmatprep.subr.mxu0 0.0
        %3112 = vmatpush1.msra.mxu0 0.0
        %3113 = vmatprep.subr.mxu0 0.0
        %3114 = vmatpush1.msra.mxu0 0.0
        %3115 = vmatprep.subr.mxu0 0.0
        %3116 = vmatpush1.msra.mxu0 0.0
        %3117 = vmatprep.subr.mxu0 0.0
        %3118 = vmatpush1.msra.mxu0 0.0
        %3119 = vmatprep.subr.mxu0 0.0
        %3120 = vmatpush1.msra.mxu0 0.0
        %3121 = vmatprep.subr.mxu0 0.0
        %3122 = vmatpush1.msra.mxu0 0.0
        %3123 = vmatprep.subr.mxu0 0.0
        %3124 = vmatpush1.msra.mxu0 0.0
        %3125 = vmatprep.subr.mxu0 0.0
        %3126 = vmatpush1.msra.mxu0 0.0
        %3127 = vmatprep.subr.mxu0 0.0
        %3128 = vmatpush1.msra.mxu0 0.0
        %3129 = vmatprep.subr.mxu0 0.0
        %3130 = vmatpush1.msra.mxu0 0.0
        %3131 = vmatprep.subr.mxu0 0.0
        %3132 = vmatpush1.msra.mxu0 0.0
        %3133 = vmatprep.subr.mxu0 0.0
        %3134 = vmatpush1.msra.mxu0 0.0
        %3135 = vmatprep.subr.mxu0 0.0
        %3136 = vmatpush1.msra.mxu0 0.0
        %3137 = vmatprep.subr.mxu0 0.0
        %3138 = vmatpush1.msra.mxu0 0.0
        %3139 = vmatprep.subr.mxu0 0.0
        %3140 = vmatpush1.msra.mxu0 0.0
        %3141 = vmatprep.subr.mxu0 0.0
        %3142 = vmatpush1.msra.mxu0 0.0
        %3143 = vmatprep.subr.mxu0 0.0
        %3144 = vmatpush1.msra.mxu0 0.0
        %3145 = vmatprep.subr.mxu0 0.0
        %3146 = vmatpush1.msra.mxu0 0.0
        %3147 = vmatprep.subr.mxu0 0.0
        %3148 = vmatpush1.msra.mxu0 0.0
        %3149 = vmatprep.subr.mxu0 0.0
        %3150 = vmatpush1.msra.mxu0 0.0
        %3151 = vmatprep.subr.mxu0 0.0
        %3152 = vmatpush1.msra.mxu0 0.0
        %3153 = vmatprep.subr.mxu0 0.0
        %3154 = vmatpush1.msra.mxu0 0.0
        %3155 = vmatprep.subr.mxu0 0.0
        %3156 = vmatpush1.msra.mxu0 0.0
        %3157 = vmatprep.subr.mxu0 0.0
        %3158 = vmatpush1.msra.mxu0 0.0
        %3159 = vmatprep.subr.mxu0 0.0
        %3160 = vmatpush1.msra.mxu0 0.0
        %3161 = vmatprep.subr.mxu0 0.0
        %3162 = vmatpush1.msra.mxu0 0.0
        %3163 = vmatprep.mubr.f32.mxu0 0.0
        %v3164 = vand.u32 %v2655, 4294901760
        %v3165 = vsub.f32 %v2655, %v3164
        %3166 = vmatmul.mubr.f32.gmra.mrb[0].mxu0 %v3165
        %v3167 = vpop.f32.mrb[0].mxu0
        %v3168 = vadd.f32 %v3004, %v3167
        %v3169 = vpop.f32.mrb[0].mxu0
        %3170 = vmatprep.mubr.f32.mxu0 0.0
        %v3171 = vand.u32 %v2658, 4294901760
        %v3172 = vsub.f32 %v2658, %v3171
        %3173 = vmatmul.mubr.f32.gmra.mrb[0].mxu0 %v3172
        %v3174 = vpop.f32.mrb[0].mxu0
        %v3175 = vadd.f32 %v3010, %v3174
        %v3176 = vpop.f32.mrb[0].mxu0
        %3177 = vmatprep.mubr.f32.mxu0 0.0
        %v3178 = vand.u32 %v2661, 4294901760
        %v3179 = vsub.f32 %v2661, %v3178
        %3180 = vmatmul.mubr.f32.gmra.mrb[0].mxu0 %v3179
        %v3181 = vpop.f32.mrb[0].mxu0
        %v3182 = vadd.f32 %v3016, %v3181
        %v3183 = vpop.f32.mrb[0].mxu0
        %3184 = vmatprep.mubr.f32.mxu0 0.0
        %v3185 = vand.u32 %v2664, 4294901760
        %v3186 = vsub.f32 %v2664, %v3185
        %3187 = vmatmul.mubr.f32.gmra.mrb[0].mxu0 %v3186
        %v3188 = vpop.f32.mrb[0].mxu0
        %v3189 = vadd.f32 %v3022, %v3188
        %v3190 = vpop.f32.mrb[0].mxu0
        %3191 = vmatprep.mubr.f32.mxu0 0.0
        %v3192 = vand.u32 %v2667, 4294901760
        %v3193 = vsub.f32 %v2667, %v3192
        %3194 = vmatmul.mubr.f32.gmra.mrb[0].mxu0 %v3193
        %v3195 = vpop.f32.mrb[0].mxu0
        %v3196 = vadd.f32 %v3028, %v3195
        %v3197 = vpop.f32.mrb[0].mxu0
        %3198 = vmatprep.mubr.f32.mxu0 0.0
        %v3199 = vand.u32 %v2670, 4294901760
        %v3200 = vsub.f32 %v2670, %v3199
        %3201 = vmatmul.mubr.f32.gmra.mrb[0].mxu0 %v3200
        %v3202 = vpop.f32.mrb[0].mxu0
        %v3203 = vadd.f32 %v3034, %v3202
        %v3204 = vpop.f32.mrb[0].mxu0
        %3205 = vmatprep.mubr.f32.mxu0 0.0
        %v3206 = vand.u32 %v2673, 4294901760
        %v3207 = vsub.f32 %v2673, %v3206
        %3208 = vmatmul.mubr.f32.gmra.mrb[0].mxu0 %v3207
        %v3209 = vpop.f32.mrb[0].mxu0
        %v3210 = vadd.f32 %v3040, %v3209
        %v3211 = vpop.f32.mrb[0].mxu0
        %3212 = vmatprep.mubr.f32.mxu0 0.0
        %v3213 = vand.u32 %v2676, 4294901760
        %v3214 = vsub.f32 %v2676, %v3213
        %3215 = vmatmul.mubr.f32.gmra.mrb[0].mxu0 %v3214
        %v3216 = vpop.f32.mrb[0].mxu0
        %v3217 = vadd.f32 %v3046, %v3216
        %v3218 = vpop.f32.mrb[0].mxu0
        %3219 = vmatprep.mubr.f32.mxu0 0.0
        %v3220 = vand.u32 %v2679, 4294901760
        %v3221 = vsub.f32 %v2679, %v3220
        %3222 = vmatmul.mubr.f32.gmra.mrb[0].mxu0 %v3221
        %v3223 = vpop.f32.mrb[0].mxu0
        %v3224 = vadd.f32 %v3052, %v3223
        %v3225 = vpop.f32.mrb[0].mxu0
        %3226 = vmatprep.mubr.f32.mxu0 0.0
        %v3227 = vand.u32 %v2682, 4294901760
        %v3228 = vsub.f32 %v2682, %v3227
        %3229 = vmatmul.mubr.f32.gmra.mrb[0].mxu0 %v3228
        %v3230 = vpop.f32.mrb[0].mxu0
        %v3231 = vadd.f32 %v3058, %v3230
        %v3232 = vpop.f32.mrb[0].mxu0
        %3233 = vmatprep.mubr.f32.mxu0 0.0
        %v3234 = vand.u32 %v2685, 4294901760
        %v3235 = vsub.f32 %v2685, %v3234
        %3236 = vmatmul.mubr.f32.gmra.mrb[0].mxu0 %v3235
        %v3237 = vpop.f32.mrb[0].mxu0
        %v3238 = vadd.f32 %v3064, %v3237
        %v3239 = vpop.f32.mrb[0].mxu0
        %3240 = vmatprep.mubr.f32.mxu0 0.0
        %v3241 = vand.u32 %v2688, 4294901760
        %v3242 = vsub.f32 %v2688, %v3241
        %3243 = vmatmul.mubr.f32.gmra.mrb[0].mxu0 %v3242
        %v3244 = vpop.f32.mrb[0].mxu0
        %v3245 = vadd.f32 %v3070, %v3244
        %v3246 = vpop.f32.mrb[0].mxu0
        %3247 = vmatprep.mubr.f32.mxu0 0.0
        %v3248 = vand.u32 %v2691, 4294901760
        %v3249 = vsub.f32 %v2691, %v3248
        %3250 = vmatmul.mubr.f32.gmra.mrb[0].mxu0 %v3249
        %v3251 = vpop.f32.mrb[0].mxu0
        %v3252 = vadd.f32 %v3076, %v3251
        %v3253 = vpop.f32.mrb[0].mxu0
        %3254 = vmatprep.mubr.f32.mxu0 0.0
        %v3255 = vand.u32 %v2694, 4294901760
        %v3256 = vsub.f32 %v2694, %v3255
        %3257 = vmatmul.mubr.f32.gmra.mrb[0].mxu0 %v3256
        %v3258 = vpop.f32.mrb[0].mxu0
        %v3259 = vadd.f32 %v3082, %v3258
        %v3260 = vpop.f32.mrb[0].mxu0
        %3261 = vmatprep.mubr.f32.mxu0 0.0
        %v3262 = vand.u32 %v2697, 4294901760
        %v3263 = vsub.f32 %v2697, %v3262
        %3264 = vmatmul.mubr.f32.gmra.mrb[0].mxu0 %v3263
        %v3265 = vpop.f32.mrb[0].mxu0
        %v3266 = vadd.f32 %v3088, %v3265
        %v3267 = vpop.f32.mrb[0].mxu0
        %3268 = vmatprep.mubr.f32.mxu0 0.0
        %v3269 = vand.u32 %v2700, 4294901760
        %v3270 = vsub.f32 %v2700, %v3269
        %3271 = vmatmul.mubr.f32.gmra.mrb[0].mxu0 %v3270
        %v3272 = vpop.f32.mrb[0].mxu0
        %v3273 = vadd.f32 %v3094, %v3272
        %v3274 = vpop.f32.mrb[0].mxu0
        %3275 = vdwg.mxu0
        %3276 = vmatprep.subr.mxu0 0.0
        %v3277 = vand.u32 %v2703, 4294901760
        %3278 = vmatpush1.msra.mxu0 %v3277
        %3279 = vmatprep.subr.mxu0 0.0
        %3280 = vmatpush1.msra.mxu0 0.0
        %3281 = vmatprep.subr.mxu0 0.0
        %3282 = vmatpush1.msra.mxu0 0.0
        %3283 = vmatprep.subr.mxu0 0.0
        %3284 = vmatpush1.msra.mxu0 0.0
        %3285 = vmatprep.subr.mxu0 0.0
        %3286 = vmatpush1.msra.mxu0 0.0
        %3287 = vmatprep.subr.mxu0 0.0
        %3288 = vmatpush1.msra.mxu0 0.0
        %3289 = vmatprep.subr.mxu0 0.0
        %3290 = vmatpush1.msra.mxu0 0.0
        %3291 = vmatprep.subr.mxu0 0.0
        %3292 = vmatpush1.msra.mxu0 0.0
        %3293 = vmatprep.subr.mxu0 0.0
        %3294 = vmatpush1.msra.mxu0 0.0
        %3295 = vmatprep.subr.mxu0 0.0
        %3296 = vmatpush1.msra.mxu0 0.0
        %3297 = vmatprep.subr.mxu0 0.0
        %3298 = vmatpush1.msra.mxu0 0.0
        %3299 = vmatprep.subr.mxu0 0.0
        %3300 = vmatpush1.msra.mxu0 0.0
        %3301 = vmatprep.subr.mxu0 0.0
        %3302 = vmatpush1.msra.mxu0 0.0
        %3303 = vmatprep.subr.mxu0 0.0
        %3304 = vmatpush1.msra.mxu0 0.0
        %3305 = vmatprep.subr.mxu0 0.0
        %3306 = vmatpush1.msra.mxu0 0.0
        %3307 = vmatprep.subr.mxu0 0.0
        %3308 = vmatpush1.msra.mxu0 0.0
        %3309 = vmatprep.subr.mxu0 0.0
        %3310 = vmatpush1.msra.mxu0 0.0
        %3311 = vmatprep.subr.mxu0 0.0
        %3312 = vmatpush1.msra.mxu0 0.0
        %3313 = vmatprep.subr.mxu0 0.0
        %3314 = vmatpush1.msra.mxu0 0.0
        %3315 = vmatprep.subr.mxu0 0.0
        %3316 = vmatpush1.msra.mxu0 0.0
        %3317 = vmatprep.subr.mxu0 0.0
        %3318 = vmatpush1.msra.mxu0 0.0
        %3319 = vmatprep.subr.mxu0 0.0
        %3320 = vmatpush1.msra.mxu0 0.0
        %3321 = vmatprep.subr.mxu0 0.0
        %3322 = vmatpush1.msra.mxu0 0.0
        %3323 = vmatprep.subr.mxu0 0.0
        %3324 = vmatpush1.msra.mxu0 0.0
        %3325 = vmatprep.subr.mxu0 0.0
        %3326 = vmatpush1.msra.mxu0 0.0
        %3327 = vmatprep.subr.mxu0 0.0
        %3328 = vmatpush1.msra.mxu0 0.0
        %3329 = vmatprep.subr.mxu0 0.0
        %3330 = vmatpush1.msra.mxu0 0.0
        %3331 = vmatprep.subr.mxu0 0.0
        %3332 = vmatpush1.msra.mxu0 0.0
        %3333 = vmatprep.subr.mxu0 0.0
        %3334 = vmatpush1.msra.mxu0 0.0
        %3335 = vmatprep.subr.mxu0 0.0
        %3336 = vmatpush1.msra.mxu0 0.0
        %3337 = vmatprep.subr.mxu0 0.0
        %3338 = vmatpush1.msra.mxu0 0.0
        %3339 = vmatprep.subr.mxu0 0.0
        %3340 = vmatpush1.msra.mxu0 0.0
        %3341 = vmatprep.mubr.f32.mxu0 0.0
        %v3342 = vand.u32 %v2655, 4294901760
        %v3343 = vsub.f32 %v2655, %v3342
        %v3344 = vand.u32 %v3343, 4294901760
        %3345 = vmatmul.mubr.f32.gmra.mrb[0].mxu0 %v3344
        %v3346 = vpop.f32.mrb[0].mxu0
        %v3347 = vadd.f32 %v3168, %v3346
        %v3348 = vpop.f32.mrb[0].mxu0
        %3349 = vmatprep.mubr.f32.mxu0 0.0
        %v3350 = vand.u32 %v2658, 4294901760
        %v3351 = vsub.f32 %v2658, %v3350
        %v3352 = vand.u32 %v3351, 4294901760
        %3353 = vmatmul.mubr.f32.gmra.mrb[0].mxu0 %v3352
        %v3354 = vpop.f32.mrb[0].mxu0
        %v3355 = vadd.f32 %v3175, %v3354
        %v3356 = vpop.f32.mrb[0].mxu0
        %3357 = vmatprep.mubr.f32.mxu0 0.0
        %v3358 = vand.u32 %v2661, 4294901760
        %v3359 = vsub.f32 %v2661, %v3358
        %v3360 = vand.u32 %v3359, 4294901760
        %3361 = vmatmul.mubr.f32.gmra.mrb[0].mxu0 %v3360
        %v3362 = vpop.f32.mrb[0].mxu0
        %v3363 = vadd.f32 %v3182, %v3362
        %v3364 = vpop.f32.mrb[0].mxu0
        %3365 = vmatprep.mubr.f32.mxu0 0.0
        %v3366 = vand.u32 %v2664, 4294901760
        %v3367 = vsub.f32 %v2664, %v3366
        %v3368 = vand.u32 %v3367, 4294901760
        %3369 = vmatmul.mubr.f32.gmra.mrb[0].mxu0 %v3368
        %v3370 = vpop.f32.mrb[0].mxu0
        %v3371 = vadd.f32 %v3189, %v3370
        %v3372 = vpop.f32.mrb[0].mxu0
        %3373 = vmatprep.mubr.f32.mxu0 0.0
        %v3374 = vand.u32 %v2667, 4294901760
        %v3375 = vsub.f32 %v2667, %v3374
        %v3376 = vand.u32 %v3375, 4294901760
        %3377 = vmatmul.mubr.f32.gmra.mrb[0].mxu0 %v3376
        %v3378 = vpop.f32.mrb[0].mxu0
        %v3379 = vadd.f32 %v3196, %v3378
        %v3380 = vpop.f32.mrb[0].mxu0
        %3381 = vmatprep.mubr.f32.mxu0 0.0
        %v3382 = vand.u32 %v2670, 4294901760
        %v3383 = vsub.f32 %v2670, %v3382
        %v3384 = vand.u32 %v3383, 4294901760
        %3385 = vmatmul.mubr.f32.gmra.mrb[0].mxu0 %v3384
        %v3386 = vpop.f32.mrb[0].mxu0
        %v3387 = vadd.f32 %v3203, %v3386
        %v3388 = vpop.f32.mrb[0].mxu0
        %3389 = vmatprep.mubr.f32.mxu0 0.0
        %v3390 = vand.u32 %v2673, 4294901760
        %v3391 = vsub.f32 %v2673, %v3390
        %v3392 = vand.u32 %v3391, 4294901760
        %3393 = vmatmul.mubr.f32.gmra.mrb[0].mxu0 %v3392
        %v3394 = vpop.f32.mrb[0].mxu0
        %v3395 = vadd.f32 %v3210, %v3394
        %v3396 = vpop.f32.mrb[0].mxu0
        %3397 = vmatprep.mubr.f32.mxu0 0.0
        %v3398 = vand.u32 %v2676, 4294901760
        %v3399 = vsub.f32 %v2676, %v3398
        %v3400 = vand.u32 %v3399, 4294901760
        %3401 = vmatmul.mubr.f32.gmra.mrb[0].mxu0 %v3400
        %v3402 = vpop.f32.mrb[0].mxu0
        %v3403 = vadd.f32 %v3217, %v3402
        %v3404 = vpop.f32.mrb[0].mxu0
        %3405 = vmatprep.mubr.f32.mxu0 0.0
        %v3406 = vand.u32 %v2679, 4294901760
        %v3407 = vsub.f32 %v2679, %v3406
        %v3408 = vand.u32 %v3407, 4294901760
        %3409 = vmatmul.mubr.f32.gmra.mrb[0].mxu0 %v3408
        %v3410 = vpop.f32.mrb[0].mxu0
        %v3411 = vadd.f32 %v3224, %v3410
        %v3412 = vpop.f32.mrb[0].mxu0
        %3413 = vmatprep.mubr.f32.mxu0 0.0
        %v3414 = vand.u32 %v2682, 4294901760
        %v3415 = vsub.f32 %v2682, %v3414
        %v3416 = vand.u32 %v3415, 4294901760
        %3417 = vmatmul.mubr.f32.gmra.mrb[0].mxu0 %v3416
        %v3418 = vpop.f32.mrb[0].mxu0
        %v3419 = vadd.f32 %v3231, %v3418
        %v3420 = vpop.f32.mrb[0].mxu0
        %3421 = vmatprep.mubr.f32.mxu0 0.0
        %v3422 = vand.u32 %v2685, 4294901760
        %v3423 = vsub.f32 %v2685, %v3422
        %v3424 = vand.u32 %v3423, 4294901760
        %3425 = vmatmul.mubr.f32.gmra.mrb[0].mxu0 %v3424
        %v3426 = vpop.f32.mrb[0].mxu0
        %v3427 = vadd.f32 %v3238, %v3426
        %v3428 = vpop.f32.mrb[0].mxu0
        %3429 = vmatprep.mubr.f32.mxu0 0.0
        %v3430 = vand.u32 %v2688, 4294901760
        %v3431 = vsub.f32 %v2688, %v3430
        %v3432 = vand.u32 %v3431, 4294901760
        %3433 = vmatmul.mubr.f32.gmra.mrb[0].mxu0 %v3432
        %v3434 = vpop.f32.mrb[0].mxu0
        %v3435 = vadd.f32 %v3245, %v3434
        %v3436 = vpop.f32.mrb[0].mxu0
        %3437 = vmatprep.mubr.f32.mxu0 0.0
        %v3438 = vand.u32 %v2691, 4294901760
        %v3439 = vsub.f32 %v2691, %v3438
        %v3440 = vand.u32 %v3439, 4294901760
        %3441 = vmatmul.mubr.f32.gmra.mrb[0].mxu0 %v3440
        %v3442 = vpop.f32.mrb[0].mxu0
        %v3443 = vadd.f32 %v3252, %v3442
        %v3444 = vpop.f32.mrb[0].mxu0
        %3445 = vmatprep.mubr.f32.mxu0 0.0
        %v3446 = vand.u32 %v2694, 4294901760
        %v3447 = vsub.f32 %v2694, %v3446
        %v3448 = vand.u32 %v3447, 4294901760
        %3449 = vmatmul.mubr.f32.gmra.mrb[0].mxu0 %v3448
        %v3450 = vpop.f32.mrb[0].mxu0
        %v3451 = vadd.f32 %v3259, %v3450
        %v3452 = vpop.f32.mrb[0].mxu0
        %3453 = vmatprep.mubr.f32.mxu0 0.0
        %v3454 = vand.u32 %v2697, 4294901760
        %v3455 = vsub.f32 %v2697, %v3454
        %v3456 = vand.u32 %v3455, 4294901760
        %3457 = vmatmul.mubr.f32.gmra.mrb[0].mxu0 %v3456
        %v3458 = vpop.f32.mrb[0].mxu0
        %v3459 = vadd.f32 %v3266, %v3458
        %v3460 = vpop.f32.mrb[0].mxu0
        %3461 = vmatprep.mubr.f32.mxu0 0.0
        %v3462 = vand.u32 %v2700, 4294901760
        %v3463 = vsub.f32 %v2700, %v3462
        %v3464 = vand.u32 %v3463, 4294901760
        %3465 = vmatmul.mubr.f32.gmra.mrb[0].mxu0 %v3464
        %v3466 = vpop.f32.mrb[0].mxu0
        %v3467 = vadd.f32 %v3273, %v3466
        %v3468 = vpop.f32.mrb[0].mxu0
        %3469 = vdwg.mxu0
        %3470 = vmatprep.subr.mxu0 0.0
        %v3471 = vand.u32 %v2703, 4294901760
        %v3472 = vsub.f32 %v2703, %v3471
        %v3473 = vand.u32 %v3472, 4294901760
        %3474 = vmatpush1.msra.mxu0 %v3473
        %3475 = vmatprep.subr.mxu0 0.0
        %3476 = vmatpush1.msra.mxu0 0.0
        %3477 = vmatprep.subr.mxu0 0.0
        %3478 = vmatpush1.msra.mxu0 0.0
        %3479 = vmatprep.subr.mxu0 0.0
        %3480 = vmatpush1.msra.mxu0 0.0
        %3481 = vmatprep.subr.mxu0 0.0
        %3482 = vmatpush1.msra.mxu0 0.0
        %3483 = vmatprep.subr.mxu0 0.0
        %3484 = vmatpush1.msra.mxu0 0.0
        %3485 = vmatprep.subr.mxu0 0.0
        %3486 = vmatpush1.msra.mxu0 0.0
        %3487 = vmatprep.subr.mxu0 0.0
        %3488 = vmatpush1.msra.mxu0 0.0
        %3489 = vmatprep.subr.mxu0 0.0
        %3490 = vmatpush1.msra.mxu0 0.0
        %3491 = vmatprep.subr.mxu0 0.0
        %3492 = vmatpush1.msra.mxu0 0.0
        %3493 = vmatprep.subr.mxu0 0.0
        %3494 = vmatpush1.msra.mxu0 0.0
        %3495 = vmatprep.subr.mxu0 0.0
        %3496 = vmatpush1.msra.mxu0 0.0
        %3497 = vmatprep.subr.mxu0 0.0
        %3498 = vmatpush1.msra.mxu0 0.0
        %3499 = vmatprep.subr.mxu0 0.0
        %3500 = vmatpush1.msra.mxu0 0.0
        %3501 = vmatprep.subr.mxu0 0.0
        %3502 = vmatpush1.msra.mxu0 0.0
        %3503 = vmatprep.subr.mxu0 0.0
        %3504 = vmatpush1.msra.mxu0 0.0
        %3505 = vmatprep.subr.mxu0 0.0
        %3506 = vmatpush1.msra.mxu0 0.0
        %3507 = vmatprep.subr.mxu0 0.0
        %3508 = vmatpush1.msra.mxu0 0.0
        %3509 = vmatprep.subr.mxu0 0.0
        %3510 = vmatpush1.msra.mxu0 0.0
        %3511 = vmatprep.subr.mxu0 0.0
        %3512 = vmatpush1.msra.mxu0 0.0
        %3513 = vmatprep.subr.mxu0 0.0
        %3514 = vmatpush1.msra.mxu0 0.0
        %3515 = vmatprep.subr.mxu0 0.0
        %3516 = vmatpush1.msra.mxu0 0.0
        %3517 = vmatprep.subr.mxu0 0.0
        %3518 = vmatpush1.msra.mxu0 0.0
        %3519 = vmatprep.subr.mxu0 0.0
        %3520 = vmatpush1.msra.mxu0 0.0
        %3521 = vmatprep.subr.mxu0 0.0
        %3522 = vmatpush1.msra.mxu0 0.0
        %3523 = vmatprep.subr.mxu0 0.0
        %3524 = vmatpush1.msra.mxu0 0.0
        %3525 = vmatprep.subr.mxu0 0.0
        %3526 = vmatpush1.msra.mxu0 0.0
        %3527 = vmatprep.subr.mxu0 0.0
        %3528 = vmatpush1.msra.mxu0 0.0
        %3529 = vmatprep.subr.mxu0 0.0
        %3530 = vmatpush1.msra.mxu0 0.0
        %3531 = vmatprep.subr.mxu0 0.0
        %3532 = vmatpush1.msra.mxu0 0.0
        %3533 = vmatprep.subr.mxu0 0.0
        %3534 = vmatpush1.msra.mxu0 0.0
        %3535 = vmatprep.subr.mxu0 0.0
        %3536 = vmatpush1.msra.mxu0 0.0
        %3537 = vmatprep.mubr.f32.mxu0 0.0
        %v3538 = vand.u32 %v2655, 4294901760
        %3539 = vmatmul.mubr.f32.gmra.mrb[0].mxu0 %v3538
        %v3540 = vpop.f32.mrb[0].mxu0
        %v3541 = vadd.f32 %v3347, %v3540
        %v3542 = vpop.f32.mrb[0].mxu0
        %3543 = vmatprep.mubr.f32.mxu0 0.0
        %v3544 = vand.u32 %v2658, 4294901760
        %3545 = vmatmul.mubr.f32.gmra.mrb[0].mxu0 %v3544
        %v3546 = vpop.f32.mrb[0].mxu0
        %v3547 = vadd.f32 %v3355, %v3546
        %v3548 = vpop.f32.mrb[0].mxu0
        %3549 = vmatprep.mubr.f32.mxu0 0.0
        %v3550 = vand.u32 %v2661, 4294901760
        %3551 = vmatmul.mubr.f32.gmra.mrb[0].mxu0 %v3550
        %v3552 = vpop.f32.mrb[0].mxu0
        %v3553 = vadd.f32 %v3363, %v3552
        %v3554 = vpop.f32.mrb[0].mxu0
        %3555 = vmatprep.mubr.f32.mxu0 0.0
        %v3556 = vand.u32 %v2664, 4294901760
        %3557 = vmatmul.mubr.f32.gmra.mrb[0].mxu0 %v3556
        %v3558 = vpop.f32.mrb[0].mxu0
        %v3559 = vadd.f32 %v3371, %v3558
        %v3560 = vpop.f32.mrb[0].mxu0
        %3561 = vmatprep.mubr.f32.mxu0 0.0
        %v3562 = vand.u32 %v2667, 4294901760
        %3563 = vmatmul.mubr.f32.gmra.mrb[0].mxu0 %v3562
        %v3564 = vpop.f32.mrb[0].mxu0
        %v3565 = vadd.f32 %v3379, %v3564
        %v3566 = vpop.f32.mrb[0].mxu0
        %3567 = vmatprep.mubr.f32.mxu0 0.0
        %v3568 = vand.u32 %v2670, 4294901760
        %3569 = vmatmul.mubr.f32.gmra.mrb[0].mxu0 %v3568
        %v3570 = vpop.f32.mrb[0].mxu0
        %v3571 = vadd.f32 %v3387, %v3570
        %v3572 = vpop.f32.mrb[0].mxu0
        %3573 = vmatprep.mubr.f32.mxu0 0.0
        %v3574 = vand.u32 %v2673, 4294901760
        %3575 = vmatmul.mubr.f32.gmra.mrb[0].mxu0 %v3574
        %v3576 = vpop.f32.mrb[0].mxu0
        %v3577 = vadd.f32 %v3395, %v3576
        %v3578 = vpop.f32.mrb[0].mxu0
        %3579 = vmatprep.mubr.f32.mxu0 0.0
        %v3580 = vand.u32 %v2676, 4294901760
        %3581 = vmatmul.mubr.f32.gmra.mrb[0].mxu0 %v3580
        %v3582 = vpop.f32.mrb[0].mxu0
        %v3583 = vadd.f32 %v3403, %v3582
        %v3584 = vpop.f32.mrb[0].mxu0
        %3585 = vmatprep.mubr.f32.mxu0 0.0
        %v3586 = vand.u32 %v2679, 4294901760
        %3587 = vmatmul.mubr.f32.gmra.mrb[0].mxu0 %v3586
        %v3588 = vpop.f32.mrb[0].mxu0
        %v3589 = vadd.f32 %v3411, %v3588
        %v3590 = vpop.f32.mrb[0].mxu0
        %3591 = vmatprep.mubr.f32.mxu0 0.0
        %v3592 = vand.u32 %v2682, 4294901760
        %3593 = vmatmul.mubr.f32.gmra.mrb[0].mxu0 %v3592
        %v3594 = vpop.f32.mrb[0].mxu0
        %v3595 = vadd.f32 %v3419, %v3594
        %v3596 = vpop.f32.mrb[0].mxu0
        %3597 = vmatprep.mubr.f32.mxu0 0.0
        %v3598 = vand.u32 %v2685, 4294901760
        %3599 = vmatmul.mubr.f32.gmra.mrb[0].mxu0 %v3598
        %v3600 = vpop.f32.mrb[0].mxu0
        %v3601 = vadd.f32 %v3427, %v3600
        %v3602 = vpop.f32.mrb[0].mxu0
        %3603 = vmatprep.mubr.f32.mxu0 0.0
        %v3604 = vand.u32 %v2688, 4294901760
        %3605 = vmatmul.mubr.f32.gmra.mrb[0].mxu0 %v3604
        %v3606 = vpop.f32.mrb[0].mxu0
        %v3607 = vadd.f32 %v3435, %v3606
        %v3608 = vpop.f32.mrb[0].mxu0
        %3609 = vmatprep.mubr.f32.mxu0 0.0
        %v3610 = vand.u32 %v2691, 4294901760
        %3611 = vmatmul.mubr.f32.gmra.mrb[0].mxu0 %v3610
        %v3612 = vpop.f32.mrb[0].mxu0
        %v3613 = vadd.f32 %v3443, %v3612
        %v3614 = vpop.f32.mrb[0].mxu0
        %3615 = vmatprep.mubr.f32.mxu0 0.0
        %v3616 = vand.u32 %v2694, 4294901760
        %3617 = vmatmul.mubr.f32.gmra.mrb[0].mxu0 %v3616
        %v3618 = vpop.f32.mrb[0].mxu0
        %v3619 = vadd.f32 %v3451, %v3618
        %v3620 = vpop.f32.mrb[0].mxu0
        %3621 = vmatprep.mubr.f32.mxu0 0.0
        %v3622 = vand.u32 %v2697, 4294901760
        %3623 = vmatmul.mubr.f32.gmra.mrb[0].mxu0 %v3622
        %v3624 = vpop.f32.mrb[0].mxu0
        %v3625 = vadd.f32 %v3459, %v3624
        %v3626 = vpop.f32.mrb[0].mxu0
        %3627 = vmatprep.mubr.f32.mxu0 0.0
        %v3628 = vand.u32 %v2700, 4294901760
        %3629 = vmatmul.mubr.f32.gmra.mrb[0].mxu0 %v3628
        %v3630 = vpop.f32.mrb[0].mxu0
        %v3631 = vadd.f32 %v3467, %v3630
        %v3632 = vpop.f32.mrb[0].mxu0
        %3633 = vdwg.mxu0
        %3634 = vmatprep.subr.mxu0 0.0
        %v3635 = vand.u32 %v2703, 4294901760
        %3636 = vmatpush1.msra.mxu0 %v3635
        %3637 = vmatprep.subr.mxu0 0.0
        %3638 = vmatpush1.msra.mxu0 0.0
        %3639 = vmatprep.subr.mxu0 0.0
        %3640 = vmatpush1.msra.mxu0 0.0
        %3641 = vmatprep.subr.mxu0 0.0
        %3642 = vmatpush1.msra.mxu0 0.0
        %3643 = vmatprep.subr.mxu0 0.0
        %3644 = vmatpush1.msra.mxu0 0.0
        %3645 = vmatprep.subr.mxu0 0.0
        %3646 = vmatpush1.msra.mxu0 0.0
        %3647 = vmatprep.subr.mxu0 0.0
        %3648 = vmatpush1.msra.mxu0 0.0
        %3649 = vmatprep.subr.mxu0 0.0
        %3650 = vmatpush1.msra.mxu0 0.0
        %3651 = vmatprep.subr.mxu0 0.0
        %3652 = vmatpush1.msra.mxu0 0.0
        %3653 = vmatprep.subr.mxu0 0.0
        %3654 = vmatpush1.msra.mxu0 0.0
        %3655 = vmatprep.subr.mxu0 0.0
        %3656 = vmatpush1.msra.mxu0 0.0
        %3657 = vmatprep.subr.mxu0 0.0
        %3658 = vmatpush1.msra.mxu0 0.0
        %3659 = vmatprep.subr.mxu0 0.0
        %3660 = vmatpush1.msra.mxu0 0.0
        %3661 = vmatprep.subr.mxu0 0.0
        %3662 = vmatpush1.msra.mxu0 0.0
        %3663 = vmatprep.subr.mxu0 0.0
        %3664 = vmatpush1.msra.mxu0 0.0
        %3665 = vmatprep.subr.mxu0 0.0
        %3666 = vmatpush1.msra.mxu0 0.0
        %3667 = vmatprep.subr.mxu0 0.0
        %3668 = vmatpush1.msra.mxu0 0.0
        %3669 = vmatprep.subr.mxu0 0.0
        %3670 = vmatpush1.msra.mxu0 0.0
        %3671 = vmatprep.subr.mxu0 0.0
        %3672 = vmatpush1.msra.mxu0 0.0
        %3673 = vmatprep.subr.mxu0 0.0
        %3674 = vmatpush1.msra.mxu0 0.0
        %3675 = vmatprep.subr.mxu0 0.0
        %3676 = vmatpush1.msra.mxu0 0.0
        %3677 = vmatprep.subr.mxu0 0.0
        %3678 = vmatpush1.msra.mxu0 0.0
        %3679 = vmatprep.subr.mxu0 0.0
        %3680 = vmatpush1.msra.mxu0 0.0
        %3681 = vmatprep.subr.mxu0 0.0
        %3682 = vmatpush1.msra.mxu0 0.0
        %3683 = vmatprep.subr.mxu0 0.0
        %3684 = vmatpush1.msra.mxu0 0.0
        %3685 = vmatprep.subr.mxu0 0.0
        %3686 = vmatpush1.msra.mxu0 0.0
        %3687 = vmatprep.subr.mxu0 0.0
        %3688 = vmatpush1.msra.mxu0 0.0
        %3689 = vmatprep.subr.mxu0 0.0
        %3690 = vmatpush1.msra.mxu0 0.0
        %3691 = vmatprep.subr.mxu0 0.0
        %3692 = vmatpush1.msra.mxu0 0.0
        %3693 = vmatprep.subr.mxu0 0.0
        %3694 = vmatpush1.msra.mxu0 0.0
        %3695 = vmatprep.subr.mxu0 0.0
        %3696 = vmatpush1.msra.mxu0 0.0
        %3697 = vmatprep.subr.mxu0 0.0
        %3698 = vmatpush1.msra.mxu0 0.0
        %3699 = vmatprep.mubr.f32.mxu0 0.0
        %v3700 = vand.u32 %v2655, 4294901760
        %3701 = vmatmul.mubr.f32.gmra.mrb[0].mxu0 %v3700
        %v3702 = vpop.f32.mrb[0].mxu0
        %v3703 = vadd.f32 %v3541, %v3702
        %v3704 = vpop.f32.mrb[0].mxu0
        %3705 = vmatprep.mubr.f32.mxu0 0.0
        %v3706 = vand.u32 %v2658, 4294901760
        %3707 = vmatmul.mubr.f32.gmra.mrb[0].mxu0 %v3706
        %v3708 = vpop.f32.mrb[0].mxu0
        %v3709 = vadd.f32 %v3547, %v3708
        %v3710 = vpop.f32.mrb[0].mxu0
        %3711 = vmatprep.mubr.f32.mxu0 0.0
        %v3712 = vand.u32 %v2661, 4294901760
        %3713 = vmatmul.mubr.f32.gmra.mrb[0].mxu0 %v3712
        %v3714 = vpop.f32.mrb[0].mxu0
        %v3715 = vadd.f32 %v3553, %v3714
        %v3716 = vpop.f32.mrb[0].mxu0
        %3717 = vmatprep.mubr.f32.mxu0 0.0
        %v3718 = vand.u32 %v2664, 4294901760
        %3719 = vmatmul.mubr.f32.gmra.mrb[0].mxu0 %v3718
        %v3720 = vpop.f32.mrb[0].mxu0
        %v3721 = vadd.f32 %v3559, %v3720
        %v3722 = vpop.f32.mrb[0].mxu0
        %3723 = vmatprep.mubr.f32.mxu0 0.0
        %v3724 = vand.u32 %v2667, 4294901760
        %3725 = vmatmul.mubr.f32.gmra.mrb[0].mxu0 %v3724
        %v3726 = vpop.f32.mrb[0].mxu0
        %v3727 = vadd.f32 %v3565, %v3726
        %v3728 = vpop.f32.mrb[0].mxu0
        %3729 = vmatprep.mubr.f32.mxu0 0.0
        %v3730 = vand.u32 %v2670, 4294901760
        %3731 = vmatmul.mubr.f32.gmra.mrb[0].mxu0 %v3730
        %v3732 = vpop.f32.mrb[0].mxu0
        %v3733 = vadd.f32 %v3571, %v3732
        %v3734 = vpop.f32.mrb[0].mxu0
        %3735 = vmatprep.mubr.f32.mxu0 0.0
        %v3736 = vand.u32 %v2673, 4294901760
        %3737 = vmatmul.mubr.f32.gmra.mrb[0].mxu0 %v3736
        %v3738 = vpop.f32.mrb[0].mxu0
        %v3739 = vadd.f32 %v3577, %v3738
        %v3740 = vpop.f32.mrb[0].mxu0
        %3741 = vmatprep.mubr.f32.mxu0 0.0
        %v3742 = vand.u32 %v2676, 4294901760
        %3743 = vmatmul.mubr.f32.gmra.mrb[0].mxu0 %v3742
        %v3744 = vpop.f32.mrb[0].mxu0
        %v3745 = vadd.f32 %v3583, %v3744
        %v3746 = vpop.f32.mrb[0].mxu0
        %3747 = vmatprep.mubr.f32.mxu0 0.0
        %v3748 = vand.u32 %v2679, 4294901760
        %3749 = vmatmul.mubr.f32.gmra.mrb[0].mxu0 %v3748
        %v3750 = vpop.f32.mrb[0].mxu0
        %v3751 = vadd.f32 %v3589, %v3750
        %v3752 = vpop.f32.mrb[0].mxu0
        %3753 = vmatprep.mubr.f32.mxu0 0.0
        %v3754 = vand.u32 %v2682, 4294901760
        %3755 = vmatmul.mubr.f32.gmra.mrb[0].mxu0 %v3754
        %v3756 = vpop.f32.mrb[0].mxu0
        %v3757 = vadd.f32 %v3595, %v3756
        %v3758 = vpop.f32.mrb[0].mxu0
        %3759 = vmatprep.mubr.f32.mxu0 0.0
        %v3760 = vand.u32 %v2685, 4294901760
        %3761 = vmatmul.mubr.f32.gmra.mrb[0].mxu0 %v3760
        %v3762 = vpop.f32.mrb[0].mxu0
        %v3763 = vadd.f32 %v3601, %v3762
        %v3764 = vpop.f32.mrb[0].mxu0
        %3765 = vmatprep.mubr.f32.mxu0 0.0
        %v3766 = vand.u32 %v2688, 4294901760
        %3767 = vmatmul.mubr.f32.gmra.mrb[0].mxu0 %v3766
        %v3768 = vpop.f32.mrb[0].mxu0
        %v3769 = vadd.f32 %v3607, %v3768
        %v3770 = vpop.f32.mrb[0].mxu0
        %3771 = vmatprep.mubr.f32.mxu0 0.0
        %v3772 = vand.u32 %v2691, 4294901760
        %3773 = vmatmul.mubr.f32.gmra.mrb[0].mxu0 %v3772
        %v3774 = vpop.f32.mrb[0].mxu0
        %v3775 = vadd.f32 %v3613, %v3774
        %v3776 = vpop.f32.mrb[0].mxu0
        %3777 = vmatprep.mubr.f32.mxu0 0.0
        %v3778 = vand.u32 %v2694, 4294901760
        %3779 = vmatmul.mubr.f32.gmra.mrb[0].mxu0 %v3778
        %v3780 = vpop.f32.mrb[0].mxu0
        %v3781 = vadd.f32 %v3619, %v3780
        %v3782 = vpop.f32.mrb[0].mxu0
        %3783 = vmatprep.mubr.f32.mxu0 0.0
        %v3784 = vand.u32 %v2697, 4294901760
        %3785 = vmatmul.mubr.f32.gmra.mrb[0].mxu0 %v3784
        %v3786 = vpop.f32.mrb[0].mxu0
        %v3787 = vadd.f32 %v3625, %v3786
        %v3788 = vpop.f32.mrb[0].mxu0
        %3789 = vmatprep.mubr.f32.mxu0 0.0
        %v3790 = vand.u32 %v2700, 4294901760
        %3791 = vmatmul.mubr.f32.gmra.mrb[0].mxu0 %v3790
        %v3792 = vpop.f32.mrb[0].mxu0
        %v3793 = vadd.f32 %v3631, %v3792
        %v3794 = vpop.f32.mrb[0].mxu0
        %3795 = vdwg.mxu0
        %v3796 = vadd.f32 %v2542, %v3703
        %v3797 = vadd.f32 %v2548, %v3709
        %v3798 = vadd.f32 %v2554, %v3715
        %v3799 = vadd.f32 %v2560, %v3721
        %v3800 = vadd.f32 %v2566, %v3727
        %v3801 = vadd.f32 %v2572, %v3733
        %v3802 = vadd.f32 %v2578, %v3739
        %v3803 = vadd.f32 %v2584, %v3745
        %v3804 = vadd.f32 %v2590, %v3751
        %v3805 = vadd.f32 %v2596, %v3757
        %v3806 = vadd.f32 %v2602, %v3763
        %v3807 = vadd.f32 %v2608, %v3769
        %v3808 = vadd.f32 %v2614, %v3775
        %v3809 = vadd.f32 %v2620, %v3781
        %v3810 = vadd.f32 %v2626, %v3787
        %v3811 = vadd.f32 %v2632, %v3793
        %v3812 = vld [vmem:[%s310 + $0x1] sm:$0xff]
        %v3813 = vld [vmem:[%s310 + $0x9] sm:$0xff]
        %v3814 = vld [vmem:[%s2637 + $0x1] sm:$0xff]
        %v3815 = vld [vmem:[%s2637 + $0x9] sm:$0xff]
        %v3816 = vld [vmem:[%s2637 + $0x19] sm:$0xff]
        %v3817 = vld [vmem:[%s2637 + $0x21] sm:$0xff]
        %v3818 = vld [vmem:[%s2637 + $0x31] sm:$0xff]
        %v3819 = vld [vmem:[%s2637 + $0x39] sm:$0xff]
        %v3820 = vld [vmem:[%s2637 + $0x49] sm:$0xff]
        %v3821 = vld [vmem:[%s2637 + $0x51] sm:$0xff]
        %v3822 = vld [vmem:[%s2637 + $0x61] sm:$0xff]
        %v3823 = vld [vmem:[%s2637 + $0x69] sm:$0xff]
        %v3824 = vld [vmem:[%s2637 + $0x79] sm:$0xff]
        %v3825 = vld [vmem:[%s2637 + $0x81] sm:$0xff]
        %v3826 = vld [vmem:[%s2637 + $0x91] sm:$0xff]
        %v3827 = vld [vmem:[%s2637 + $0x99] sm:$0xff]
        %s3828 = scalar_lea.vmem %s2, 12
        %v3829 = vld [vmem:[%s3828] sm:$0xf]
        %v3831 = vsel %vm349, %v3814, 0
        %v3834 = vsel %vm349, %v3815, 0
        %v3837 = vsel %vm349, %v3816, 0
        %v3840 = vsel %vm349, %v3817, 0
        %v3843 = vsel %vm349, %v3818, 0
        %v3846 = vsel %vm349, %v3819, 0
        %v3849 = vsel %vm349, %v3820, 0
        %v3852 = vsel %vm349, %v3821, 0
        %v3855 = vsel %vm349, %v3822, 0
        %v3858 = vsel %vm349, %v3823, 0
        %v3861 = vsel %vm349, %v3824, 0
        %v3864 = vsel %vm349, %v3825, 0
        %v3867 = vsel %vm349, %v3826, 0
        %v3870 = vsel %vm349, %v3827, 0
        %v3873 = vsel %vm349, %v3812, 0
        %v3876 = vsel %vm349, %v3813, 0
        %v3879 = vsel %vm398, %v3829, 0
        %3881 = vmatprep.subr.mxu0 0.0
        %v3882 = vand.u32 %v3879, 4294901760
        %3883 = vmatpush1.msra.mxu0 %v3882
        %3884 = vmatprep.subr.mxu0 0.0
        %3885 = vmatpush1.msra.mxu0 0.0
        %3886 = vmatprep.subr.mxu0 0.0
        %3887 = vmatpush1.msra.mxu0 0.0
        %3888 = vmatprep.subr.mxu0 0.0
        %3889 = vmatpush1.msra.mxu0 0.0
        %3890 = vmatprep.subr.mxu0 0.0
        %3891 = vmatpush1.msra.mxu0 0.0
        %3892 = vmatprep.subr.mxu0 0.0
        %3893 = vmatpush1.msra.mxu0 0.0
        %3894 = vmatprep.subr.mxu0 0.0
        %3895 = vmatpush1.msra.mxu0 0.0
        %3896 = vmatprep.subr.mxu0 0.0
        %3897 = vmatpush1.msra.mxu0 0.0
        %3898 = vmatprep.subr.mxu0 0.0
        %3899 = vmatpush1.msra.mxu0 0.0
        %3900 = vmatprep.subr.mxu0 0.0
        %3901 = vmatpush1.msra.mxu0 0.0
        %3902 = vmatprep.subr.mxu0 0.0
        %3903 = vmatpush1.msra.mxu0 0.0
        %3904 = vmatprep.subr.mxu0 0.0
        %3905 = vmatpush1.msra.mxu0 0.0
        %3906 = vmatprep.subr.mxu0 0.0
        %3907 = vmatpush1.msra.mxu0 0.0
        %3908 = vmatprep.subr.mxu0 0.0
        %3909 = vmatpush1.msra.mxu0 0.0
        %3910 = vmatprep.subr.mxu0 0.0
        %3911 = vmatpush1.msra.mxu0 0.0
        %3912 = vmatprep.subr.mxu0 0.0
        %3913 = vmatpush1.msra.mxu0 0.0
        %3914 = vmatprep.subr.mxu0 0.0
        %3915 = vmatpush1.msra.mxu0 0.0
        %3916 = vmatprep.subr.mxu0 0.0
        %3917 = vmatpush1.msra.mxu0 0.0
        %3918 = vmatprep.subr.mxu0 0.0
        %3919 = vmatpush1.msra.mxu0 0.0
        %3920 = vmatprep.subr.mxu0 0.0
        %3921 = vmatpush1.msra.mxu0 0.0
        %3922 = vmatprep.subr.mxu0 0.0
        %3923 = vmatpush1.msra.mxu0 0.0
        %3924 = vmatprep.subr.mxu0 0.0
        %3925 = vmatpush1.msra.mxu0 0.0
        %3926 = vmatprep.subr.mxu0 0.0
        %3927 = vmatpush1.msra.mxu0 0.0
        %3928 = vmatprep.subr.mxu0 0.0
        %3929 = vmatpush1.msra.mxu0 0.0
        %3930 = vmatprep.subr.mxu0 0.0
        %3931 = vmatpush1.msra.mxu0 0.0
        %3932 = vmatprep.subr.mxu0 0.0
        %3933 = vmatpush1.msra.mxu0 0.0
        %3934 = vmatprep.subr.mxu0 0.0
        %3935 = vmatpush1.msra.mxu0 0.0
        %3936 = vmatprep.subr.mxu0 0.0
        %3937 = vmatpush1.msra.mxu0 0.0
        %3938 = vmatprep.subr.mxu0 0.0
        %3939 = vmatpush1.msra.mxu0 0.0
        %3940 = vmatprep.subr.mxu0 0.0
        %3941 = vmatpush1.msra.mxu0 0.0
        %3942 = vmatprep.subr.mxu0 0.0
        %3943 = vmatpush1.msra.mxu0 0.0
        %3944 = vmatprep.subr.mxu0 0.0
        %3945 = vmatpush1.msra.mxu0 0.0
        %3946 = vmatprep.mubr.f32.mxu0 0.0
        %v3947 = vand.u32 %v3831, 4294901760
        %v3948 = vsub.f32 %v3831, %v3947
        %v3949 = vand.u32 %v3948, 4294901760
        %v3950 = vsub.f32 %v3948, %v3949
        %v3951 = vand.u32 %v3950, 4294901760
        %3952 = vmatmul.mubr.f32.gmra.mrb[0].mxu0 %v3951
        %v3953 = vpop.f32.mrb[0].mxu0
        %v3954 = vadd.f32 0.0, %v3953
        %v3955 = vpop.f32.mrb[0].mxu0
        %3956 = vmatprep.mubr.f32.mxu0 0.0
        %v3957 = vand.u32 %v3834, 4294901760
        %v3958 = vsub.f32 %v3834, %v3957
        %v3959 = vand.u32 %v3958, 4294901760
        %v3960 = vsub.f32 %v3958, %v3959
        %v3961 = vand.u32 %v3960, 4294901760
        %3962 = vmatmul.mubr.f32.gmra.mrb[0].mxu0 %v3961
        %v3963 = vpop.f32.mrb[0].mxu0
        %v3964 = vadd.f32 0.0, %v3963
        %v3965 = vpop.f32.mrb[0].mxu0
        %3966 = vmatprep.mubr.f32.mxu0 0.0
        %v3967 = vand.u32 %v3837, 4294901760
        %v3968 = vsub.f32 %v3837, %v3967
        %v3969 = vand.u32 %v3968, 4294901760
        %v3970 = vsub.f32 %v3968, %v3969
        %v3971 = vand.u32 %v3970, 4294901760
        %3972 = vmatmul.mubr.f32.gmra.mrb[0].mxu0 %v3971
        %v3973 = vpop.f32.mrb[0].mxu0
        %v3974 = vadd.f32 0.0, %v3973
        %v3975 = vpop.f32.mrb[0].mxu0
        %3976 = vmatprep.mubr.f32.mxu0 0.0
        %v3977 = vand.u32 %v3840, 4294901760
        %v3978 = vsub.f32 %v3840, %v3977
        %v3979 = vand.u32 %v3978, 4294901760
        %v3980 = vsub.f32 %v3978, %v3979
        %v3981 = vand.u32 %v3980, 4294901760
        %3982 = vmatmul.mubr.f32.gmra.mrb[0].mxu0 %v3981
        %v3983 = vpop.f32.mrb[0].mxu0
        %v3984 = vadd.f32 0.0, %v3983
        %v3985 = vpop.f32.mrb[0].mxu0
        %3986 = vmatprep.mubr.f32.mxu0 0.0
        %v3987 = vand.u32 %v3843, 4294901760
        %v3988 = vsub.f32 %v3843, %v3987
        %v3989 = vand.u32 %v3988, 4294901760
        %v3990 = vsub.f32 %v3988, %v3989
        %v3991 = vand.u32 %v3990, 4294901760
        %3992 = vmatmul.mubr.f32.gmra.mrb[0].mxu0 %v3991
        %v3993 = vpop.f32.mrb[0].mxu0
        %v3994 = vadd.f32 0.0, %v3993
        %v3995 = vpop.f32.mrb[0].mxu0
        %3996 = vmatprep.mubr.f32.mxu0 0.0
        %v3997 = vand.u32 %v3846, 4294901760
        %v3998 = vsub.f32 %v3846, %v3997
        %v3999 = vand.u32 %v3998, 4294901760
        %v4000 = vsub.f32 %v3998, %v3999
        %v4001 = vand.u32 %v4000, 4294901760
        %4002 = vmatmul.mubr.f32.gmra.mrb[0].mxu0 %v4001
        %v4003 = vpop.f32.mrb[0].mxu0
        %v4004 = vadd.f32 0.0, %v4003
        %v4005 = vpop.f32.mrb[0].mxu0
        %4006 = vmatprep.mubr.f32.mxu0 0.0
        %v4007 = vand.u32 %v3849, 4294901760
        %v4008 = vsub.f32 %v3849, %v4007
        %v4009 = vand.u32 %v4008, 4294901760
        %v4010 = vsub.f32 %v4008, %v4009
        %v4011 = vand.u32 %v4010, 4294901760
        %4012 = vmatmul.mubr.f32.gmra.mrb[0].mxu0 %v4011
        %v4013 = vpop.f32.mrb[0].mxu0
        %v4014 = vadd.f32 0.0, %v4013
        %v4015 = vpop.f32.mrb[0].mxu0
        %4016 = vmatprep.mubr.f32.mxu0 0.0
        %v4017 = vand.u32 %v3852, 4294901760
        %v4018 = vsub.f32 %v3852, %v4017
        %v4019 = vand.u32 %v4018, 4294901760
        %v4020 = vsub.f32 %v4018, %v4019
        %v4021 = vand.u32 %v4020, 4294901760
        %4022 = vmatmul.mubr.f32.gmra.mrb[0].mxu0 %v4021
        %v4023 = vpop.f32.mrb[0].mxu0
        %v4024 = vadd.f32 0.0, %v4023
        %v4025 = vpop.f32.mrb[0].mxu0
        %4026 = vmatprep.mubr.f32.mxu0 0.0
        %v4027 = vand.u32 %v3855, 4294901760
        %v4028 = vsub.f32 %v3855, %v4027
        %v4029 = vand.u32 %v4028, 4294901760
        %v4030 = vsub.f32 %v4028, %v4029
        %v4031 = vand.u32 %v4030, 4294901760
        %4032 = vmatmul.mubr.f32.gmra.mrb[0].mxu0 %v4031
        %v4033 = vpop.f32.mrb[0].mxu0
        %v4034 = vadd.f32 0.0, %v4033
        %v4035 = vpop.f32.mrb[0].mxu0
        %4036 = vmatprep.mubr.f32.mxu0 0.0
        %v4037 = vand.u32 %v3858, 4294901760
        %v4038 = vsub.f32 %v3858, %v4037
        %v4039 = vand.u32 %v4038, 4294901760
        %v4040 = vsub.f32 %v4038, %v4039
        %v4041 = vand.u32 %v4040, 4294901760
        %4042 = vmatmul.mubr.f32.gmra.mrb[0].mxu0 %v4041
        %v4043 = vpop.f32.mrb[0].mxu0
        %v4044 = vadd.f32 0.0, %v4043
        %v4045 = vpop.f32.mrb[0].mxu0
        %4046 = vmatprep.mubr.f32.mxu0 0.0
        %v4047 = vand.u32 %v3861, 4294901760
        %v4048 = vsub.f32 %v3861, %v4047
        %v4049 = vand.u32 %v4048, 4294901760
        %v4050 = vsub.f32 %v4048, %v4049
        %v4051 = vand.u32 %v4050, 4294901760
        %4052 = vmatmul.mubr.f32.gmra.mrb[0].mxu0 %v4051
        %v4053 = vpop.f32.mrb[0].mxu0
        %v4054 = vadd.f32 0.0, %v4053
        %v4055 = vpop.f32.mrb[0].mxu0
        %4056 = vmatprep.mubr.f32.mxu0 0.0
        %v4057 = vand.u32 %v3864, 4294901760
        %v4058 = vsub.f32 %v3864, %v4057
        %v4059 = vand.u32 %v4058, 4294901760
        %v4060 = vsub.f32 %v4058, %v4059
        %v4061 = vand.u32 %v4060, 4294901760
        %4062 = vmatmul.mubr.f32.gmra.mrb[0].mxu0 %v4061
        %v4063 = vpop.f32.mrb[0].mxu0
        %v4064 = vadd.f32 0.0, %v4063
        %v4065 = vpop.f32.mrb[0].mxu0
        %4066 = vmatprep.mubr.f32.mxu0 0.0
        %v4067 = vand.u32 %v3867, 4294901760
        %v4068 = vsub.f32 %v3867, %v4067
        %v4069 = vand.u32 %v4068, 4294901760
        %v4070 = vsub.f32 %v4068, %v4069
        %v4071 = vand.u32 %v4070, 4294901760
        %4072 = vmatmul.mubr.f32.gmra.mrb[0].mxu0 %v4071
        %v4073 = vpop.f32.mrb[0].mxu0
        %v4074 = vadd.f32 0.0, %v4073
        %v4075 = vpop.f32.mrb[0].mxu0
        %4076 = vmatprep.mubr.f32.mxu0 0.0
        %v4077 = vand.u32 %v3870, 4294901760
        %v4078 = vsub.f32 %v3870, %v4077
        %v4079 = vand.u32 %v4078, 4294901760
        %v4080 = vsub.f32 %v4078, %v4079
        %v4081 = vand.u32 %v4080, 4294901760
        %4082 = vmatmul.mubr.f32.gmra.mrb[0].mxu0 %v4081
        %v4083 = vpop.f32.mrb[0].mxu0
        %v4084 = vadd.f32 0.0, %v4083
        %v4085 = vpop.f32.mrb[0].mxu0
        %4086 = vmatprep.mubr.f32.mxu0 0.0
        %v4087 = vand.u32 %v3873, 4294901760
        %v4088 = vsub.f32 %v3873, %v4087
        %v4089 = vand.u32 %v4088, 4294901760
        %v4090 = vsub.f32 %v4088, %v4089
        %v4091 = vand.u32 %v4090, 4294901760
        %4092 = vmatmul.mubr.f32.gmra.mrb[0].mxu0 %v4091
        %v4093 = vpop.f32.mrb[0].mxu0
        %v4094 = vadd.f32 0.0, %v4093
        %v4095 = vpop.f32.mrb[0].mxu0
        %4096 = vmatprep.mubr.f32.mxu0 0.0
        %v4097 = vand.u32 %v3876, 4294901760
        %v4098 = vsub.f32 %v3876, %v4097
        %v4099 = vand.u32 %v4098, 4294901760
        %v4100 = vsub.f32 %v4098, %v4099
        %v4101 = vand.u32 %v4100, 4294901760
        %4102 = vmatmul.mubr.f32.gmra.mrb[0].mxu0 %v4101
        %v4103 = vpop.f32.mrb[0].mxu0
        %v4104 = vadd.f32 0.0, %v4103
        %v4105 = vpop.f32.mrb[0].mxu0
        %4106 = vdwg.mxu0
        %4107 = vmatprep.subr.mxu0 0.0
        %v4108 = vand.u32 %v3879, 4294901760
        %v4109 = vsub.f32 %v3879, %v4108
        %v4110 = vand.u32 %v4109, 4294901760
        %v4111 = vsub.f32 %v4109, %v4110
        %v4112 = vand.u32 %v4111, 4294901760
        %4113 = vmatpush1.msra.mxu0 %v4112
        %4114 = vmatprep.subr.mxu0 0.0
        %4115 = vmatpush1.msra.mxu0 0.0
        %4116 = vmatprep.subr.mxu0 0.0
        %4117 = vmatpush1.msra.mxu0 0.0
        %4118 = vmatprep.subr.mxu0 0.0
        %4119 = vmatpush1.msra.mxu0 0.0
        %4120 = vmatprep.subr.mxu0 0.0
        %4121 = vmatpush1.msra.mxu0 0.0
        %4122 = vmatprep.subr.mxu0 0.0
        %4123 = vmatpush1.msra.mxu0 0.0
        %4124 = vmatprep.subr.mxu0 0.0
        %4125 = vmatpush1.msra.mxu0 0.0
        %4126 = vmatprep.subr.mxu0 0.0
        %4127 = vmatpush1.msra.mxu0 0.0
        %4128 = vmatprep.subr.mxu0 0.0
        %4129 = vmatpush1.msra.mxu0 0.0
        %4130 = vmatprep.subr.mxu0 0.0
        %4131 = vmatpush1.msra.mxu0 0.0
        %4132 = vmatprep.subr.mxu0 0.0
        %4133 = vmatpush1.msra.mxu0 0.0
        %4134 = vmatprep.subr.mxu0 0.0
        %4135 = vmatpush1.msra.mxu0 0.0
        %4136 = vmatprep.subr.mxu0 0.0
        %4137 = vmatpush1.msra.mxu0 0.0
        %4138 = vmatprep.subr.mxu0 0.0
        %4139 = vmatpush1.msra.mxu0 0.0
        %4140 = vmatprep.subr.mxu0 0.0
        %4141 = vmatpush1.msra.mxu0 0.0
        %4142 = vmatprep.subr.mxu0 0.0
        %4143 = vmatpush1.msra.mxu0 0.0
        %4144 = vmatprep.subr.mxu0 0.0
        %4145 = vmatpush1.msra.mxu0 0.0
        %4146 = vmatprep.subr.mxu0 0.0
        %4147 = vmatpush1.msra.mxu0 0.0
        %4148 = vmatprep.subr.mxu0 0.0
        %4149 = vmatpush1.msra.mxu0 0.0
        %4150 = vmatprep.subr.mxu0 0.0
        %4151 = vmatpush1.msra.mxu0 0.0
        %4152 = vmatprep.subr.mxu0 0.0
        %4153 = vmatpush1.msra.mxu0 0.0
        %4154 = vmatprep.subr.mxu0 0.0
        %4155 = vmatpush1.msra.mxu0 0.0
        %4156 = vmatprep.subr.mxu0 0.0
        %4157 = vmatpush1.msra.mxu0 0.0
        %4158 = vmatprep.subr.mxu0 0.0
        %4159 = vmatpush1.msra.mxu0 0.0
        %4160 = vmatprep.subr.mxu0 0.0
        %4161 = vmatpush1.msra.mxu0 0.0
        %4162 = vmatprep.subr.mxu0 0.0
        %4163 = vmatpush1.msra.mxu0 0.0
        %4164 = vmatprep.subr.mxu0 0.0
        %4165 = vmatpush1.msra.mxu0 0.0
        %4166 = vmatprep.subr.mxu0 0.0
        %4167 = vmatpush1.msra.mxu0 0.0
        %4168 = vmatprep.subr.mxu0 0.0
        %4169 = vmatpush1.msra.mxu0 0.0
        %4170 = vmatprep.subr.mxu0 0.0
        %4171 = vmatpush1.msra.mxu0 0.0
        %4172 = vmatprep.subr.mxu0 0.0
        %4173 = vmatpush1.msra.mxu0 0.0
        %4174 = vmatprep.subr.mxu0 0.0
        %4175 = vmatpush1.msra.mxu0 0.0
        %4176 = vmatprep.mubr.f32.mxu0 0.0
        %v4177 = vand.u32 %v3831, 4294901760
        %4178 = vmatmul.mubr.f32.gmra.mrb[0].mxu0 %v4177
        %v4179 = vpop.f32.mrb[0].mxu0
        %v4180 = vadd.f32 %v3954, %v4179
        %v4181 = vpop.f32.mrb[0].mxu0
        %4182 = vmatprep.mubr.f32.mxu0 0.0
        %v4183 = vand.u32 %v3834, 4294901760
        %4184 = vmatmul.mubr.f32.gmra.mrb[0].mxu0 %v4183
        %v4185 = vpop.f32.mrb[0].mxu0
        %v4186 = vadd.f32 %v3964, %v4185
        %v4187 = vpop.f32.mrb[0].mxu0
        %4188 = vmatprep.mubr.f32.mxu0 0.0
        %v4189 = vand.u32 %v3837, 4294901760
        %4190 = vmatmul.mubr.f32.gmra.mrb[0].mxu0 %v4189
        %v4191 = vpop.f32.mrb[0].mxu0
        %v4192 = vadd.f32 %v3974, %v4191
        %v4193 = vpop.f32.mrb[0].mxu0
        %4194 = vmatprep.mubr.f32.mxu0 0.0
        %v4195 = vand.u32 %v3840, 4294901760
        %4196 = vmatmul.mubr.f32.gmra.mrb[0].mxu0 %v4195
        %v4197 = vpop.f32.mrb[0].mxu0
        %v4198 = vadd.f32 %v3984, %v4197
        %v4199 = vpop.f32.mrb[0].mxu0
        %4200 = vmatprep.mubr.f32.mxu0 0.0
        %v4201 = vand.u32 %v3843, 4294901760
        %4202 = vmatmul.mubr.f32.gmra.mrb[0].mxu0 %v4201
        %v4203 = vpop.f32.mrb[0].mxu0
        %v4204 = vadd.f32 %v3994, %v4203
        %v4205 = vpop.f32.mrb[0].mxu0
        %4206 = vmatprep.mubr.f32.mxu0 0.0
        %v4207 = vand.u32 %v3846, 4294901760
        %4208 = vmatmul.mubr.f32.gmra.mrb[0].mxu0 %v4207
        %v4209 = vpop.f32.mrb[0].mxu0
        %v4210 = vadd.f32 %v4004, %v4209
        %v4211 = vpop.f32.mrb[0].mxu0
        %4212 = vmatprep.mubr.f32.mxu0 0.0
        %v4213 = vand.u32 %v3849, 4294901760
        %4214 = vmatmul.mubr.f32.gmra.mrb[0].mxu0 %v4213
        %v4215 = vpop.f32.mrb[0].mxu0
        %v4216 = vadd.f32 %v4014, %v4215
        %v4217 = vpop.f32.mrb[0].mxu0
        %4218 = vmatprep.mubr.f32.mxu0 0.0
        %v4219 = vand.u32 %v3852, 4294901760
        %4220 = vmatmul.mubr.f32.gmra.mrb[0].mxu0 %v4219
        %v4221 = vpop.f32.mrb[0].mxu0
        %v4222 = vadd.f32 %v4024, %v4221
        %v4223 = vpop.f32.mrb[0].mxu0
        %4224 = vmatprep.mubr.f32.mxu0 0.0
        %v4225 = vand.u32 %v3855, 4294901760
        %4226 = vmatmul.mubr.f32.gmra.mrb[0].mxu0 %v4225
        %v4227 = vpop.f32.mrb[0].mxu0
        %v4228 = vadd.f32 %v4034, %v4227
        %v4229 = vpop.f32.mrb[0].mxu0
        %4230 = vmatprep.mubr.f32.mxu0 0.0
        %v4231 = vand.u32 %v3858, 4294901760
        %4232 = vmatmul.mubr.f32.gmra.mrb[0].mxu0 %v4231
        %v4233 = vpop.f32.mrb[0].mxu0
        %v4234 = vadd.f32 %v4044, %v4233
        %v4235 = vpop.f32.mrb[0].mxu0
        %4236 = vmatprep.mubr.f32.mxu0 0.0
        %v4237 = vand.u32 %v3861, 4294901760
        %4238 = vmatmul.mubr.f32.gmra.mrb[0].mxu0 %v4237
        %v4239 = vpop.f32.mrb[0].mxu0
        %v4240 = vadd.f32 %v4054, %v4239
        %v4241 = vpop.f32.mrb[0].mxu0
        %4242 = vmatprep.mubr.f32.mxu0 0.0
        %v4243 = vand.u32 %v3864, 4294901760
        %4244 = vmatmul.mubr.f32.gmra.mrb[0].mxu0 %v4243
        %v4245 = vpop.f32.mrb[0].mxu0
        %v4246 = vadd.f32 %v4064, %v4245
        %v4247 = vpop.f32.mrb[0].mxu0
        %4248 = vmatprep.mubr.f32.mxu0 0.0
        %v4249 = vand.u32 %v3867, 4294901760
        %4250 = vmatmul.mubr.f32.gmra.mrb[0].mxu0 %v4249
        %v4251 = vpop.f32.mrb[0].mxu0
        %v4252 = vadd.f32 %v4074, %v4251
        %v4253 = vpop.f32.mrb[0].mxu0
        %4254 = vmatprep.mubr.f32.mxu0 0.0
        %v4255 = vand.u32 %v3870, 4294901760
        %4256 = vmatmul.mubr.f32.gmra.mrb[0].mxu0 %v4255
        %v4257 = vpop.f32.mrb[0].mxu0
        %v4258 = vadd.f32 %v4084, %v4257
        %v4259 = vpop.f32.mrb[0].mxu0
        %4260 = vmatprep.mubr.f32.mxu0 0.0
        %v4261 = vand.u32 %v3873, 4294901760
        %4262 = vmatmul.mubr.f32.gmra.mrb[0].mxu0 %v4261
        %v4263 = vpop.f32.mrb[0].mxu0
        %v4264 = vadd.f32 %v4094, %v4263
        %v4265 = vpop.f32.mrb[0].mxu0
        %4266 = vmatprep.mubr.f32.mxu0 0.0
        %v4267 = vand.u32 %v3876, 4294901760
        %4268 = vmatmul.mubr.f32.gmra.mrb[0].mxu0 %v4267
        %v4269 = vpop.f32.mrb[0].mxu0
        %v4270 = vadd.f32 %v4104, %v4269
        %v4271 = vpop.f32.mrb[0].mxu0
        %4272 = vdwg.mxu0
        %4273 = vmatprep.subr.mxu0 0.0
        %v4274 = vand.u32 %v3879, 4294901760
        %v4275 = vsub.f32 %v3879, %v4274
        %4276 = vmatpush1.msra.mxu0 %v4275
        %4277 = vmatprep.subr.mxu0 0.0
        %4278 = vmatpush1.msra.mxu0 0.0
        %4279 = vmatprep.subr.mxu0 0.0
        %4280 = vmatpush1.msra.mxu0 0.0
        %4281 = vmatprep.subr.mxu0 0.0
        %4282 = vmatpush1.msra.mxu0 0.0
        %4283 = vmatprep.subr.mxu0 0.0
        %4284 = vmatpush1.msra.mxu0 0.0
        %4285 = vmatprep.subr.mxu0 0.0
        %4286 = vmatpush1.msra.mxu0 0.0
        %4287 = vmatprep.subr.mxu0 0.0
        %4288 = vmatpush1.msra.mxu0 0.0
        %4289 = vmatprep.subr.mxu0 0.0
        %4290 = vmatpush1.msra.mxu0 0.0
        %4291 = vmatprep.subr.mxu0 0.0
        %4292 = vmatpush1.msra.mxu0 0.0
        %4293 = vmatprep.subr.mxu0 0.0
        %4294 = vmatpush1.msra.mxu0 0.0
        %4295 = vmatprep.subr.mxu0 0.0
        %4296 = vmatpush1.msra.mxu0 0.0
        %4297 = vmatprep.subr.mxu0 0.0
        %4298 = vmatpush1.msra.mxu0 0.0
        %4299 = vmatprep.subr.mxu0 0.0
        %4300 = vmatpush1.msra.mxu0 0.0
        %4301 = vmatprep.subr.mxu0 0.0
        %4302 = vmatpush1.msra.mxu0 0.0
        %4303 = vmatprep.subr.mxu0 0.0
        %4304 = vmatpush1.msra.mxu0 0.0
        %4305 = vmatprep.subr.mxu0 0.0
        %4306 = vmatpush1.msra.mxu0 0.0
        %4307 = vmatprep.subr.mxu0 0.0
        %4308 = vmatpush1.msra.mxu0 0.0
        %4309 = vmatprep.subr.mxu0 0.0
        %4310 = vmatpush1.msra.mxu0 0.0
        %4311 = vmatprep.subr.mxu0 0.0
        %4312 = vmatpush1.msra.mxu0 0.0
        %4313 = vmatprep.subr.mxu0 0.0
        %4314 = vmatpush1.msra.mxu0 0.0
        %4315 = vmatprep.subr.mxu0 0.0
        %4316 = vmatpush1.msra.mxu0 0.0
        %4317 = vmatprep.subr.mxu0 0.0
        %4318 = vmatpush1.msra.mxu0 0.0
        %4319 = vmatprep.subr.mxu0 0.0
        %4320 = vmatpush1.msra.mxu0 0.0
        %4321 = vmatprep.subr.mxu0 0.0
        %4322 = vmatpush1.msra.mxu0 0.0
        %4323 = vmatprep.subr.mxu0 0.0
        %4324 = vmatpush1.msra.mxu0 0.0
        %4325 = vmatprep.subr.mxu0 0.0
        %4326 = vmatpush1.msra.mxu0 0.0
        %4327 = vmatprep.subr.mxu0 0.0
        %4328 = vmatpush1.msra.mxu0 0.0
        %4329 = vmatprep.subr.mxu0 0.0
        %4330 = vmatpush1.msra.mxu0 0.0
        %4331 = vmatprep.subr.mxu0 0.0
        %4332 = vmatpush1.msra.mxu0 0.0
        %4333 = vmatprep.subr.mxu0 0.0
        %4334 = vmatpush1.msra.mxu0 0.0
        %4335 = vmatprep.subr.mxu0 0.0
        %4336 = vmatpush1.msra.mxu0 0.0
        %4337 = vmatprep.subr.mxu0 0.0
        %4338 = vmatpush1.msra.mxu0 0.0
        %4339 = vmatprep.mubr.f32.mxu0 0.0
        %v4340 = vand.u32 %v3831, 4294901760
        %v4341 = vsub.f32 %v3831, %v4340
        %4342 = vmatmul.mubr.f32.gmra.mrb[0].mxu0 %v4341
        %v4343 = vpop.f32.mrb[0].mxu0
        %v4344 = vadd.f32 %v4180, %v4343
        %v4345 = vpop.f32.mrb[0].mxu0
        %4346 = vmatprep.mubr.f32.mxu0 0.0
        %v4347 = vand.u32 %v3834, 4294901760
        %v4348 = vsub.f32 %v3834, %v4347
        %4349 = vmatmul.mubr.f32.gmra.mrb[0].mxu0 %v4348
        %v4350 = vpop.f32.mrb[0].mxu0
        %v4351 = vadd.f32 %v4186, %v4350
        %v4352 = vpop.f32.mrb[0].mxu0
        %4353 = vmatprep.mubr.f32.mxu0 0.0
        %v4354 = vand.u32 %v3837, 4294901760
        %v4355 = vsub.f32 %v3837, %v4354
        %4356 = vmatmul.mubr.f32.gmra.mrb[0].mxu0 %v4355
        %v4357 = vpop.f32.mrb[0].mxu0
        %v4358 = vadd.f32 %v4192, %v4357
        %v4359 = vpop.f32.mrb[0].mxu0
        %4360 = vmatprep.mubr.f32.mxu0 0.0
        %v4361 = vand.u32 %v3840, 4294901760
        %v4362 = vsub.f32 %v3840, %v4361
        %4363 = vmatmul.mubr.f32.gmra.mrb[0].mxu0 %v4362
        %v4364 = vpop.f32.mrb[0].mxu0
        %v4365 = vadd.f32 %v4198, %v4364
        %v4366 = vpop.f32.mrb[0].mxu0
        %4367 = vmatprep.mubr.f32.mxu0 0.0
        %v4368 = vand.u32 %v3843, 4294901760
        %v4369 = vsub.f32 %v3843, %v4368
        %4370 = vmatmul.mubr.f32.gmra.mrb[0].mxu0 %v4369
        %v4371 = vpop.f32.mrb[0].mxu0
        %v4372 = vadd.f32 %v4204, %v4371
        %v4373 = vpop.f32.mrb[0].mxu0
        %4374 = vmatprep.mubr.f32.mxu0 0.0
        %v4375 = vand.u32 %v3846, 4294901760
        %v4376 = vsub.f32 %v3846, %v4375
        %4377 = vmatmul.mubr.f32.gmra.mrb[0].mxu0 %v4376
        %v4378 = vpop.f32.mrb[0].mxu0
        %v4379 = vadd.f32 %v4210, %v4378
        %v4380 = vpop.f32.mrb[0].mxu0
        %4381 = vmatprep.mubr.f32.mxu0 0.0
        %v4382 = vand.u32 %v3849, 4294901760
        %v4383 = vsub.f32 %v3849, %v4382
        %4384 = vmatmul.mubr.f32.gmra.mrb[0].mxu0 %v4383
        %v4385 = vpop.f32.mrb[0].mxu0
        %v4386 = vadd.f32 %v4216, %v4385
        %v4387 = vpop.f32.mrb[0].mxu0
        %4388 = vmatprep.mubr.f32.mxu0 0.0
        %v4389 = vand.u32 %v3852, 4294901760
        %v4390 = vsub.f32 %v3852, %v4389
        %4391 = vmatmul.mubr.f32.gmra.mrb[0].mxu0 %v4390
        %v4392 = vpop.f32.mrb[0].mxu0
        %v4393 = vadd.f32 %v4222, %v4392
        %v4394 = vpop.f32.mrb[0].mxu0
        %4395 = vmatprep.mubr.f32.mxu0 0.0
        %v4396 = vand.u32 %v3855, 4294901760
        %v4397 = vsub.f32 %v3855, %v4396
        %4398 = vmatmul.mubr.f32.gmra.mrb[0].mxu0 %v4397
        %v4399 = vpop.f32.mrb[0].mxu0
        %v4400 = vadd.f32 %v4228, %v4399
        %v4401 = vpop.f32.mrb[0].mxu0
        %4402 = vmatprep.mubr.f32.mxu0 0.0
        %v4403 = vand.u32 %v3858, 4294901760
        %v4404 = vsub.f32 %v3858, %v4403
        %4405 = vmatmul.mubr.f32.gmra.mrb[0].mxu0 %v4404
        %v4406 = vpop.f32.mrb[0].mxu0
        %v4407 = vadd.f32 %v4234, %v4406
        %v4408 = vpop.f32.mrb[0].mxu0
        %4409 = vmatprep.mubr.f32.mxu0 0.0
        %v4410 = vand.u32 %v3861, 4294901760
        %v4411 = vsub.f32 %v3861, %v4410
        %4412 = vmatmul.mubr.f32.gmra.mrb[0].mxu0 %v4411
        %v4413 = vpop.f32.mrb[0].mxu0
        %v4414 = vadd.f32 %v4240, %v4413
        %v4415 = vpop.f32.mrb[0].mxu0
        %4416 = vmatprep.mubr.f32.mxu0 0.0
        %v4417 = vand.u32 %v3864, 4294901760
        %v4418 = vsub.f32 %v3864, %v4417
        %4419 = vmatmul.mubr.f32.gmra.mrb[0].mxu0 %v4418
        %v4420 = vpop.f32.mrb[0].mxu0
        %v4421 = vadd.f32 %v4246, %v4420
        %v4422 = vpop.f32.mrb[0].mxu0
        %4423 = vmatprep.mubr.f32.mxu0 0.0
        %v4424 = vand.u32 %v3867, 4294901760
        %v4425 = vsub.f32 %v3867, %v4424
        %4426 = vmatmul.mubr.f32.gmra.mrb[0].mxu0 %v4425
        %v4427 = vpop.f32.mrb[0].mxu0
        %v4428 = vadd.f32 %v4252, %v4427
        %v4429 = vpop.f32.mrb[0].mxu0
        %4430 = vmatprep.mubr.f32.mxu0 0.0
        %v4431 = vand.u32 %v3870, 4294901760
        %v4432 = vsub.f32 %v3870, %v4431
        %4433 = vmatmul.mubr.f32.gmra.mrb[0].mxu0 %v4432
        %v4434 = vpop.f32.mrb[0].mxu0
        %v4435 = vadd.f32 %v4258, %v4434
        %v4436 = vpop.f32.mrb[0].mxu0
        %4437 = vmatprep.mubr.f32.mxu0 0.0
        %v4438 = vand.u32 %v3873, 4294901760
        %v4439 = vsub.f32 %v3873, %v4438
        %4440 = vmatmul.mubr.f32.gmra.mrb[0].mxu0 %v4439
        %v4441 = vpop.f32.mrb[0].mxu0
        %v4442 = vadd.f32 %v4264, %v4441
        %v4443 = vpop.f32.mrb[0].mxu0
        %4444 = vmatprep.mubr.f32.mxu0 0.0
        %v4445 = vand.u32 %v3876, 4294901760
        %v4446 = vsub.f32 %v3876, %v4445
        %4447 = vmatmul.mubr.f32.gmra.mrb[0].mxu0 %v4446
        %v4448 = vpop.f32.mrb[0].mxu0
        %v4449 = vadd.f32 %v4270, %v4448
        %v4450 = vpop.f32.mrb[0].mxu0
        %4451 = vdwg.mxu0
        %4452 = vmatprep.subr.mxu0 0.0
        %v4453 = vand.u32 %v3879, 4294901760
        %4454 = vmatpush1.msra.mxu0 %v4453
        %4455 = vmatprep.subr.mxu0 0.0
        %4456 = vmatpush1.msra.mxu0 0.0
        %4457 = vmatprep.subr.mxu0 0.0
        %4458 = vmatpush1.msra.mxu0 0.0
        %4459 = vmatprep.subr.mxu0 0.0
        %4460 = vmatpush1.msra.mxu0 0.0
        %4461 = vmatprep.subr.mxu0 0.0
        %4462 = vmatpush1.msra.mxu0 0.0
        %4463 = vmatprep.subr.mxu0 0.0
        %4464 = vmatpush1.msra.mxu0 0.0
        %4465 = vmatprep.subr.mxu0 0.0
        %4466 = vmatpush1.msra.mxu0 0.0
        %4467 = vmatprep.subr.mxu0 0.0
        %4468 = vmatpush1.msra.mxu0 0.0
        %4469 = vmatprep.subr.mxu0 0.0
        %4470 = vmatpush1.msra.mxu0 0.0
        %4471 = vmatprep.subr.mxu0 0.0
        %4472 = vmatpush1.msra.mxu0 0.0
        %4473 = vmatprep.subr.mxu0 0.0
        %4474 = vmatpush1.msra.mxu0 0.0
        %4475 = vmatprep.subr.mxu0 0.0
        %4476 = vmatpush1.msra.mxu0 0.0
        %4477 = vmatprep.subr.mxu0 0.0
        %4478 = vmatpush1.msra.mxu0 0.0
        %4479 = vmatprep.subr.mxu0 0.0
        %4480 = vmatpush1.msra.mxu0 0.0
        %4481 = vmatprep.subr.mxu0 0.0
        %4482 = vmatpush1.msra.mxu0 0.0
        %4483 = vmatprep.subr.mxu0 0.0
        %4484 = vmatpush1.msra.mxu0 0.0
        %4485 = vmatprep.subr.mxu0 0.0
        %4486 = vmatpush1.msra.mxu0 0.0
        %4487 = vmatprep.subr.mxu0 0.0
        %4488 = vmatpush1.msra.mxu0 0.0
        %4489 = vmatprep.subr.mxu0 0.0
        %4490 = vmatpush1.msra.mxu0 0.0
        %4491 = vmatprep.subr.mxu0 0.0
        %4492 = vmatpush1.msra.mxu0 0.0
        %4493 = vmatprep.subr.mxu0 0.0
        %4494 = vmatpush1.msra.mxu0 0.0
        %4495 = vmatprep.subr.mxu0 0.0
        %4496 = vmatpush1.msra.mxu0 0.0
        %4497 = vmatprep.subr.mxu0 0.0
        %4498 = vmatpush1.msra.mxu0 0.0
        %4499 = vmatprep.subr.mxu0 0.0
        %4500 = vmatpush1.msra.mxu0 0.0
        %4501 = vmatprep.subr.mxu0 0.0
        %4502 = vmatpush1.msra.mxu0 0.0
        %4503 = vmatprep.subr.mxu0 0.0
        %4504 = vmatpush1.msra.mxu0 0.0
        %4505 = vmatprep.subr.mxu0 0.0
        %4506 = vmatpush1.msra.mxu0 0.0
        %4507 = vmatprep.subr.mxu0 0.0
        %4508 = vmatpush1.msra.mxu0 0.0
        %4509 = vmatprep.subr.mxu0 0.0
        %4510 = vmatpush1.msra.mxu0 0.0
        %4511 = vmatprep.subr.mxu0 0.0
        %4512 = vmatpush1.msra.mxu0 0.0
        %4513 = vmatprep.subr.mxu0 0.0
        %4514 = vmatpush1.msra.mxu0 0.0
        %4515 = vmatprep.subr.mxu0 0.0
        %4516 = vmatpush1.msra.mxu0 0.0
        %4517 = vmatprep.mubr.f32.mxu0 0.0
        %v4518 = vand.u32 %v3831, 4294901760
        %v4519 = vsub.f32 %v3831, %v4518
        %v4520 = vand.u32 %v4519, 4294901760
        %4521 = vmatmul.mubr.f32.gmra.mrb[0].mxu0 %v4520
        %v4522 = vpop.f32.mrb[0].mxu0
        %v4523 = vadd.f32 %v4344, %v4522
        %v4524 = vpop.f32.mrb[0].mxu0
        %4525 = vmatprep.mubr.f32.mxu0 0.0
        %v4526 = vand.u32 %v3834, 4294901760
        %v4527 = vsub.f32 %v3834, %v4526
        %v4528 = vand.u32 %v4527, 4294901760
        %4529 = vmatmul.mubr.f32.gmra.mrb[0].mxu0 %v4528
        %v4530 = vpop.f32.mrb[0].mxu0
        %v4531 = vadd.f32 %v4351, %v4530
        %v4532 = vpop.f32.mrb[0].mxu0
        %4533 = vmatprep.mubr.f32.mxu0 0.0
        %v4534 = vand.u32 %v3837, 4294901760
        %v4535 = vsub.f32 %v3837, %v4534
        %v4536 = vand.u32 %v4535, 4294901760
        %4537 = vmatmul.mubr.f32.gmra.mrb[0].mxu0 %v4536
        %v4538 = vpop.f32.mrb[0].mxu0
        %v4539 = vadd.f32 %v4358, %v4538
        %v4540 = vpop.f32.mrb[0].mxu0
        %4541 = vmatprep.mubr.f32.mxu0 0.0
        %v4542 = vand.u32 %v3840, 4294901760
        %v4543 = vsub.f32 %v3840, %v4542
        %v4544 = vand.u32 %v4543, 4294901760
        %4545 = vmatmul.mubr.f32.gmra.mrb[0].mxu0 %v4544
        %v4546 = vpop.f32.mrb[0].mxu0
        %v4547 = vadd.f32 %v4365, %v4546
        %v4548 = vpop.f32.mrb[0].mxu0
        %4549 = vmatprep.mubr.f32.mxu0 0.0
        %v4550 = vand.u32 %v3843, 4294901760
        %v4551 = vsub.f32 %v3843, %v4550
        %v4552 = vand.u32 %v4551, 4294901760
        %4553 = vmatmul.mubr.f32.gmra.mrb[0].mxu0 %v4552
        %v4554 = vpop.f32.mrb[0].mxu0
        %v4555 = vadd.f32 %v4372, %v4554
        %v4556 = vpop.f32.mrb[0].mxu0
        %4557 = vmatprep.mubr.f32.mxu0 0.0
        %v4558 = vand.u32 %v3846, 4294901760
        %v4559 = vsub.f32 %v3846, %v4558
        %v4560 = vand.u32 %v4559, 4294901760
        %4561 = vmatmul.mubr.f32.gmra.mrb[0].mxu0 %v4560
        %v4562 = vpop.f32.mrb[0].mxu0
        %v4563 = vadd.f32 %v4379, %v4562
        %v4564 = vpop.f32.mrb[0].mxu0
        %4565 = vmatprep.mubr.f32.mxu0 0.0
        %v4566 = vand.u32 %v3849, 4294901760
        %v4567 = vsub.f32 %v3849, %v4566
        %v4568 = vand.u32 %v4567, 4294901760
        %4569 = vmatmul.mubr.f32.gmra.mrb[0].mxu0 %v4568
        %v4570 = vpop.f32.mrb[0].mxu0
        %v4571 = vadd.f32 %v4386, %v4570
        %v4572 = vpop.f32.mrb[0].mxu0
        %4573 = vmatprep.mubr.f32.mxu0 0.0
        %v4574 = vand.u32 %v3852, 4294901760
        %v4575 = vsub.f32 %v3852, %v4574
        %v4576 = vand.u32 %v4575, 4294901760
        %4577 = vmatmul.mubr.f32.gmra.mrb[0].mxu0 %v4576
        %v4578 = vpop.f32.mrb[0].mxu0
        %v4579 = vadd.f32 %v4393, %v4578
        %v4580 = vpop.f32.mrb[0].mxu0
        %4581 = vmatprep.mubr.f32.mxu0 0.0
        %v4582 = vand.u32 %v3855, 4294901760
        %v4583 = vsub.f32 %v3855, %v4582
        %v4584 = vand.u32 %v4583, 4294901760
        %4585 = vmatmul.mubr.f32.gmra.mrb[0].mxu0 %v4584
        %v4586 = vpop.f32.mrb[0].mxu0
        %v4587 = vadd.f32 %v4400, %v4586
        %v4588 = vpop.f32.mrb[0].mxu0
        %4589 = vmatprep.mubr.f32.mxu0 0.0
        %v4590 = vand.u32 %v3858, 4294901760
        %v4591 = vsub.f32 %v3858, %v4590
        %v4592 = vand.u32 %v4591, 4294901760
        %4593 = vmatmul.mubr.f32.gmra.mrb[0].mxu0 %v4592
        %v4594 = vpop.f32.mrb[0].mxu0
        %v4595 = vadd.f32 %v4407, %v4594
        %v4596 = vpop.f32.mrb[0].mxu0
        %4597 = vmatprep.mubr.f32.mxu0 0.0
        %v4598 = vand.u32 %v3861, 4294901760
        %v4599 = vsub.f32 %v3861, %v4598
        %v4600 = vand.u32 %v4599, 4294901760
        %4601 = vmatmul.mubr.f32.gmra.mrb[0].mxu0 %v4600
        %v4602 = vpop.f32.mrb[0].mxu0
        %v4603 = vadd.f32 %v4414, %v4602
        %v4604 = vpop.f32.mrb[0].mxu0
        %4605 = vmatprep.mubr.f32.mxu0 0.0
        %v4606 = vand.u32 %v3864, 4294901760
        %v4607 = vsub.f32 %v3864, %v4606
        %v4608 = vand.u32 %v4607, 4294901760
        %4609 = vmatmul.mubr.f32.gmra.mrb[0].mxu0 %v4608
        %v4610 = vpop.f32.mrb[0].mxu0
        %v4611 = vadd.f32 %v4421, %v4610
        %v4612 = vpop.f32.mrb[0].mxu0
        %4613 = vmatprep.mubr.f32.mxu0 0.0
        %v4614 = vand.u32 %v3867, 4294901760
        %v4615 = vsub.f32 %v3867, %v4614
        %v4616 = vand.u32 %v4615, 4294901760
        %4617 = vmatmul.mubr.f32.gmra.mrb[0].mxu0 %v4616
        %v4618 = vpop.f32.mrb[0].mxu0
        %v4619 = vadd.f32 %v4428, %v4618
        %v4620 = vpop.f32.mrb[0].mxu0
        %4621 = vmatprep.mubr.f32.mxu0 0.0
        %v4622 = vand.u32 %v3870, 4294901760
        %v4623 = vsub.f32 %v3870, %v4622
        %v4624 = vand.u32 %v4623, 4294901760
        %4625 = vmatmul.mubr.f32.gmra.mrb[0].mxu0 %v4624
        %v4626 = vpop.f32.mrb[0].mxu0
        %v4627 = vadd.f32 %v4435, %v4626
        %v4628 = vpop.f32.mrb[0].mxu0
        %4629 = vmatprep.mubr.f32.mxu0 0.0
        %v4630 = vand.u32 %v3873, 4294901760
        %v4631 = vsub.f32 %v3873, %v4630
        %v4632 = vand.u32 %v4631, 4294901760
        %4633 = vmatmul.mubr.f32.gmra.mrb[0].mxu0 %v4632
        %v4634 = vpop.f32.mrb[0].mxu0
        %v4635 = vadd.f32 %v4442, %v4634
        %v4636 = vpop.f32.mrb[0].mxu0
        %4637 = vmatprep.mubr.f32.mxu0 0.0
        %v4638 = vand.u32 %v3876, 4294901760
        %v4639 = vsub.f32 %v3876, %v4638
        %v4640 = vand.u32 %v4639, 4294901760
        %4641 = vmatmul.mubr.f32.gmra.mrb[0].mxu0 %v4640
        %v4642 = vpop.f32.mrb[0].mxu0
        %v4643 = vadd.f32 %v4449, %v4642
        %v4644 = vpop.f32.mrb[0].mxu0
        %4645 = vdwg.mxu0
        %4646 = vmatprep.subr.mxu0 0.0
        %v4647 = vand.u32 %v3879, 4294901760
        %v4648 = vsub.f32 %v3879, %v4647
        %v4649 = vand.u32 %v4648, 4294901760
        %4650 = vmatpush1.msra.mxu0 %v4649
        %4651 = vmatprep.subr.mxu0 0.0
        %4652 = vmatpush1.msra.mxu0 0.0
        %4653 = vmatprep.subr.mxu0 0.0
        %4654 = vmatpush1.msra.mxu0 0.0
        %4655 = vmatprep.subr.mxu0 0.0
        %4656 = vmatpush1.msra.mxu0 0.0
        %4657 = vmatprep.subr.mxu0 0.0
        %4658 = vmatpush1.msra.mxu0 0.0
        %4659 = vmatprep.subr.mxu0 0.0
        %4660 = vmatpush1.msra.mxu0 0.0
        %4661 = vmatprep.subr.mxu0 0.0
        %4662 = vmatpush1.msra.mxu0 0.0
        %4663 = vmatprep.subr.mxu0 0.0
        %4664 = vmatpush1.msra.mxu0 0.0
        %4665 = vmatprep.subr.mxu0 0.0
        %4666 = vmatpush1.msra.mxu0 0.0
        %4667 = vmatprep.subr.mxu0 0.0
        %4668 = vmatpush1.msra.mxu0 0.0
        %4669 = vmatprep.subr.mxu0 0.0
        %4670 = vmatpush1.msra.mxu0 0.0
        %4671 = vmatprep.subr.mxu0 0.0
        %4672 = vmatpush1.msra.mxu0 0.0
        %4673 = vmatprep.subr.mxu0 0.0
        %4674 = vmatpush1.msra.mxu0 0.0
        %4675 = vmatprep.subr.mxu0 0.0
        %4676 = vmatpush1.msra.mxu0 0.0
        %4677 = vmatprep.subr.mxu0 0.0
        %4678 = vmatpush1.msra.mxu0 0.0
        %4679 = vmatprep.subr.mxu0 0.0
        %4680 = vmatpush1.msra.mxu0 0.0
        %4681 = vmatprep.subr.mxu0 0.0
        %4682 = vmatpush1.msra.mxu0 0.0
        %4683 = vmatprep.subr.mxu0 0.0
        %4684 = vmatpush1.msra.mxu0 0.0
        %4685 = vmatprep.subr.mxu0 0.0
        %4686 = vmatpush1.msra.mxu0 0.0
        %4687 = vmatprep.subr.mxu0 0.0
        %4688 = vmatpush1.msra.mxu0 0.0
        %4689 = vmatprep.subr.mxu0 0.0
        %4690 = vmatpush1.msra.mxu0 0.0
        %4691 = vmatprep.subr.mxu0 0.0
        %4692 = vmatpush1.msra.mxu0 0.0
        %4693 = vmatprep.subr.mxu0 0.0
        %4694 = vmatpush1.msra.mxu0 0.0
        %4695 = vmatprep.subr.mxu0 0.0
        %4696 = vmatpush1.msra.mxu0 0.0
        %4697 = vmatprep.subr.mxu0 0.0
        %4698 = vmatpush1.msra.mxu0 0.0
        %4699 = vmatprep.subr.mxu0 0.0
        %4700 = vmatpush1.msra.mxu0 0.0
        %4701 = vmatprep.subr.mxu0 0.0
        %4702 = vmatpush1.msra.mxu0 0.0
        %4703 = vmatprep.subr.mxu0 0.0
        %4704 = vmatpush1.msra.mxu0 0.0
        %4705 = vmatprep.subr.mxu0 0.0
        %4706 = vmatpush1.msra.mxu0 0.0
        %4707 = vmatprep.subr.mxu0 0.0
        %4708 = vmatpush1.msra.mxu0 0.0
        %4709 = vmatprep.subr.mxu0 0.0
        %4710 = vmatpush1.msra.mxu0 0.0
        %4711 = vmatprep.subr.mxu0 0.0
        %4712 = vmatpush1.msra.mxu0 0.0
        %4713 = vmatprep.mubr.f32.mxu0 0.0
        %v4714 = vand.u32 %v3831, 4294901760
        %4715 = vmatmul.mubr.f32.gmra.mrb[0].mxu0 %v4714
        %v4716 = vpop.f32.mrb[0].mxu0
        %v4717 = vadd.f32 %v4523, %v4716
        %v4718 = vpop.f32.mrb[0].mxu0
        %4719 = vmatprep.mubr.f32.mxu0 0.0
        %v4720 = vand.u32 %v3834, 4294901760
        %4721 = vmatmul.mubr.f32.gmra.mrb[0].mxu0 %v4720
        %v4722 = vpop.f32.mrb[0].mxu0
        %v4723 = vadd.f32 %v4531, %v4722
        %v4724 = vpop.f32.mrb[0].mxu0
        %4725 = vmatprep.mubr.f32.mxu0 0.0
        %v4726 = vand.u32 %v3837, 4294901760
        %4727 = vmatmul.mubr.f32.gmra.mrb[0].mxu0 %v4726
        %v4728 = vpop.f32.mrb[0].mxu0
        %v4729 = vadd.f32 %v4539, %v4728
        %v4730 = vpop.f32.mrb[0].mxu0
        %4731 = vmatprep.mubr.f32.mxu0 0.0
        %v4732 = vand.u32 %v3840, 4294901760
        %4733 = vmatmul.mubr.f32.gmra.mrb[0].mxu0 %v4732
        %v4734 = vpop.f32.mrb[0].mxu0
        %v4735 = vadd.f32 %v4547, %v4734
        %v4736 = vpop.f32.mrb[0].mxu0
        %4737 = vmatprep.mubr.f32.mxu0 0.0
        %v4738 = vand.u32 %v3843, 4294901760
        %4739 = vmatmul.mubr.f32.gmra.mrb[0].mxu0 %v4738
        %v4740 = vpop.f32.mrb[0].mxu0
        %v4741 = vadd.f32 %v4555, %v4740
        %v4742 = vpop.f32.mrb[0].mxu0
        %4743 = vmatprep.mubr.f32.mxu0 0.0
        %v4744 = vand.u32 %v3846, 4294901760
        %4745 = vmatmul.mubr.f32.gmra.mrb[0].mxu0 %v4744
        %v4746 = vpop.f32.mrb[0].mxu0
        %v4747 = vadd.f32 %v4563, %v4746
        %v4748 = vpop.f32.mrb[0].mxu0
        %4749 = vmatprep.mubr.f32.mxu0 0.0
        %v4750 = vand.u32 %v3849, 4294901760
        %4751 = vmatmul.mubr.f32.gmra.mrb[0].mxu0 %v4750
        %v4752 = vpop.f32.mrb[0].mxu0
        %v4753 = vadd.f32 %v4571, %v4752
        %v4754 = vpop.f32.mrb[0].mxu0
        %4755 = vmatprep.mubr.f32.mxu0 0.0
        %v4756 = vand.u32 %v3852, 4294901760
        %4757 = vmatmul.mubr.f32.gmra.mrb[0].mxu0 %v4756
        %v4758 = vpop.f32.mrb[0].mxu0
        %v4759 = vadd.f32 %v4579, %v4758
        %v4760 = vpop.f32.mrb[0].mxu0
        %4761 = vmatprep.mubr.f32.mxu0 0.0
        %v4762 = vand.u32 %v3855, 4294901760
        %4763 = vmatmul.mubr.f32.gmra.mrb[0].mxu0 %v4762
        %v4764 = vpop.f32.mrb[0].mxu0
        %v4765 = vadd.f32 %v4587, %v4764
        %v4766 = vpop.f32.mrb[0].mxu0
        %4767 = vmatprep.mubr.f32.mxu0 0.0
        %v4768 = vand.u32 %v3858, 4294901760
        %4769 = vmatmul.mubr.f32.gmra.mrb[0].mxu0 %v4768
        %v4770 = vpop.f32.mrb[0].mxu0
        %v4771 = vadd.f32 %v4595, %v4770
        %v4772 = vpop.f32.mrb[0].mxu0
        %4773 = vmatprep.mubr.f32.mxu0 0.0
        %v4774 = vand.u32 %v3861, 4294901760
        %4775 = vmatmul.mubr.f32.gmra.mrb[0].mxu0 %v4774
        %v4776 = vpop.f32.mrb[0].mxu0
        %v4777 = vadd.f32 %v4603, %v4776
        %v4778 = vpop.f32.mrb[0].mxu0
        %4779 = vmatprep.mubr.f32.mxu0 0.0
        %v4780 = vand.u32 %v3864, 4294901760
        %4781 = vmatmul.mubr.f32.gmra.mrb[0].mxu0 %v4780
        %v4782 = vpop.f32.mrb[0].mxu0
        %v4783 = vadd.f32 %v4611, %v4782
        %v4784 = vpop.f32.mrb[0].mxu0
        %4785 = vmatprep.mubr.f32.mxu0 0.0
        %v4786 = vand.u32 %v3867, 4294901760
        %4787 = vmatmul.mubr.f32.gmra.mrb[0].mxu0 %v4786
        %v4788 = vpop.f32.mrb[0].mxu0
        %v4789 = vadd.f32 %v4619, %v4788
        %v4790 = vpop.f32.mrb[0].mxu0
        %4791 = vmatprep.mubr.f32.mxu0 0.0
        %v4792 = vand.u32 %v3870, 4294901760
        %4793 = vmatmul.mubr.f32.gmra.mrb[0].mxu0 %v4792
        %v4794 = vpop.f32.mrb[0].mxu0
        %v4795 = vadd.f32 %v4627, %v4794
        %v4796 = vpop.f32.mrb[0].mxu0
        %4797 = vmatprep.mubr.f32.mxu0 0.0
        %v4798 = vand.u32 %v3873, 4294901760
        %4799 = vmatmul.mubr.f32.gmra.mrb[0].mxu0 %v4798
        %v4800 = vpop.f32.mrb[0].mxu0
        %v4801 = vadd.f32 %v4635, %v4800
        %v4802 = vpop.f32.mrb[0].mxu0
        %4803 = vmatprep.mubr.f32.mxu0 0.0
        %v4804 = vand.u32 %v3876, 4294901760
        %4805 = vmatmul.mubr.f32.gmra.mrb[0].mxu0 %v4804
        %v4806 = vpop.f32.mrb[0].mxu0
        %v4807 = vadd.f32 %v4643, %v4806
        %v4808 = vpop.f32.mrb[0].mxu0
        %4809 = vdwg.mxu0
        %4810 = vmatprep.subr.mxu0 0.0
        %v4811 = vand.u32 %v3879, 4294901760
        %4812 = vmatpush1.msra.mxu0 %v4811
        %4813 = vmatprep.subr.mxu0 0.0
        %4814 = vmatpush1.msra.mxu0 0.0
        %4815 = vmatprep.subr.mxu0 0.0
        %4816 = vmatpush1.msra.mxu0 0.0
        %4817 = vmatprep.subr.mxu0 0.0
        %4818 = vmatpush1.msra.mxu0 0.0
        %4819 = vmatprep.subr.mxu0 0.0
        %4820 = vmatpush1.msra.mxu0 0.0
        %4821 = vmatprep.subr.mxu0 0.0
        %4822 = vmatpush1.msra.mxu0 0.0
        %4823 = vmatprep.subr.mxu0 0.0
        %4824 = vmatpush1.msra.mxu0 0.0
        %4825 = vmatprep.subr.mxu0 0.0
        %4826 = vmatpush1.msra.mxu0 0.0
        %4827 = vmatprep.subr.mxu0 0.0
        %4828 = vmatpush1.msra.mxu0 0.0
        %4829 = vmatprep.subr.mxu0 0.0
        %4830 = vmatpush1.msra.mxu0 0.0
        %4831 = vmatprep.subr.mxu0 0.0
        %4832 = vmatpush1.msra.mxu0 0.0
        %4833 = vmatprep.subr.mxu0 0.0
        %4834 = vmatpush1.msra.mxu0 0.0
        %4835 = vmatprep.subr.mxu0 0.0
        %4836 = vmatpush1.msra.mxu0 0.0
        %4837 = vmatprep.subr.mxu0 0.0
        %4838 = vmatpush1.msra.mxu0 0.0
        %4839 = vmatprep.subr.mxu0 0.0
        %4840 = vmatpush1.msra.mxu0 0.0
        %4841 = vmatprep.subr.mxu0 0.0
        %4842 = vmatpush1.msra.mxu0 0.0
        %4843 = vmatprep.subr.mxu0 0.0
        %4844 = vmatpush1.msra.mxu0 0.0
        %4845 = vmatprep.subr.mxu0 0.0
        %4846 = vmatpush1.msra.mxu0 0.0
        %4847 = vmatprep.subr.mxu0 0.0
        %4848 = vmatpush1.msra.mxu0 0.0
        %4849 = vmatprep.subr.mxu0 0.0
        %4850 = vmatpush1.msra.mxu0 0.0
        %4851 = vmatprep.subr.mxu0 0.0
        %4852 = vmatpush1.msra.mxu0 0.0
        %4853 = vmatprep.subr.mxu0 0.0
        %4854 = vmatpush1.msra.mxu0 0.0
        %4855 = vmatprep.subr.mxu0 0.0
        %4856 = vmatpush1.msra.mxu0 0.0
        %4857 = vmatprep.subr.mxu0 0.0
        %4858 = vmatpush1.msra.mxu0 0.0
        %4859 = vmatprep.subr.mxu0 0.0
        %4860 = vmatpush1.msra.mxu0 0.0
        %4861 = vmatprep.subr.mxu0 0.0
        %4862 = vmatpush1.msra.mxu0 0.0
        %4863 = vmatprep.subr.mxu0 0.0
        %4864 = vmatpush1.msra.mxu0 0.0
        %4865 = vmatprep.subr.mxu0 0.0
        %4866 = vmatpush1.msra.mxu0 0.0
        %4867 = vmatprep.subr.mxu0 0.0
        %4868 = vmatpush1.msra.mxu0 0.0
        %4869 = vmatprep.subr.mxu0 0.0
        %4870 = vmatpush1.msra.mxu0 0.0
        %4871 = vmatprep.subr.mxu0 0.0
        %4872 = vmatpush1.msra.mxu0 0.0
        %4873 = vmatprep.subr.mxu0 0.0
        %4874 = vmatpush1.msra.mxu0 0.0
        %4875 = vmatprep.mubr.f32.mxu0 0.0
        %v4876 = vand.u32 %v3831, 4294901760
        %4877 = vmatmul.mubr.f32.gmra.mrb[0].mxu0 %v4876
        %v4878 = vpop.f32.mrb[0].mxu0
        %v4879 = vadd.f32 %v4717, %v4878
        %v4880 = vpop.f32.mrb[0].mxu0
        %4881 = vmatprep.mubr.f32.mxu0 0.0
        %v4882 = vand.u32 %v3834, 4294901760
        %4883 = vmatmul.mubr.f32.gmra.mrb[0].mxu0 %v4882
        %v4884 = vpop.f32.mrb[0].mxu0
        %v4885 = vadd.f32 %v4723, %v4884
        %v4886 = vpop.f32.mrb[0].mxu0
        %4887 = vmatprep.mubr.f32.mxu0 0.0
        %v4888 = vand.u32 %v3837, 4294901760
        %4889 = vmatmul.mubr.f32.gmra.mrb[0].mxu0 %v4888
        %v4890 = vpop.f32.mrb[0].mxu0
        %v4891 = vadd.f32 %v4729, %v4890
        %v4892 = vpop.f32.mrb[0].mxu0
        %4893 = vmatprep.mubr.f32.mxu0 0.0
        %v4894 = vand.u32 %v3840, 4294901760
        %4895 = vmatmul.mubr.f32.gmra.mrb[0].mxu0 %v4894
        %v4896 = vpop.f32.mrb[0].mxu0
        %v4897 = vadd.f32 %v4735, %v4896
        %v4898 = vpop.f32.mrb[0].mxu0
        %4899 = vmatprep.mubr.f32.mxu0 0.0
        %v4900 = vand.u32 %v3843, 4294901760
        %4901 = vmatmul.mubr.f32.gmra.mrb[0].mxu0 %v4900
        %v4902 = vpop.f32.mrb[0].mxu0
        %v4903 = vadd.f32 %v4741, %v4902
        %v4904 = vpop.f32.mrb[0].mxu0
        %4905 = vmatprep.mubr.f32.mxu0 0.0
        %v4906 = vand.u32 %v3846, 4294901760
        %4907 = vmatmul.mubr.f32.gmra.mrb[0].mxu0 %v4906
        %v4908 = vpop.f32.mrb[0].mxu0
        %v4909 = vadd.f32 %v4747, %v4908
        %v4910 = vpop.f32.mrb[0].mxu0
        %4911 = vmatprep.mubr.f32.mxu0 0.0
        %v4912 = vand.u32 %v3849, 4294901760
        %4913 = vmatmul.mubr.f32.gmra.mrb[0].mxu0 %v4912
        %v4914 = vpop.f32.mrb[0].mxu0
        %v4915 = vadd.f32 %v4753, %v4914
        %v4916 = vpop.f32.mrb[0].mxu0
        %4917 = vmatprep.mubr.f32.mxu0 0.0
        %v4918 = vand.u32 %v3852, 4294901760
        %4919 = vmatmul.mubr.f32.gmra.mrb[0].mxu0 %v4918
        %v4920 = vpop.f32.mrb[0].mxu0
        %v4921 = vadd.f32 %v4759, %v4920
        %v4922 = vpop.f32.mrb[0].mxu0
        %4923 = vmatprep.mubr.f32.mxu0 0.0
        %v4924 = vand.u32 %v3855, 4294901760
        %4925 = vmatmul.mubr.f32.gmra.mrb[0].mxu0 %v4924
        %v4926 = vpop.f32.mrb[0].mxu0
        %v4927 = vadd.f32 %v4765, %v4926
        %v4928 = vpop.f32.mrb[0].mxu0
        %4929 = vmatprep.mubr.f32.mxu0 0.0
        %v4930 = vand.u32 %v3858, 4294901760
        %4931 = vmatmul.mubr.f32.gmra.mrb[0].mxu0 %v4930
        %v4932 = vpop.f32.mrb[0].mxu0
        %v4933 = vadd.f32 %v4771, %v4932
        %v4934 = vpop.f32.mrb[0].mxu0
        %4935 = vmatprep.mubr.f32.mxu0 0.0
        %v4936 = vand.u32 %v3861, 4294901760
        %4937 = vmatmul.mubr.f32.gmra.mrb[0].mxu0 %v4936
        %v4938 = vpop.f32.mrb[0].mxu0
        %v4939 = vadd.f32 %v4777, %v4938
        %v4940 = vpop.f32.mrb[0].mxu0
        %4941 = vmatprep.mubr.f32.mxu0 0.0
        %v4942 = vand.u32 %v3864, 4294901760
        %4943 = vmatmul.mubr.f32.gmra.mrb[0].mxu0 %v4942
        %v4944 = vpop.f32.mrb[0].mxu0
        %v4945 = vadd.f32 %v4783, %v4944
        %v4946 = vpop.f32.mrb[0].mxu0
        %4947 = vmatprep.mubr.f32.mxu0 0.0
        %v4948 = vand.u32 %v3867, 4294901760
        %4949 = vmatmul.mubr.f32.gmra.mrb[0].mxu0 %v4948
        %v4950 = vpop.f32.mrb[0].mxu0
        %v4951 = vadd.f32 %v4789, %v4950
        %v4952 = vpop.f32.mrb[0].mxu0
        %4953 = vmatprep.mubr.f32.mxu0 0.0
        %v4954 = vand.u32 %v3870, 4294901760
        %4955 = vmatmul.mubr.f32.gmra.mrb[0].mxu0 %v4954
        %v4956 = vpop.f32.mrb[0].mxu0
        %v4957 = vadd.f32 %v4795, %v4956
        %v4958 = vpop.f32.mrb[0].mxu0
        %4959 = vmatprep.mubr.f32.mxu0 0.0
        %v4960 = vand.u32 %v3873, 4294901760
        %4961 = vmatmul.mubr.f32.gmra.mrb[0].mxu0 %v4960
        %v4962 = vpop.f32.mrb[0].mxu0
        %v4963 = vadd.f32 %v4801, %v4962
        %v4964 = vpop.f32.mrb[0].mxu0
        %4965 = vmatprep.mubr.f32.mxu0 0.0
        %v4966 = vand.u32 %v3876, 4294901760
        %4967 = vmatmul.mubr.f32.gmra.mrb[0].mxu0 %v4966
        %v4968 = vpop.f32.mrb[0].mxu0
        %v4969 = vadd.f32 %v4807, %v4968
        %v4970 = vpop.f32.mrb[0].mxu0
        %4971 = vdwg.mxu0
        %v4972 = vadd.f32 %v3796, %v4879
        %v4973 = vadd.f32 %v3797, %v4885
        %v4974 = vadd.f32 %v3798, %v4891
        %v4975 = vadd.f32 %v3799, %v4897
        %v4976 = vadd.f32 %v3800, %v4903
        %v4977 = vadd.f32 %v3801, %v4909
        %v4978 = vadd.f32 %v3802, %v4915
        %v4979 = vadd.f32 %v3803, %v4921
        %v4980 = vadd.f32 %v3804, %v4927
        %v4981 = vadd.f32 %v3805, %v4933
        %v4982 = vadd.f32 %v3806, %v4939
        %v4983 = vadd.f32 %v3807, %v4945
        %v4984 = vadd.f32 %v3808, %v4951
        %v4985 = vadd.f32 %v3809, %v4957
        %v4986 = vadd.f32 %v3810, %v4963
        %v4987 = vadd.f32 %v3811, %v4969
        %vm4988 = vcmask 261120
        %4989 = vst.msk [vmem:[%s271] sm:$0xff] %vm4988, %v4972
        %4990 = vst.msk [vmem:[%s271 + $0x8] sm:$0xff] %vm4988, %v4973
        %4991 = vst.msk [vmem:[%s271 + $0x10] sm:$0xff] %vm4988, %v4974
        %4992 = vst.msk [vmem:[%s271 + $0x18] sm:$0xff] %vm4988, %v4975
        %4993 = vst.msk [vmem:[%s271 + $0x20] sm:$0xff] %vm4988, %v4976
        %4994 = vst.msk [vmem:[%s271 + $0x28] sm:$0xff] %vm4988, %v4977
        %4995 = vst.msk [vmem:[%s271 + $0x30] sm:$0xff] %vm4988, %v4978
        %4996 = vst.msk [vmem:[%s271 + $0x38] sm:$0xff] %vm4988, %v4979
        %4997 = vst.msk [vmem:[%s271 + $0x40] sm:$0xff] %vm4988, %v4980
        %4998 = vst.msk [vmem:[%s271 + $0x48] sm:$0xff] %vm4988, %v4981
        %4999 = vst.msk [vmem:[%s271 + $0x50] sm:$0xff] %vm4988, %v4982
        %5000 = vst.msk [vmem:[%s271 + $0x58] sm:$0xff] %vm4988, %v4983
        %5001 = vst.msk [vmem:[%s271 + $0x60] sm:$0xff] %vm4988, %v4984
        %5002 = vst.msk [vmem:[%s271 + $0x68] sm:$0xff] %vm4988, %v4985
        %5003 = vst.msk [vmem:[%s271 + $0x70] sm:$0xff] %vm4988, %v4986
        %5004 = vst.msk [vmem:[%s271 + $0x78] sm:$0xff] %vm4988, %v4987
        %p5005 = scmp.eq.s32.totalorder %s27, 0
        // Predicated region
        $region33: #{tpu_custom_call.1} parent=31 // pred_check
          %p5006 = pneg %p5005
        $region34: #{tpu_custom_call.1} parent=31 // pred_check_branch
          %5008 = sbr.rel (%p5006) target = $region36
        $region35: #{tpu_custom_call.1} parent=31 // pred_region
          %vm5009 = vcmask 254976
          %5010 = vst.msk [vmem:[%s278] sm:$0x3] %vm5009, 0.0
        $region36: #{tpu_custom_call.1} parent=31 // pred_fallthru
          _
        %v5011 = vld [vmem:[%s278] sm:$0x1]
        %v5012 = vsel %vm4988, %v4972, 0.0
        %v5013 = vsel %vm4988, %v4973, 0.0
        %v5014 = vadd.f32 %v5012, %v5013
        %v5015 = vsel %vm4988, %v4974, 0.0
        %v5016 = vadd.f32 %v5014, %v5015
        %v5017 = vsel %vm4988, %v4975, 0.0
        %v5018 = vadd.f32 %v5016, %v5017
        %v5019 = vsel %vm4988, %v4976, 0.0
        %v5020 = vadd.f32 %v5018, %v5019
        %v5021 = vsel %vm4988, %v4977, 0.0
        %v5022 = vadd.f32 %v5020, %v5021
        %v5023 = vsel %vm4988, %v4978, 0.0
        %v5024 = vadd.f32 %v5022, %v5023
        %v5025 = vsel %vm4988, %v4979, 0.0
        %v5026 = vadd.f32 %v5024, %v5025
        %v5027 = vsel %vm4988, %v4980, 0.0
        %v5028 = vadd.f32 %v5026, %v5027
        %v5029 = vsel %vm4988, %v4981, 0.0
        %v5030 = vadd.f32 %v5028, %v5029
        %v5031 = vsel %vm4988, %v4982, 0.0
        %v5032 = vadd.f32 %v5030, %v5031
        %v5033 = vsel %vm4988, %v4983, 0.0
        %v5034 = vadd.f32 %v5032, %v5033
        %v5035 = vsel %vm4988, %v4984, 0.0
        %v5036 = vadd.f32 %v5034, %v5035
        %v5037 = vsel %vm4988, %v4985, 0.0
        %v5038 = vadd.f32 %v5036, %v5037
        %v5039 = vsel %vm4988, %v4986, 0.0
        %v5040 = vadd.f32 %v5038, %v5039
        %v5041 = vsel %vm4988, %v4987, 0.0
        %v5042 = vadd.f32 %v5040, %v5041
        %v5043 = vrot.slane %v5042, 4
        %v5044 = vadd.f32 %v5042, %v5043
        %v5045 = vrot.slane %v5044, 2
        %v5046 = vadd.f32 %v5044, %v5045
        %v5047 = vrot.slane %v5046, 1
        %v5048 = vadd.f32 %v5046, %v5047
        %v5049 = vadd.f32 %v5011, %v5048
        %vm5050 = vcmask 253952
        %5051 = vst.msk [vmem:[%s278] sm:$0x1] %vm5050, %v5049
        %v5052 = vld [vmem:[%s278 + $0x1] sm:$0x1]
        %v5053 = vmul.f32 %v4972, %v4972
        %v5054 = vmul.f32 %v4973, %v4973
        %v5055 = vmul.f32 %v4974, %v4974
        %v5056 = vmul.f32 %v4975, %v4975
        %v5057 = vmul.f32 %v4976, %v4976
        %v5058 = vmul.f32 %v4977, %v4977
        %v5059 = vmul.f32 %v4978, %v4978
        %v5060 = vmul.f32 %v4979, %v4979
        %v5061 = vmul.f32 %v4980, %v4980
        %v5062 = vmul.f32 %v4981, %v4981
        %v5063 = vmul.f32 %v4982, %v4982
        %v5064 = vmul.f32 %v4983, %v4983
        %v5065 = vmul.f32 %v4984, %v4984
        %v5066 = vmul.f32 %v4985, %v4985
        %v5067 = vmul.f32 %v4986, %v4986
        %v5068 = vmul.f32 %v4987, %v4987
        %v5069 = vsel %vm4988, %v5053, 0.0
        %v5070 = vsel %vm4988, %v5054, 0.0
        %v5071 = vadd.f32 %v5069, %v5070
        %v5072 = vsel %vm4988, %v5055, 0.0
        %v5073 = vadd.f32 %v5071, %v5072
        %v5074 = vsel %vm4988, %v5056, 0.0
        %v5075 = vadd.f32 %v5073, %v5074
        %v5076 = vsel %vm4988, %v5057, 0.0
        %v5077 = vadd.f32 %v5075, %v5076
        %v5078 = vsel %vm4988, %v5058, 0.0
        %v5079 = vadd.f32 %v5077, %v5078
        %v5080 = vsel %vm4988, %v5059, 0.0
        %v5081 = vadd.f32 %v5079, %v5080
        %v5082 = vsel %vm4988, %v5060, 0.0
        %v5083 = vadd.f32 %v5081, %v5082
        %v5084 = vsel %vm4988, %v5061, 0.0
        %v5085 = vadd.f32 %v5083, %v5084
        %v5086 = vsel %vm4988, %v5062, 0.0
        %v5087 = vadd.f32 %v5085, %v5086
        %v5088 = vsel %vm4988, %v5063, 0.0
        %v5089 = vadd.f32 %v5087, %v5088
        %v5090 = vsel %vm4988, %v5064, 0.0
        %v5091 = vadd.f32 %v5089, %v5090
        %v5092 = vsel %vm4988, %v5065, 0.0
        %v5093 = vadd.f32 %v5091, %v5092
        %v5094 = vsel %vm4988, %v5066, 0.0
        %v5095 = vadd.f32 %v5093, %v5094
        %v5096 = vsel %vm4988, %v5067, 0.0
        %v5097 = vadd.f32 %v5095, %v5096
        %v5098 = vsel %vm4988, %v5068, 0.0
        %v5099 = vadd.f32 %v5097, %v5098
        %v5100 = vrot.slane %v5099, 4
        %v5101 = vadd.f32 %v5099, %v5100
        %v5102 = vrot.slane %v5101, 2
        %v5103 = vadd.f32 %v5101, %v5102
        %v5104 = vrot.slane %v5103, 1
        %v5105 = vadd.f32 %v5103, %v5104
        %v5106 = vadd.f32 %v5052, %v5105
        %5107 = vst.msk [vmem:[%s278 + $0x1] sm:$0x1] %vm5050, %v5106
        %s5108 = sand.u32 %s125, 1
        %s5109 = scalar_lea.sflag [#allocation3], %s5108
        %s5110 = sand.u32 %s125, 1
        %s5111 = smul.addr %s5110, 128
        %s5112 = scalar_lea.vmem [#allocation2], %s5111
        %s5113 = sand.u32 %s151, 1
        %s5114 = scalar_lea.sflag [#allocation5], %s5113
        %s5115 = sand.u32 %s151, 1
        %s5116 = smul.addr %s5115, 2
        %s5117 = scalar_lea.vmem [#allocation4], %s5116
        // Predicated region
        $region37: #{tpu_custom_call.1} parent=31 // pred_check
          %p5118 = pneg %p135
        $region38: #{tpu_custom_call.1} parent=31 // pred_check_branch
          %5120 = sbr.rel (%p5118) target = $region40
        $region39: #{tpu_custom_call.1} parent=31 // pred_region
          %s5121 = smul.u32 8, %s27
          %s5123 = ssub.s32 2048, 2048
          %5124 = vsyncadd %s5109, %s5123
          %s5125 = smul.addr %s5121, 2
          %s5126 = smul.addr %s26, 32
          %s5127 = sadd.s32 %s5125, %s5126
          %s5128 = smul.addr %s5127, 128
          %s5129 = scalar_lea.hbm %s3, %s5128
          %s5130 = sshll.u32 %s5112, 4
          %s5131 = int_to_ptr.vmem [resolvable:$true] %s5130
          %5136 = dma.vmem_to_hbm [thread:$0]  %s5131, 2048, %s5129, %s5109, 128, 128, 8
        $region40: #{tpu_custom_call.1} parent=31 // pred_fallthru
          _
        // Predicated region
        $region41: #{tpu_custom_call.1} parent=31 // pred_check
          %p5137 = pneg %p161
        $region42: #{tpu_custom_call.1} parent=31 // pred_check_branch
          %5139 = sbr.rel (%p5137) target = $region44
        $region43: #{tpu_custom_call.1} parent=31 // pred_region
          %s5141 = ssub.s32 32, 32
          %5142 = vsyncadd %s5114, %s5141
          %s5143 = smul.addr %s26, 32
          %s5144 = scalar_lea.hbm %s4, %s5143
          %s5146 = sshll.u32 %s5117, 4
          %s5147 = int_to_ptr.vmem [resolvable:$true] %s5146
          %5149 = dma.vmem_to_hbm [thread:$0]  %s5147, 32, %s5144, %s5114
        $region44: #{tpu_custom_call.1} parent=31 // pred_fallthru
          _
      $region32: #{tpu_custom_call.1} parent=5 // pred_fallthru
        _
      %p5150 = scmp.le.s32.totalorder 2, %s17
      // Predicated region
      $region45: #{tpu_custom_call.1} parent=5 // pred_check
        %p5151 = pneg %p5150
      $region46: #{tpu_custom_call.1} parent=5 // pred_check_branch
        %5153 = sbr.rel (%p5151) target = $region48
      $region47: #{tpu_custom_call.1} parent=5 // pred_region
        %s5154 = ssub.s32 %s17, 2
        // Predicated region
        $region49: #{tpu_custom_call.1} parent=47 // pred_check
          %p5155 = pneg %p141
        $region50: #{tpu_custom_call.1} parent=47 // pred_check_branch
          %5157 = sbr.rel (%p5155) target = $region52
        $region51: #{tpu_custom_call.1} parent=47 // pred_region
          %s5158 = sand.u32 %s126, 1
          %s5159 = scalar_lea.sflag [#allocation3], %s5158
          %s5160 = sand.u32 %s126, 1
          %s5161 = smul.addr %s5160, 128
          %s5162 = scalar_lea.vmem [#allocation2], %s5161
          %5163 = dma.done %s5159, 2048
        $region52: #{tpu_custom_call.1} parent=47 // pred_fallthru
          _
        // Predicated region
        $region53: #{tpu_custom_call.1} parent=47 // pred_check
          %p5164 = pneg %p167
        $region54: #{tpu_custom_call.1} parent=47 // pred_check_branch
          %5166 = sbr.rel (%p5164) target = $region56
        $region55: #{tpu_custom_call.1} parent=47 // pred_region
          %s5167 = sand.u32 %s152, 1
          %s5168 = scalar_lea.sflag [#allocation5], %s5167
          %s5169 = sand.u32 %s152, 1
          %s5170 = smul.addr %s5169, 2
          %s5171 = scalar_lea.vmem [#allocation4], %s5170
          %5172 = dma.done %s5168, 32
        $region56: #{tpu_custom_call.1} parent=47 // pred_fallthru
          _
      $region48: #{tpu_custom_call.1} parent=5 // pred_fallthru
        _
    $region6: #{tpu_custom_call.1} parent=1 // loop_footer
      %s21 = sadd.s32 1, %s17
    $region7: #{tpu_custom_call.1} parent=1 // loop_footer_branch
      %16 = sbr.rel target = $region3
    $region8: #{tpu_custom_call.1} parent=1 // loop_exit
      _
    %5173 = vsyncpa [#allocation3], 1
    %s5174 = scalar_lea.sflag [#allocation3], 1
    %5175 = vsyncpa %s5174, 1
    %5176 = vsyncpa [#allocation5], 1
    %s5177 = scalar_lea.sflag [#allocation5], 1
    %5178 = vsyncpa %s5177, 1

</llo_original>
